<compile_context>
chip_gen: v7x
topology: tpu7x:2x2x1
jax: 0.10.0
libtpu: 0.0.40
codegen_flags: <defaults>
</compile_context>

<pallas_src>
import functools
from typing import NamedTuple

import jax
import jax.numpy as jnp
from jax.experimental import pallas as pl
from jax.experimental.pallas import tpu as pltpu


def _round_up(x, m):
    return ((x + m - 1) // m) * m


_CH_PACK = 16      # sublane packing granularity for bf16 MXU operands
_LANE = 128        # TPU lane width


class _LayerSpec(NamedTuple):
    cin_p: int      # padded input channels
    cout_p: int     # padded output channels
    dil: int        # dilation
    e: int          # per-conv causal halo = (K-1)*dil
    has_down: bool  # 1x1 downsample residual (folded into conv1 weights)


def _pad_ch(c):
    return _round_up(c, _CH_PACK)


# ------------------------------ kernel helpers ------------------------------

def _shifted(carry, cur, s):
    """Columns [P-s, P-s+TL) of the running sequence, where `cur` holds columns
    [P, P+TL) of the current tile and `carry` holds the last e columns [P-e, P)
    carried over from previous tiles (zeros on the first tile)."""
    if s == 0:
        return cur
    tl = cur.shape[-1]
    e = carry.shape[-1]
    if s >= tl:
        return carry[:, e - s:e - s + tl]
    return jnp.concatenate([carry[:, e - s:], cur[:, :tl - s]], axis=-1)


def _updated_carry(carry, cur):
    """Last e columns of (carry ++ cur): the halo handed to the next tile."""
    e = carry.shape[-1]
    tl = cur.shape[-1]
    if e <= tl:
        return cur[:, tl - e:]
    return jnp.concatenate([carry[:, tl:], cur], axis=-1)


def _tcn_fused_kernel(*refs, layers, K, cdtype, precision):
    """Entire TCN stack on one (batch, L-tile) grid cell.

    refs (in order):
      x       : (1, Cin0, TL)   input tile (f32)
      per layer i (4 refs):
        w1    : (R_i, K*Cin_p)  R_i = 2*Cout_p if the 1x1 downsample is folded
                                 in as extra rows, else Cout_p
        b1    : (R_i, 1)        f32 (conv1 bias ++ downsample bias)
        w2    : (Cout_p, K*Cout_p)
        b2    : (Cout_p, 1)     f32
      o       : (1, Cout_last, TL)  output tile (f32)
      per layer i with e_i > 0 (2 persistent VMEM scratch refs):
        carry_a  : (Cin_p, e_i)   last e_i layer-input columns of the prev tile
        carry_h1 : (Cout_p, e_i)  last e_i conv1-activation columns of prev tile
    """
    n = len(layers)
    x_ref = refs[0]
    w_refs = refs[1:1 + 4 * n]
    o_ref = refs[1 + 4 * n]
    carry_refs = refs[2 + 4 * n:]

    t = pl.program_id(1)

    if carry_refs:
        @pl.when(t == 0)
        def _init():  # causal left zero-padding for the very first tile
            for r in carry_refs:
                r[...] = jnp.zeros_like(r)

    tl = x_ref.shape[2]
    cin0 = x_ref.shape[1]

    # Layer input, f32, channel-padded to the sublane packing granularity.
    a = x_ref[0].astype(jnp.float32)
    if layers[0].cin_p > cin0:
        a = jnp.concatenate(
            [a, jnp.zeros((layers[0].cin_p - cin0, tl), jnp.float32)], axis=0)

    ci = 0
    for li, spec in enumerate(layers):
        w1 = w_refs[4 * li][...]
        b1 = w_refs[4 * li + 1][...]
        w2 = w_refs[4 * li + 2][...]
        b2 = w_refs[4 * li + 3][...]
        d, e, cout_p = spec.dil, spec.e, spec.cout_p

        a_c = a.astype(cdtype)
        if e > 0:
            ca_ref, ch_ref = carry_refs[ci], carry_refs[ci + 1]
            ci += 2
            carry_a = ca_ref[...]
            carry_h1 = ch_ref[...]
        else:
            carry_a = carry_h1 = None

        # conv1 (+ folded 1x1 downsample): the K dilated taps as one stacked MXU
        # contraction.  Tap j reads positions q - e + j*d, i.e. the current tile
        # shifted right by (K-1-j)*d with fill from the carried halo.
        taps = [_shifted(carry_a, a_c, (K - 1 - j) * d) for j in range(K)]
        x1 = taps[0] if K == 1 else jnp.concatenate(taps, axis=0)
        hb = jnp.dot(w1, x1, preferred_element_type=jnp.float32,
                     precision=precision) + b1
        h1 = jnp.maximum(hb[:cout_p], 0.0)           # bias + ReLU (dropout = id)
        res = hb[cout_p:] if spec.has_down else a    # residual branch (no ReLU)

        # conv2 over the conv1 activation; its causal zero padding / halo comes
        # from the carried conv1 activation (zeros on the first tile).
        h1_c = h1.astype(cdtype)
        taps2 = [_shifted(carry_h1, h1_c, (K - 1 - j) * d) for j in range(K)]
        x2 = taps2[0] if K == 1 else jnp.concatenate(taps2, axis=0)
        h2 = jnp.maximum(
            jnp.dot(w2, x2, preferred_element_type=jnp.float32,
                    precision=precision) + b2, 0.0)

        a = jnp.maximum(h2 + res, 0.0)               # ReLU(out + res)

        if e > 0:                                    # hand the halo to the next tile
            ca_ref[...] = _updated_carry(carry_a, a_c)
            ch_ref[...] = _updated_carry(carry_h1, h1_c)

    o_ref[0] = a[:o_ref.shape[1], :].astype(o_ref.dtype)


# ------------------------------ host-side wrapper ------------------------------

def _weight_norm(v, g):
    # PyTorch weight_norm(dim=0) on Conv1d weight (Cout, Cin, K): per-out-channel norm.
    norm = jnp.sqrt(jnp.sum(v * v, axis=(1, 2), keepdims=True))
    return g * v / norm


def _vmem_budget_bytes():
    cap = None
    try:
        info = pltpu.get_tpu_info()
        cap = int(getattr(info, "vmem_capacity_bytes", 0)) or None
    except Exception:
        cap = None
    if cap is None:
        cap = 64 * 1024 * 1024        # conservative: v7x per-TensorCore VMEM
    return cap // 2                   # never request more than half of physical


def _per_col_bytes(layer_specs, K, cdtype, cin0, cout_last):
    """Rough per-L-column VMEM footprint: working values of the busiest layer
    plus the double-buffered f32 input/output blocks."""
    cb = jnp.dtype(cdtype).itemsize
    peak = 0
    for s in layer_specs:
        rows1 = 2 * s.cout_p if s.has_down else s.cout_p
        b = (s.cin_p * 4 + s.cin_p * cb + 2 * K * s.cin_p * cb      # a, a_c, taps+x1
             + rows1 * 4 + s.cout_p * 4                             # hb, h1
             + 2 * K * s.cout_p * cb + 2 * s.cout_p * 4)            # taps2+x2, h2, out
        peak = max(peak, b)
    return peak + 2 * 4 * cin0 + 2 * 4 * cout_last


def _choose_tl(L, per_col, budget, max_tl=None):
    """Output tile length: lane-aligned, big enough to amortize per-step pipeline
    overhead, small enough to fit (with headroom) in the VMEM budget."""
    if L <= _LANE:
        return L
    lr = _round_up(L, _LANE)
    max_cols = (budget // 2) // max(per_col, 1)
    cap = max(_LANE, min(4096, (max_cols // _LANE) * _LANE))
    if max_tl is not None:
        cap = max(_LANE, min(cap, (max_tl // _LANE) * _LANE))
    if lr <= cap:
        return lr                      # whole (rounded) sequence in one tile
    for tl in (4096, 2048, 1024, 512, 256, 128):
        if tl <= cap and (_round_up(L, tl) - L) <= max(L // 8, _LANE):
            return tl
    return _LANE


def temporal_conv_net(x, params, compute_dtype=jnp.bfloat16, max_tl=None):
    """x: (B, num_inputs, L) f32 -> (B, num_channels[-1], L) f32."""
    B, C0, L = x.shape
    n = len(params)
    K = params[0]["v1"].shape[-1]
    f32_compute = jnp.dtype(compute_dtype) == jnp.dtype(jnp.float32)
    precision = jax.lax.Precision.HIGHEST if f32_compute else None

    # ---- per-layer weight prep: weight_norm, channel padding, tap stacking,
    #      1x1-downsample fold ----
    layer_specs = []
    weight_args = []
    cin = C0
    for i, p in enumerate(params):
        cout = p["v1"].shape[0]
        d = 2 ** i
        e = (K - 1) * d
        cin_p, cout_p = _pad_ch(cin), _pad_ch(cout)
        has_down = p["wd"] is not None

        w1 = _weight_norm(p["v1"], p["g1"])            # (cout, cin, K)
        w2 = _weight_norm(p["v2"], p["g2"])            # (cout, cout, K)
        w1p = jnp.zeros((cout_p, cin_p, K), jnp.float32).at[:cout, :cin].set(w1)
        w2p = jnp.zeros((cout_p, cout_p, K), jnp.float32).at[:cout, :cout].set(w2)
        b1p = jnp.zeros((cout_p,), jnp.float32).at[:cout].set(p["b1"])
        b2p = jnp.zeros((cout_p,), jnp.float32).at[:cout].set(p["b2"])
        # Stack the K taps on the contraction dim: column j*cin_p + c <-> w[:, c, j].
        w1s = jnp.transpose(w1p, (0, 2, 1)).reshape(cout_p, K * cin_p)
        w2s = jnp.transpose(w2p, (0, 2, 1)).reshape(cout_p, K * cout_p)
        if has_down:
            wdp = jnp.zeros((cout_p, cin_p), jnp.float32).at[:cout, :cin].set(
                p["wd"][:, :, 0])
            bdp = jnp.zeros((cout_p,), jnp.float32).at[:cout].set(p["bd"])
            # Fold the 1x1 downsample as extra conv1 output rows; its only
            # nonzero columns are the tap-(K-1) block (= x at the output position).
            w1big = jnp.zeros((2 * cout_p, K * cin_p), jnp.float32)
            w1big = w1big.at[:cout_p].set(w1s)
            w1big = w1big.at[cout_p:, (K - 1) * cin_p:].set(wdp)
            bbig = jnp.concatenate([b1p, bdp])
        else:
            w1big, bbig = w1s, b1p

        weight_args += [w1big.astype(compute_dtype),
                        bbig.reshape(-1, 1).astype(jnp.float32),
                        w2s.astype(compute_dtype),
                        b2p.reshape(-1, 1).astype(jnp.float32)]
        layer_specs.append(_LayerSpec(cin_p, cout_p, d, e, has_down))
        cin = cout
    cout_last = cin

    # ---- tile the sequence (right-pad only; the convs are causal) ----
    budget = _vmem_budget_bytes()
    per_col = _per_col_bytes(layer_specs, K, compute_dtype, C0, cout_last)
    TL = _choose_tl(L, per_col, budget, max_tl)
    L_net = _round_up(L, TL)
    T = L_net // TL
    xp = x.astype(jnp.float32)
    if L_net != L:
        xp = jnp.pad(xp, ((0, 0), (0, 0), (0, L_net - L)))

    # ---- specs ----
    in_specs = [pl.BlockSpec((1, C0, TL), lambda b, t: (b, 0, t))]
    args = [xp]
    for w in weight_args:
        args.append(w)
        in_specs.append(pl.BlockSpec(w.shape, lambda b, t: (0, 0)))
    out_specs = pl.BlockSpec((1, cout_last, TL), lambda b, t: (b, 0, t))

    scratch_shapes = []
    for s in layer_specs:
        if s.e > 0:
            scratch_shapes.append(pltpu.VMEM((s.cin_p, s.e), compute_dtype))
            scratch_shapes.append(pltpu.VMEM((s.cout_p, s.e), compute_dtype))

    flops = 0
    for s in layer_specs:
        rows1 = 2 * s.cout_p if s.has_down else s.cout_p
        flops += 2 * B * L_net * (rows1 * K * s.cin_p + s.cout_p * K * s.cout_p)
    weight_bytes = sum(int(w.size) * w.dtype.itemsize for w in weight_args)
    cost = pl.CostEstimate(
        flops=int(flops), transcendentals=0,
        bytes_accessed=int(B * L_net * (C0 + cout_last) * 4 + weight_bytes))

    kernel = functools.partial(
        _tcn_fused_kernel, layers=tuple(layer_specs), K=K,
        cdtype=compute_dtype, precision=precision)

    out = pl.pallas_call(
        kernel,
        out_shape=jax.ShapeDtypeStruct((B, cout_last, L_net), jnp.float32),
        grid=(B, T),
        in_specs=in_specs,
        out_specs=out_specs,
        scratch_shapes=scratch_shapes,
        compiler_params=pltpu.CompilerParams(
            # The t axis must stay sequential per core: halo carries live across it.
            dimension_semantics=("parallel", "arbitrary"),
            vmem_limit_bytes=int(budget)),
        cost_estimate=cost,
    )(*args)
    return out if L_net == L else out[:, :, :L]


def init_tcn_params(key, num_inputs, num_channels, kernel_size, scale=0.01):
    """Deterministic synthetic parameters mirroring TemporalBlock.__init__."""
    params = []
    for i, out_ch in enumerate(num_channels):
        in_ch = num_inputs if i == 0 else num_channels[i - 1]
        key, k1, k2, k3, k4, k5, k6 = jax.random.split(key, 7)
        v1 = scale * jax.random.normal(k1, (out_ch, in_ch, kernel_size), jnp.float32)
        g1 = jnp.sqrt(jnp.sum(v1 * v1, axis=(1, 2), keepdims=True))
        b1 = scale * jax.random.normal(k2, (out_ch,), jnp.float32)
        v2 = scale * jax.random.normal(k3, (out_ch, out_ch, kernel_size), jnp.float32)
        g2 = jnp.sqrt(jnp.sum(v2 * v2, axis=(1, 2), keepdims=True))
        b2 = scale * jax.random.normal(k4, (out_ch,), jnp.float32)
        if in_ch != out_ch:
            wd = scale * jax.random.normal(k5, (out_ch, in_ch, 1), jnp.float32)
            bd = scale * jax.random.normal(k6, (out_ch,), jnp.float32)
        else:
            wd, bd = None, None
        params.append(dict(v1=v1, g1=g1, b1=b1, v2=v2, g2=g2, b2=b2, wd=wd, bd=bd))
    return params


# ---------------- pure-JAX reference (mirrors the PyTorch module) ----------------

def _ref_causal_conv1d(x, w, b, dilation):
    B, Cin, L = x.shape
    Cout, _, K = w.shape
    pad = (K - 1) * dilation
    xp = jnp.pad(x, ((0, 0), (0, 0), (pad, 0)))
    out = jnp.zeros((B, Cout, L), jnp.float32)
    for j in range(K):
        out = out + jnp.einsum("oc,bcl->bol", w[:, :, j],
                               xp[:, :, j * dilation:j * dilation + L],
                               precision=jax.lax.Precision.HIGHEST)
    return out + b[None, :, None]


def temporal_conv_net_ref(x, params):
    h = x.astype(jnp.float32)
    for i, p in enumerate(params):
        d = 2 ** i
        w1 = _weight_norm(p["v1"], p["g1"])
        w2 = _weight_norm(p["v2"], p["g2"])
        out = jax.nn.relu(_ref_causal_conv1d(h, w1, p["b1"], d))
        out = jax.nn.relu(_ref_causal_conv1d(out, w2, p["b2"], d))
        # TODO(synk): nn.Dropout is treated as identity (inference/eval mode).
        res = h if p["wd"] is None else _ref_causal_conv1d(h, p["wd"], p["bd"], 1)
        h = jax.nn.relu(out + res)
    return h


if __name__ == "__main__":
    key = jax.random.PRNGKey(0)

    def run_and_check(B, C_in, L, num_channels, kernel_size, scale, key,
                      max_tl=None, check_bf16=True):
        kx, kp = jax.random.split(key)
        x = jax.random.normal(kx, (B, C_in, L), jnp.float32)
        params = init_tcn_params(kp, C_in, num_channels, kernel_size, scale)
        ref = jax.block_until_ready(temporal_conv_net_ref(x, params))
        ref_max = float(jnp.max(jnp.abs(ref))) + 1e-6

        # f32 compute path: tight tolerance (validates tiling / halo-carry logic).
        out32 = jax.block_until_ready(
            temporal_conv_net(x, params, compute_dtype=jnp.float32, max_tl=max_tl))
        assert out32.shape == (B, num_channels[-1], L)
        assert bool(jnp.all(jnp.isfinite(out32)))
        err32 = float(jnp.max(jnp.abs(out32 - ref)))
        assert err32 <= 1e-3 * ref_max + 1e-5, f"f32 path err {err32} (max {ref_max})"

        if check_bf16:
            # bf16 MXU path: rounding compounds across layers -> looser tolerance.
            out16 = jax.block_until_ready(
                temporal_conv_net(x, params, compute_dtype=jnp.bfloat16,
                                  max_tl=max_tl))
            err16 = float(jnp.max(jnp.abs(out16 - ref)))
            assert err16 <= 8e-2 * ref_max + 1e-4, \
                f"bf16 path err {err16} (max {ref_max})"

    k1, k2, k3 = jax.random.split(key, 3)
    # Small config matching the module's toy usage (single tile, L < 128).
    run_and_check(B=2, C_in=4, L=16, num_channels=[8, 8], kernel_size=2,
                  scale=0.01, key=k1)
    # Multi-tile path: sequence tiling with cross-tile halo carries.
    run_and_check(B=2, C_in=8, L=1000, num_channels=[16, 16, 16], kernel_size=3,
                  scale=0.3, key=k2, max_tl=256)
    # Deep dilations (halo wider than a tile) + odd channel counts (padding path).
    run_and_check(B=2, C_in=8, L=1000, num_channels=[25] * 8, kernel_size=3,
                  scale=0.2, key=k3, max_tl=128, check_bf16=False)

    print("KERNEL_OK")
</pallas_src>

<mosaic_0001>
module attributes {stable_mosaic.version = 11 : i64} {
  func.func @_tcn_fused_kernel(%arg0: i32, %arg1: i32, %arg2: memref<1x4x16xf32, #tpu.memory_space<vmem>>, %arg3: memref<32x32xf32, #tpu.memory_space<vmem>>, %arg4: memref<32x1xf32, #tpu.memory_space<vmem>>, %arg5: memref<16x32xf32, #tpu.memory_space<vmem>>, %arg6: memref<16x1xf32, #tpu.memory_space<vmem>>, %arg7: memref<16x32xf32, #tpu.memory_space<vmem>>, %arg8: memref<16x1xf32, #tpu.memory_space<vmem>>, %arg9: memref<16x32xf32, #tpu.memory_space<vmem>>, %arg10: memref<16x1xf32, #tpu.memory_space<vmem>>, %arg11: memref<1x8x16xf32, #tpu.memory_space<vmem>>, %arg12: memref<16x1xf32, #tpu.memory_space<vmem>>, %arg13: memref<16x1xf32, #tpu.memory_space<vmem>>, %arg14: memref<16x2xf32, #tpu.memory_space<vmem>>, %arg15: memref<16x2xf32, #tpu.memory_space<vmem>>) attributes {dimension_semantics = [#tpu.dimension_semantics<parallel>, #tpu.dimension_semantics<arbitrary>], iteration_bounds = array<i64: 2, 1>, scalar_prefetch = 0 : i64, scratch_operands = 4 : i64, tpu.core_type = #tpu.core_type<tc>, window_params = [{transform_indices = @transform_0, window_bounds = array<i64: 1, 4, 16>}, {pipeline_mode = #tpu.pipeline_mode<synchronous>, transform_indices = @transform_1, window_bounds = array<i64: 32, 32>}, {pipeline_mode = #tpu.pipeline_mode<synchronous>, transform_indices = @transform_2, window_bounds = array<i64: 32, 1>}, {pipeline_mode = #tpu.pipeline_mode<synchronous>, transform_indices = @transform_3, window_bounds = array<i64: 16, 32>}, {pipeline_mode = #tpu.pipeline_mode<synchronous>, transform_indices = @transform_4, window_bounds = array<i64: 16, 1>}, {pipeline_mode = #tpu.pipeline_mode<synchronous>, transform_indices = @transform_5, window_bounds = array<i64: 16, 32>}, {pipeline_mode = #tpu.pipeline_mode<synchronous>, transform_indices = @transform_6, window_bounds = array<i64: 16, 1>}, {pipeline_mode = #tpu.pipeline_mode<synchronous>, transform_indices = @transform_7, window_bounds = array<i64: 16, 32>}, {pipeline_mode = #tpu.pipeline_mode<synchronous>, transform_indices = @transform_8, window_bounds = array<i64: 16, 1>}, {transform_indices = @transform_9, window_bounds = array<i64: 1, 8, 16>}]} {
    %c0_i32 = arith.constant 0 : i32
    %0 = arith.cmpi eq, %arg1, %c0_i32 : i32
    %1 = arith.extui %0 : i1 to i32
    %c0_i32_0 = arith.constant 0 : i32
    %2 = arith.cmpi ne, %1, %c0_i32_0 : i32
    scf.if %2 {
      %cst_48 = arith.constant 0.000000e+00 : f32
      %71 = vector.broadcast %cst_48 : f32 to vector<16x1xf32>
      %c0_49 = arith.constant 0 : index
      %c0_50 = arith.constant 0 : index
      %72 = vector.load %arg12[%c0_49, %c0_50] : memref<16x1xf32, #tpu.memory_space<vmem>>, vector<16x1xf32>
      tpu.vector_store %arg12[%c0_49, %c0_50], %71 {strides = array<i32>} : memref<16x1xf32, #tpu.memory_space<vmem>>, vector<16x1xf32>,
      %cst_51 = arith.constant 0.000000e+00 : f32
      %73 = vector.broadcast %cst_51 : f32 to vector<16x1xf32>
      %c0_52 = arith.constant 0 : index
      %c0_53 = arith.constant 0 : index
      %74 = vector.load %arg13[%c0_52, %c0_53] : memref<16x1xf32, #tpu.memory_space<vmem>>, vector<16x1xf32>
      tpu.vector_store %arg13[%c0_52, %c0_53], %73 {strides = array<i32>} : memref<16x1xf32, #tpu.memory_space<vmem>>, vector<16x1xf32>,
      %cst_54 = arith.constant 0.000000e+00 : f32
      %75 = vector.broadcast %cst_54 : f32 to vector<16x2xf32>
      %c0_55 = arith.constant 0 : index
      %c0_56 = arith.constant 0 : index
      %76 = vector.load %arg14[%c0_55, %c0_56] : memref<16x2xf32, #tpu.memory_space<vmem>>, vector<16x2xf32>
      tpu.vector_store %arg14[%c0_55, %c0_56], %75 {strides = array<i32>} : memref<16x2xf32, #tpu.memory_space<vmem>>, vector<16x2xf32>,
      %cst_57 = arith.constant 0.000000e+00 : f32
      %77 = vector.broadcast %cst_57 : f32 to vector<16x2xf32>
      %c0_58 = arith.constant 0 : index
      %c0_59 = arith.constant 0 : index
      %78 = vector.load %arg15[%c0_58, %c0_59] : memref<16x2xf32, #tpu.memory_space<vmem>>, vector<16x2xf32>
      tpu.vector_store %arg15[%c0_58, %c0_59], %77 {strides = array<i32>} : memref<16x2xf32, #tpu.memory_space<vmem>>, vector<16x2xf32>,
    } else {
    }
    %c0 = arith.constant 0 : index
    %c0_1 = arith.constant 0 : index
    %c0_2 = arith.constant 0 : index
    %3 = vector.load %arg2[%c0, %c0_1, %c0_2] : memref<1x4x16xf32, #tpu.memory_space<vmem>>, vector<1x4x16xf32>
    %4 = vector.shape_cast %3 : vector<1x4x16xf32> to vector<4x16xf32>
    %cst = arith.constant 0.000000e+00 : f32
    %5 = vector.broadcast %cst : f32 to vector<12x16xf32>
    %6 = tpu.concatenate %4, %5 in 0 : vector<4x16xf32>, vector<12x16xf32> -> vector<16x16xf32>
    %c0_3 = arith.constant 0 : index
    %c0_4 = arith.constant 0 : index
    %7 = vector.load %arg3[%c0_3, %c0_4] : memref<32x32xf32, #tpu.memory_space<vmem>>, vector<32x32xf32>
    %c0_5 = arith.constant 0 : index
    %c0_6 = arith.constant 0 : index
    %8 = vector.load %arg4[%c0_5, %c0_6] : memref<32x1xf32, #tpu.memory_space<vmem>>, vector<32x1xf32>
    %c0_7 = arith.constant 0 : index
    %c0_8 = arith.constant 0 : index
    %9 = vector.load %arg5[%c0_7, %c0_8] : memref<16x32xf32, #tpu.memory_space<vmem>>, vector<16x32xf32>
    %c0_9 = arith.constant 0 : index
    %c0_10 = arith.constant 0 : index
    %10 = vector.load %arg6[%c0_9, %c0_10] : memref<16x1xf32, #tpu.memory_space<vmem>>, vector<16x1xf32>
    %c0_11 = arith.constant 0 : index
    %c0_12 = arith.constant 0 : index
    %11 = vector.load %arg12[%c0_11, %c0_12] : memref<16x1xf32, #tpu.memory_space<vmem>>, vector<16x1xf32>
    %c0_13 = arith.constant 0 : index
    %c0_14 = arith.constant 0 : index
    %12 = vector.load %arg13[%c0_13, %c0_14] : memref<16x1xf32, #tpu.memory_space<vmem>>, vector<16x1xf32>
    %13 = vector.extract_strided_slice %6 {offsets = [0, 0], sizes = [16, 15], strides = [1, 1]} : vector<16x16xf32> to vector<16x15xf32>
    %14 = tpu.concatenate %11, %13 in 1 : vector<16x1xf32>, vector<16x15xf32> -> vector<16x16xf32>
    %15 = tpu.concatenate %14, %6 in 0 : vector<16x16xf32>, vector<16x16xf32> -> vector<32x16xf32>
    %cst_15 = arith.constant dense<0.000000e+00> : vector<32x16xf32>
    %16 = tpu.matmul %7, %15, %cst_15 {dimension_numbers = #tpu.dot_dimension_numbers<[1], [0], [0], [1], [0, 0, 1, 1], [], []>, precision = #tpu.contract_precision<fp32>} : vector<32x32xf32>, vector<32x16xf32>, vector<32x16xf32> -> vector<32x16xf32>
    %17 = vector.broadcast %8 : vector<32x1xf32> to vector<32x16xf32>
    %18 = arith.addf %16, %17 : vector<32x16xf32>
    %19 = vector.extract_strided_slice %18 {offsets = [0, 0], sizes = [16, 16], strides = [1, 1]} : vector<32x16xf32> to vector<16x16xf32>
    %cst_16 = arith.constant 0.000000e+00 : f32
    %20 = vector.broadcast %cst_16 : f32 to vector<16x16xf32>
    %21 = arith.maximumf %19, %20 : vector<16x16xf32>
    %22 = vector.extract_strided_slice %18 {offsets = [16, 0], sizes = [16, 16], strides = [1, 1]} : vector<32x16xf32> to vector<16x16xf32>
    %23 = vector.extract_strided_slice %21 {offsets = [0, 0], sizes = [16, 15], strides = [1, 1]} : vector<16x16xf32> to vector<16x15xf32>
    %24 = tpu.concatenate %12, %23 in 1 : vector<16x1xf32>, vector<16x15xf32> -> vector<16x16xf32>
    %25 = tpu.concatenate %24, %21 in 0 : vector<16x16xf32>, vector<16x16xf32> -> vector<32x16xf32>
    %cst_17 = arith.constant dense<0.000000e+00> : vector<16x16xf32>
    %26 = tpu.matmul %9, %25, %cst_17 {dimension_numbers = #tpu.dot_dimension_numbers<[1], [0], [0], [1], [0, 0, 1, 1], [], []>, precision = #tpu.contract_precision<fp32>} : vector<16x32xf32>, vector<32x16xf32>, vector<16x16xf32> -> vector<16x16xf32>
    %27 = vector.broadcast %10 : vector<16x1xf32> to vector<16x16xf32>
    %28 = arith.addf %26, %27 : vector<16x16xf32>
    %cst_18 = arith.constant 0.000000e+00 : f32
    %29 = vector.broadcast %cst_18 : f32 to vector<16x16xf32>
    %30 = arith.maximumf %28, %29 : vector<16x16xf32>
    %31 = arith.addf %30, %22 : vector<16x16xf32>
    %cst_19 = arith.constant 0.000000e+00 : f32
    %32 = vector.broadcast %cst_19 : f32 to vector<16x16xf32>
    %33 = arith.maximumf %31, %32 : vector<16x16xf32>
    %34 = vector.extract_strided_slice %6 {offsets = [0, 15], sizes = [16, 1], strides = [1, 1]} : vector<16x16xf32> to vector<16x1xf32>
    %c0_20 = arith.constant 0 : index
    %c0_21 = arith.constant 0 : index
    %35 = vector.load %arg12[%c0_20, %c0_21] : memref<16x1xf32, #tpu.memory_space<vmem>>, vector<16x1xf32>
    tpu.vector_store %arg12[%c0_20, %c0_21], %34 {strides = array<i32>} : memref<16x1xf32, #tpu.memory_space<vmem>>, vector<16x1xf32>,
    %36 = vector.extract_strided_slice %21 {offsets = [0, 15], sizes = [16, 1], strides = [1, 1]} : vector<16x16xf32> to vector<16x1xf32>
    %c0_22 = arith.constant 0 : index
    %c0_23 = arith.constant 0 : index
    %37 = vector.load %arg13[%c0_22, %c0_23] : memref<16x1xf32, #tpu.memory_space<vmem>>, vector<16x1xf32>
    tpu.vector_store %arg13[%c0_22, %c0_23], %36 {strides = array<i32>} : memref<16x1xf32, #tpu.memory_space<vmem>>, vector<16x1xf32>,
    %c0_24 = arith.constant 0 : index
    %c0_25 = arith.constant 0 : index
    %38 = vector.load %arg7[%c0_24, %c0_25] : memref<16x32xf32, #tpu.memory_space<vmem>>, vector<16x32xf32>
    %c0_26 = arith.constant 0 : index
    %c0_27 = arith.constant 0 : index
    %39 = vector.load %arg8[%c0_26, %c0_27] : memref<16x1xf32, #tpu.memory_space<vmem>>, vector<16x1xf32>
    %c0_28 = arith.constant 0 : index
    %c0_29 = arith.constant 0 : index
    %40 = vector.load %arg9[%c0_28, %c0_29] : memref<16x32xf32, #tpu.memory_space<vmem>>, vector<16x32xf32>
    %c0_30 = arith.constant 0 : index
    %c0_31 = arith.constant 0 : index
    %41 = vector.load %arg10[%c0_30, %c0_31] : memref<16x1xf32, #tpu.memory_space<vmem>>, vector<16x1xf32>
    %c0_32 = arith.constant 0 : index
    %c0_33 = arith.constant 0 : index
    %42 = vector.load %arg14[%c0_32, %c0_33] : memref<16x2xf32, #tpu.memory_space<vmem>>, vector<16x2xf32>
    %c0_34 = arith.constant 0 : index
    %c0_35 = arith.constant 0 : index
    %43 = vector.load %arg15[%c0_34, %c0_35] : memref<16x2xf32, #tpu.memory_space<vmem>>, vector<16x2xf32>
    %44 = vector.extract_strided_slice %33 {offsets = [0, 0], sizes = [16, 14], strides = [1, 1]} : vector<16x16xf32> to vector<16x14xf32>
    %45 = tpu.concatenate %42, %44 in 1 : vector<16x2xf32>, vector<16x14xf32> -> vector<16x16xf32>
    %46 = tpu.concatenate %45, %33 in 0 : vector<16x16xf32>, vector<16x16xf32> -> vector<32x16xf32>
    %cst_36 = arith.constant dense<0.000000e+00> : vector<16x16xf32>
    %47 = tpu.matmul %38, %46, %cst_36 {dimension_numbers = #tpu.dot_dimension_numbers<[1], [0], [0], [1], [0, 0, 1, 1], [], []>, precision = #tpu.contract_precision<fp32>} : vector<16x32xf32>, vector<32x16xf32>, vector<16x16xf32> -> vector<16x16xf32>
    %48 = vector.broadcast %39 : vector<16x1xf32> to vector<16x16xf32>
    %49 = arith.addf %47, %48 : vector<16x16xf32>
    %cst_37 = arith.constant 0.000000e+00 : f32
    %50 = vector.broadcast %cst_37 : f32 to vector<16x16xf32>
    %51 = arith.maximumf %49, %50 : vector<16x16xf32>
    %52 = vector.extract_strided_slice %51 {offsets = [0, 0], sizes = [16, 14], strides = [1, 1]} : vector<16x16xf32> to vector<16x14xf32>
    %53 = tpu.concatenate %43, %52 in 1 : vector<16x2xf32>, vector<16x14xf32> -> vector<16x16xf32>
    %54 = tpu.concatenate %53, %51 in 0 : vector<16x16xf32>, vector<16x16xf32> -> vector<32x16xf32>
    %cst_38 = arith.constant dense<0.000000e+00> : vector<16x16xf32>
    %55 = tpu.matmul %40, %54, %cst_38 {dimension_numbers = #tpu.dot_dimension_numbers<[1], [0], [0], [1], [0, 0, 1, 1], [], []>, precision = #tpu.contract_precision<fp32>} : vector<16x32xf32>, vector<32x16xf32>, vector<16x16xf32> -> vector<16x16xf32>
    %56 = vector.broadcast %41 : vector<16x1xf32> to vector<16x16xf32>
    %57 = arith.addf %55, %56 : vector<16x16xf32>
    %cst_39 = arith.constant 0.000000e+00 : f32
    %58 = vector.broadcast %cst_39 : f32 to vector<16x16xf32>
    %59 = arith.maximumf %57, %58 : vector<16x16xf32>
    %60 = arith.addf %59, %33 : vector<16x16xf32>
    %cst_40 = arith.constant 0.000000e+00 : f32
    %61 = vector.broadcast %cst_40 : f32 to vector<16x16xf32>
    %62 = arith.maximumf %60, %61 : vector<16x16xf32>
    %63 = vector.extract_strided_slice %33 {offsets = [0, 14], sizes = [16, 2], strides = [1, 1]} : vector<16x16xf32> to vector<16x2xf32>
    %c0_41 = arith.constant 0 : index
    %c0_42 = arith.constant 0 : index
    %64 = vector.load %arg14[%c0_41, %c0_42] : memref<16x2xf32, #tpu.memory_space<vmem>>, vector<16x2xf32>
    tpu.vector_store %arg14[%c0_41, %c0_42], %63 {strides = array<i32>} : memref<16x2xf32, #tpu.memory_space<vmem>>, vector<16x2xf32>,
    %65 = vector.extract_strided_slice %51 {offsets = [0, 14], sizes = [16, 2], strides = [1, 1]} : vector<16x16xf32> to vector<16x2xf32>
    %c0_43 = arith.constant 0 : index
    %c0_44 = arith.constant 0 : index
    %66 = vector.load %arg15[%c0_43, %c0_44] : memref<16x2xf32, #tpu.memory_space<vmem>>, vector<16x2xf32>
    tpu.vector_store %arg15[%c0_43, %c0_44], %65 {strides = array<i32>} : memref<16x2xf32, #tpu.memory_space<vmem>>, vector<16x2xf32>,
    %67 = vector.extract_strided_slice %62 {offsets = [0, 0], sizes = [8, 16], strides = [1, 1]} : vector<16x16xf32> to vector<8x16xf32>
    %c0_45 = arith.constant 0 : index
    %c0_46 = arith.constant 0 : index
    %c0_47 = arith.constant 0 : index
    %68 = vector.load %arg11[%c0_45, %c0_46, %c0_47] : memref<1x8x16xf32, #tpu.memory_space<vmem>>, vector<1x8x16xf32>
    %69 = vector.shape_cast %68 : vector<1x8x16xf32> to vector<8x16xf32>
    %70 = vector.shape_cast %67 : vector<8x16xf32> to vector<1x8x16xf32>
    tpu.vector_store %arg11[%c0_45, %c0_46, %c0_47], %70 {strides = array<i32>} : memref<1x8x16xf32, #tpu.memory_space<vmem>>, vector<1x8x16xf32>,
    return
  }
  func.func @transform_0(%arg0: i32, %arg1: i32) -> (i32, i32, i32) {
    %c0_i32 = arith.constant 0 : i32
    %c0_i32_0 = arith.constant 0 : i32
    return %arg0, %c0_i32, %arg1 : i32, i32, i32
  }
  func.func @transform_1(%arg0: i32, %arg1: i32) -> (i32, i32) {
    %c0_i32 = arith.constant 0 : i32
    %c0_i32_0 = arith.constant 0 : i32
    %c0_i32_1 = arith.constant 0 : i32
    return %c0_i32, %c0_i32_0 : i32, i32
  }
  func.func @transform_2(%arg0: i32, %arg1: i32) -> (i32, i32) {
    %c0_i32 = arith.constant 0 : i32
    %c0_i32_0 = arith.constant 0 : i32
    %c0_i32_1 = arith.constant 0 : i32
    return %c0_i32, %c0_i32_0 : i32, i32
  }
  func.func @transform_3(%arg0: i32, %arg1: i32) -> (i32, i32) {
    %c0_i32 = arith.constant 0 : i32
    %c0_i32_0 = arith.constant 0 : i32
    %c0_i32_1 = arith.constant 0 : i32
    return %c0_i32, %c0_i32_0 : i32, i32
  }
  func.func @transform_4(%arg0: i32, %arg1: i32) -> (i32, i32) {
    %c0_i32 = arith.constant 0 : i32
    %c0_i32_0 = arith.constant 0 : i32
    %c0_i32_1 = arith.constant 0 : i32
    return %c0_i32, %c0_i32_0 : i32, i32
  }
  func.func @transform_5(%arg0: i32, %arg1: i32) -> (i32, i32) {
    %c0_i32 = arith.constant 0 : i32
    %c0_i32_0 = arith.constant 0 : i32
    %c0_i32_1 = arith.constant 0 : i32
    return %c0_i32, %c0_i32_0 : i32, i32
  }
  func.func @transform_6(%arg0: i32, %arg1: i32) -> (i32, i32) {
    %c0_i32 = arith.constant 0 : i32
    %c0_i32_0 = arith.constant 0 : i32
    %c0_i32_1 = arith.constant 0 : i32
    return %c0_i32, %c0_i32_0 : i32, i32
  }
  func.func @transform_7(%arg0: i32, %arg1: i32) -> (i32, i32) {
    %c0_i32 = arith.constant 0 : i32
    %c0_i32_0 = arith.constant 0 : i32
    %c0_i32_1 = arith.constant 0 : i32
    return %c0_i32, %c0_i32_0 : i32, i32
  }
  func.func @transform_8(%arg0: i32, %arg1: i32) -> (i32, i32) {
    %c0_i32 = arith.constant 0 : i32
    %c0_i32_0 = arith.constant 0 : i32
    %c0_i32_1 = arith.constant 0 : i32
    return %c0_i32, %c0_i32_0 : i32, i32
  }
  func.func @transform_9(%arg0: i32, %arg1: i32) -> (i32, i32, i32) {
    %c0_i32 = arith.constant 0 : i32
    %c0_i32_0 = arith.constant 0 : i32
    return %arg0, %c0_i32, %arg1 : i32, i32, i32
  }
}

</mosaic_0001>

<llo_original>
// kernel: tpu_custom_call.1
$region0: #{tpu_custom_call.1}
  #allocation0 [shape = 'u32[]', space=smem, size = 0x4, offset = 0x4, fixed_abs, tag = 'smem constant byte address 0x4 - core index']
  #allocation1 [shape = 'u32[144,128]{1,0:T(1,128)}', space=vmem, size = 0x12000, scoped, tag = 'internal scratch']
  #allocation2 [shape = 'f32[16,1]{1,0:T(8,128)}', space=vmem, size = 0x2000, scoped, tag = 'scratch operand']
  #allocation3 [shape = 'f32[16,1]{1,0:T(8,128)}', space=vmem, size = 0x2000, scoped, tag = 'scratch operand']
  #allocation4 [shape = 'f32[16,2]{1,0:T(8,128)}', space=vmem, size = 0x2000, scoped, tag = 'scratch operand']
  #allocation5 [shape = 'f32[16,2]{1,0:T(8,128)}', space=vmem, size = 0x2000, scoped, tag = 'scratch operand']
  %s0 = inlined_call_operand.hbm [shape: f32[2,4,16], index: 0, kind: input, shape index: {}]
  %s1 = inlined_call_operand.vmem [shape: f32[32,32], index: 1, kind: input, shape index: {}]
  %s2 = inlined_call_operand.vmem [shape: f32[32,1], index: 2, kind: input, shape index: {}]
  %s3 = inlined_call_operand.vmem [shape: f32[16,32], index: 3, kind: input, shape index: {}]
  %s4 = inlined_call_operand.vmem [shape: f32[16,1], index: 4, kind: input, shape index: {}]
  %s5 = inlined_call_operand.vmem [shape: f32[16,32], index: 5, kind: input, shape index: {}]
  %s6 = inlined_call_operand.vmem [shape: f32[16,1], index: 6, kind: input, shape index: {}]
  %s7 = inlined_call_operand.vmem [shape: f32[16,32], index: 7, kind: input, shape index: {}]
  %s8 = inlined_call_operand.vmem [shape: f32[16,1], index: 8, kind: input, shape index: {}]
  %s9 = inlined_call_operand.hbm [shape: f32[2,8,16], index: 9, kind: output, shape index: {}]
  %s10 = sld [smem:[#allocation0]]
  $region77: #{tpu_custom_call.1} parent=0
    _
  %s12 = ssub.s32 1, %s10
  %s13 = scalar_select 0, %s12, %s10
  $region1: #{tpu_custom_call.1} parent=0
    #allocation6 [shape = 'u8[4096]{0}', space=vmem, size = 0x1000, scoped, tag = 'input window, operand 0']
    #allocation7 [shape = 's32[2]{0}', space=sflag, size = 0x8, scoped, tag = 'scoped memory for tpu_custom_call.1']
    #allocation8 [shape = 's32[2]{0}', space=sflag, size = 0x8, scoped, tag = 'scoped memory for tpu_custom_call.1']
    #allocation9 [shape = 'u8[8192]{0}', space=vmem, size = 0x2000, scoped, tag = 'output window, operand 0']
    %14 = vsyncpa [#allocation7], 0
    %s15 = scalar_lea.sflag [#allocation7], 1
    %16 = vsyncpa %s15, 0
    %17 = vsyncpa [#allocation8], 0
    %s18 = scalar_lea.sflag [#allocation8], 1
    %19 = vsyncpa %s18, 0
    loop: start=0, step=1, limit=4
    $region2: #{tpu_custom_call.1} parent=1 // loop_pre_header
      _
    $region3: #{tpu_custom_call.1} parent=1 // loop_header
      %s21 = sphi 0, %s25
      %p22 = scmp.ge.s32.totalorder %s21, 4
      %s28 = sphi 0, %s40
      %s29 = sphi 0, %s36
      %s30 = sphi 0, %s28
      %s31 = sphi 0, %s29
      %s32 = sphi 0, %s30
      %s33 = sphi 0, %s31
      %s45 = sphi 0, %s47
      %s48 = sphi 0, %s45
      %s49 = sphi 0, %s48
      %s65 = sphi 0, %s49
      %s69 = sphi 0, %s69
      %s71 = sphi 0, %s69
      %s72 = sphi 0, %s71
      %s86 = sphi 0, %s72
      %s90 = sphi 0, %s90
      %s92 = sphi 0, %s90
      %s93 = sphi 0, %s92
      %s107 = sphi 0, %s93
      %s111 = sphi 0, %s111
      %s113 = sphi 0, %s111
      %s114 = sphi 0, %s113
      %s128 = sphi 0, %s114
      %s132 = sphi 0, %s132
      %s134 = sphi 0, %s132
      %s135 = sphi 0, %s134
      %s149 = sphi 0, %s135
      %s153 = sphi 0, %s153
      %s155 = sphi 0, %s153
      %s156 = sphi 0, %s155
      %s170 = sphi 0, %s156
      %s174 = sphi 0, %s174
      %s176 = sphi 0, %s174
      %s177 = sphi 0, %s176
      %s191 = sphi 0, %s177
      %s195 = sphi 0, %s195
      %s197 = sphi 0, %s195
      %s198 = sphi 0, %s197
      %s212 = sphi 0, %s198
      %s216 = sphi 0, %s216
      %s218 = sphi 0, %s216
      %s219 = sphi 0, %s218
      %s233 = sphi 0, %s219
      %s241 = sphi 0, %s243
      %s244 = sphi 0, %s241
      %s245 = sphi 0, %s244
      %s261 = sphi 0, %s245
    $region4: #{tpu_custom_call.1} parent=1 // loop_header_branch
      %24 = sbr.rel (%p22) target = $region8
    $region5: #{tpu_custom_call.1} parent=1 // loop_body
      %s26 = ssub.s32 %s21, 1
      %s27 = ssub.s32 %s21, 2
      %s34 = sadd.s32 1, %s29
      %p35 = scmp.ge.s32.totalorder %s34, 1
      %s36 = scalar_select %p35, 0, %s34
      %s37 = sadd.s32 1, %s28
      %s38 = scalar_select %p35, %s37, %s28
      %p39 = scmp.ge.s32.totalorder %s38, 2
      %s40 = scalar_select %p39, 0, %s38
      %s41 = ssub.s32 %s28, %s40
      %s42 = ssub.s32 %s29, %s36
      %s43 = sor.u32 %s41, %s42
      %p44 = scmp.eq.s32.totalorder %s43, 0
      %s46 = sadd.s32 %s45, 1
      %s47 = scalar_select %p44, %s45, %s46
      %p50 = pneg %p44
      %p51 = scmp.eq.s32.totalorder %s21, 1
      %p52 = por %p50, %p51
      %p53 = scmp.ne.s32.totalorder %s45, %s48
      %p54 = scmp.eq.s32.totalorder %s21, 0
      %p55 = por %p53, %p54
      %p56 = scmp.ne.s32.totalorder %s45, %s48
      %p57 = scmp.eq.s32.totalorder %s26, 1
      %p58 = por %p56, %p57
      %p59 = scmp.ne.s32.totalorder %s48, %s49
      %p60 = scmp.eq.s32.totalorder %s26, 0
      %p61 = por %p59, %p60
      %p62 = scmp.ne.s32.totalorder %s48, %s49
      %p63 = scmp.eq.s32.totalorder %s27, 1
      %p64 = por %p62, %p63
      %p66 = scmp.ne.s32.totalorder %s49, %s65
      %p67 = scmp.eq.s32.totalorder %s27, 0
      %p68 = por %p66, %p67
      %s70 = sadd.s32 %s69, 1
      %p73 = scmp.eq.s32.totalorder %s21, 1
      %p74 = scmp.ne.s32.totalorder %s69, %s71
      %p75 = scmp.eq.s32.totalorder %s21, 0
      %p76 = por %p74, %p75
      %p77 = scmp.ne.s32.totalorder %s69, %s71
      %p78 = scmp.eq.s32.totalorder %s26, 1
      %p79 = por %p77, %p78
      %p80 = scmp.ne.s32.totalorder %s71, %s72
      %p81 = scmp.eq.s32.totalorder %s26, 0
      %p82 = por %p80, %p81
      %p83 = scmp.ne.s32.totalorder %s71, %s72
      %p84 = scmp.eq.s32.totalorder %s27, 1
      %p85 = por %p83, %p84
      %p87 = scmp.ne.s32.totalorder %s72, %s86
      %p88 = scmp.eq.s32.totalorder %s27, 0
      %p89 = por %p87, %p88
      %s91 = sadd.s32 %s90, 1
      %p94 = scmp.eq.s32.totalorder %s21, 1
      %p95 = scmp.ne.s32.totalorder %s90, %s92
      %p96 = scmp.eq.s32.totalorder %s21, 0
      %p97 = por %p95, %p96
      %p98 = scmp.ne.s32.totalorder %s90, %s92
      %p99 = scmp.eq.s32.totalorder %s26, 1
      %p100 = por %p98, %p99
      %p101 = scmp.ne.s32.totalorder %s92, %s93
      %p102 = scmp.eq.s32.totalorder %s26, 0
      %p103 = por %p101, %p102
      %p104 = scmp.ne.s32.totalorder %s92, %s93
      %p105 = scmp.eq.s32.totalorder %s27, 1
      %p106 = por %p104, %p105
      %p108 = scmp.ne.s32.totalorder %s93, %s107
      %p109 = scmp.eq.s32.totalorder %s27, 0
      %p110 = por %p108, %p109
      %s112 = sadd.s32 %s111, 1
      %p115 = scmp.eq.s32.totalorder %s21, 1
      %p116 = scmp.ne.s32.totalorder %s111, %s113
      %p117 = scmp.eq.s32.totalorder %s21, 0
      %p118 = por %p116, %p117
      %p119 = scmp.ne.s32.totalorder %s111, %s113
      %p120 = scmp.eq.s32.totalorder %s26, 1
      %p121 = por %p119, %p120
      %p122 = scmp.ne.s32.totalorder %s113, %s114
      %p123 = scmp.eq.s32.totalorder %s26, 0
      %p124 = por %p122, %p123
      %p125 = scmp.ne.s32.totalorder %s113, %s114
      %p126 = scmp.eq.s32.totalorder %s27, 1
      %p127 = por %p125, %p126
      %p129 = scmp.ne.s32.totalorder %s114, %s128
      %p130 = scmp.eq.s32.totalorder %s27, 0
      %p131 = por %p129, %p130
      %s133 = sadd.s32 %s132, 1
      %p136 = scmp.eq.s32.totalorder %s21, 1
      %p137 = scmp.ne.s32.totalorder %s132, %s134
      %p138 = scmp.eq.s32.totalorder %s21, 0
      %p139 = por %p137, %p138
      %p140 = scmp.ne.s32.totalorder %s132, %s134
      %p141 = scmp.eq.s32.totalorder %s26, 1
      %p142 = por %p140, %p141
      %p143 = scmp.ne.s32.totalorder %s134, %s135
      %p144 = scmp.eq.s32.totalorder %s26, 0
      %p145 = por %p143, %p144
      %p146 = scmp.ne.s32.totalorder %s134, %s135
      %p147 = scmp.eq.s32.totalorder %s27, 1
      %p148 = por %p146, %p147
      %p150 = scmp.ne.s32.totalorder %s135, %s149
      %p151 = scmp.eq.s32.totalorder %s27, 0
      %p152 = por %p150, %p151
      %s154 = sadd.s32 %s153, 1
      %p157 = scmp.eq.s32.totalorder %s21, 1
      %p158 = scmp.ne.s32.totalorder %s153, %s155
      %p159 = scmp.eq.s32.totalorder %s21, 0
      %p160 = por %p158, %p159
      %p161 = scmp.ne.s32.totalorder %s153, %s155
      %p162 = scmp.eq.s32.totalorder %s26, 1
      %p163 = por %p161, %p162
      %p164 = scmp.ne.s32.totalorder %s155, %s156
      %p165 = scmp.eq.s32.totalorder %s26, 0
      %p166 = por %p164, %p165
      %p167 = scmp.ne.s32.totalorder %s155, %s156
      %p168 = scmp.eq.s32.totalorder %s27, 1
      %p169 = por %p167, %p168
      %p171 = scmp.ne.s32.totalorder %s156, %s170
      %p172 = scmp.eq.s32.totalorder %s27, 0
      %p173 = por %p171, %p172
      %s175 = sadd.s32 %s174, 1
      %p178 = scmp.eq.s32.totalorder %s21, 1
      %p179 = scmp.ne.s32.totalorder %s174, %s176
      %p180 = scmp.eq.s32.totalorder %s21, 0
      %p181 = por %p179, %p180
      %p182 = scmp.ne.s32.totalorder %s174, %s176
      %p183 = scmp.eq.s32.totalorder %s26, 1
      %p184 = por %p182, %p183
      %p185 = scmp.ne.s32.totalorder %s176, %s177
      %p186 = scmp.eq.s32.totalorder %s26, 0
      %p187 = por %p185, %p186
      %p188 = scmp.ne.s32.totalorder %s176, %s177
      %p189 = scmp.eq.s32.totalorder %s27, 1
      %p190 = por %p188, %p189
      %p192 = scmp.ne.s32.totalorder %s177, %s191
      %p193 = scmp.eq.s32.totalorder %s27, 0
      %p194 = por %p192, %p193
      %s196 = sadd.s32 %s195, 1
      %p199 = scmp.eq.s32.totalorder %s21, 1
      %p200 = scmp.ne.s32.totalorder %s195, %s197
      %p201 = scmp.eq.s32.totalorder %s21, 0
      %p202 = por %p200, %p201
      %p203 = scmp.ne.s32.totalorder %s195, %s197
      %p204 = scmp.eq.s32.totalorder %s26, 1
      %p205 = por %p203, %p204
      %p206 = scmp.ne.s32.totalorder %s197, %s198
      %p207 = scmp.eq.s32.totalorder %s26, 0
      %p208 = por %p206, %p207
      %p209 = scmp.ne.s32.totalorder %s197, %s198
      %p210 = scmp.eq.s32.totalorder %s27, 1
      %p211 = por %p209, %p210
      %p213 = scmp.ne.s32.totalorder %s198, %s212
      %p214 = scmp.eq.s32.totalorder %s27, 0
      %p215 = por %p213, %p214
      %s217 = sadd.s32 %s216, 1
      %p220 = scmp.eq.s32.totalorder %s21, 1
      %p221 = scmp.ne.s32.totalorder %s216, %s218
      %p222 = scmp.eq.s32.totalorder %s21, 0
      %p223 = por %p221, %p222
      %p224 = scmp.ne.s32.totalorder %s216, %s218
      %p225 = scmp.eq.s32.totalorder %s26, 1
      %p226 = por %p224, %p225
      %p227 = scmp.ne.s32.totalorder %s218, %s219
      %p228 = scmp.eq.s32.totalorder %s26, 0
      %p229 = por %p227, %p228
      %p230 = scmp.ne.s32.totalorder %s218, %s219
      %p231 = scmp.eq.s32.totalorder %s27, 1
      %p232 = por %p230, %p231
      %p234 = scmp.ne.s32.totalorder %s219, %s233
      %p235 = scmp.eq.s32.totalorder %s27, 0
      %p236 = por %p234, %p235
      %s237 = ssub.s32 %s28, %s40
      %s238 = ssub.s32 %s29, %s36
      %s239 = sor.u32 %s237, %s238
      %p240 = scmp.eq.s32.totalorder %s239, 0
      %s242 = sadd.s32 %s241, 1
      %s243 = scalar_select %p240, %s241, %s242
      %p246 = pneg %p240
      %p247 = scmp.eq.s32.totalorder %s21, 1
      %p248 = por %p246, %p247
      %p249 = scmp.ne.s32.totalorder %s241, %s244
      %p250 = scmp.eq.s32.totalorder %s21, 0
      %p251 = por %p249, %p250
      %p252 = scmp.ne.s32.totalorder %s241, %s244
      %p253 = scmp.eq.s32.totalorder %s26, 1
      %p254 = por %p252, %p253
      %p255 = scmp.ne.s32.totalorder %s244, %s245
      %p256 = scmp.eq.s32.totalorder %s26, 0
      %p257 = por %p255, %p256
      %p258 = scmp.ne.s32.totalorder %s244, %s245
      %p259 = scmp.eq.s32.totalorder %s27, 1
      %p260 = por %p258, %p259
      %p262 = scmp.ne.s32.totalorder %s245, %s261
      %p263 = scmp.eq.s32.totalorder %s27, 0
      %p264 = por %p262, %p263
      %p265 = scmp.le.s32.totalorder 1, %s21
      %p266 = scmp.lt.s32.totalorder %s21, 3
      %p267 = pnand %p265, %p266
      %p268 = pneg %p267
      // Predicated region
      $region9: #{tpu_custom_call.1} parent=5 // pred_check
        _
      $region10: #{tpu_custom_call.1} parent=5 // pred_check_branch
        %270 = sbr.rel (%p267) target = $region12
      $region11: #{tpu_custom_call.1} parent=5 // pred_region
        %s271 = ssub.s32 %s21, 1
        // Predicated region
        $region13: #{tpu_custom_call.1} parent=11 // pred_check
          %p272 = pneg %p82
        $region14: #{tpu_custom_call.1} parent=11 // pred_check_branch
          %274 = sbr.rel (%p272) target = $region16
        $region15: #{tpu_custom_call.1} parent=11 // pred_region
          _
        $region16: #{tpu_custom_call.1} parent=11 // pred_fallthru
          _
        // Predicated region
        $region17: #{tpu_custom_call.1} parent=11 // pred_check
          %p275 = pneg %p103
        $region18: #{tpu_custom_call.1} parent=11 // pred_check_branch
          %277 = sbr.rel (%p275) target = $region20
        $region19: #{tpu_custom_call.1} parent=11 // pred_region
          _
        $region20: #{tpu_custom_call.1} parent=11 // pred_fallthru
          _
        // Predicated region
        $region21: #{tpu_custom_call.1} parent=11 // pred_check
          %p278 = pneg %p124
        $region22: #{tpu_custom_call.1} parent=11 // pred_check_branch
          %280 = sbr.rel (%p278) target = $region24
        $region23: #{tpu_custom_call.1} parent=11 // pred_region
          _
        $region24: #{tpu_custom_call.1} parent=11 // pred_fallthru
          _
        // Predicated region
        $region25: #{tpu_custom_call.1} parent=11 // pred_check
          %p281 = pneg %p145
        $region26: #{tpu_custom_call.1} parent=11 // pred_check_branch
          %283 = sbr.rel (%p281) target = $region28
        $region27: #{tpu_custom_call.1} parent=11 // pred_region
          _
        $region28: #{tpu_custom_call.1} parent=11 // pred_fallthru
          _
        // Predicated region
        $region29: #{tpu_custom_call.1} parent=11 // pred_check
          %p284 = pneg %p166
        $region30: #{tpu_custom_call.1} parent=11 // pred_check_branch
          %286 = sbr.rel (%p284) target = $region32
        $region31: #{tpu_custom_call.1} parent=11 // pred_region
          _
        $region32: #{tpu_custom_call.1} parent=11 // pred_fallthru
          _
        // Predicated region
        $region33: #{tpu_custom_call.1} parent=11 // pred_check
          %p287 = pneg %p187
        $region34: #{tpu_custom_call.1} parent=11 // pred_check_branch
          %289 = sbr.rel (%p287) target = $region36
        $region35: #{tpu_custom_call.1} parent=11 // pred_region
          _
        $region36: #{tpu_custom_call.1} parent=11 // pred_fallthru
          _
        // Predicated region
        $region37: #{tpu_custom_call.1} parent=11 // pred_check
          %p290 = pneg %p208
        $region38: #{tpu_custom_call.1} parent=11 // pred_check_branch
          %292 = sbr.rel (%p290) target = $region40
        $region39: #{tpu_custom_call.1} parent=11 // pred_region
          _
        $region40: #{tpu_custom_call.1} parent=11 // pred_fallthru
          _
        // Predicated region
        $region41: #{tpu_custom_call.1} parent=11 // pred_check
          %p293 = pneg %p229
        $region42: #{tpu_custom_call.1} parent=11 // pred_check_branch
          %295 = sbr.rel (%p293) target = $region44
        $region43: #{tpu_custom_call.1} parent=11 // pred_region
          _
        $region44: #{tpu_custom_call.1} parent=11 // pred_fallthru
          _
      $region12: #{tpu_custom_call.1} parent=5 // pred_fallthru
        _
      %p296 = scmp.lt.s32.totalorder %s21, 2
      // Predicated region
      $region45: #{tpu_custom_call.1} parent=5 // pred_check
        %p297 = pneg %p296
      $region46: #{tpu_custom_call.1} parent=5 // pred_check_branch
        %299 = sbr.rel (%p297) target = $region48
      $region47: #{tpu_custom_call.1} parent=5 // pred_region
        // Predicated region
        $region49: #{tpu_custom_call.1} parent=47 // pred_check
          %p300 = pneg %p55
        $region50: #{tpu_custom_call.1} parent=47 // pred_check_branch
          %302 = sbr.rel (%p300) target = $region52
        $region51: #{tpu_custom_call.1} parent=47 // pred_region
          %s303 = sand.u32 %s45, 1
          %s304 = scalar_lea.sflag [#allocation7], %s303
          %s305 = sand.u32 %s45, 1
          %s306 = smul.addr %s305, 4
          %s307 = scalar_lea.vmem [#allocation6], %s306
          %s309 = ssub.s32 64, 64
          %310 = vsyncadd %s304, %s309
          %s311 = sadd.s32 %s29, %s28
          %s312 = smul.addr %s311, 64
          %s313 = scalar_lea.hbm %s0, %s312
          %s315 = sshll.u32 %s307, 4
          %s316 = int_to_ptr.vmem [resolvable:$true] %s315
          %318 = dma.hbm_to_vmem [thread:$0]  %s313, 64, %s316, %s304
        $region52: #{tpu_custom_call.1} parent=47 // pred_fallthru
          _
      $region48: #{tpu_custom_call.1} parent=5 // pred_fallthru
        _
      %p319 = scmp.le.s32.totalorder 1, %s21
      %p320 = scmp.lt.s32.totalorder %s21, 3
      %p321 = pnand %p319, %p320
      %p322 = pneg %p321
      // Predicated region
      $region53: #{tpu_custom_call.1} parent=5 // pred_check
        _
      $region54: #{tpu_custom_call.1} parent=5 // pred_check_branch
        %324 = sbr.rel (%p321) target = $region56
      $region55: #{tpu_custom_call.1} parent=5 // pred_region
        %s325 = ssub.s32 %s21, 1
        %s326 = sand.u32 %s48, 1
        %s327 = scalar_lea.sflag [#allocation7], %s326
        %s328 = sand.u32 %s48, 1
        %s329 = smul.addr %s328, 4
        %s330 = scalar_lea.vmem [#allocation6], %s329
        // Predicated region
        $region57: #{tpu_custom_call.1} parent=55 // pred_check
          %p331 = pneg %p61
        $region58: #{tpu_custom_call.1} parent=55 // pred_check_branch
          %333 = sbr.rel (%p331) target = $region60
        $region59: #{tpu_custom_call.1} parent=55 // pred_region
          %334 = dma.done %s327, 64
        $region60: #{tpu_custom_call.1} parent=55 // pred_fallthru
          _
        %s335 = sand.u32 %s48, 1
        %s336 = scalar_lea.sflag [#allocation7], %s335
        %s337 = sand.u32 %s48, 1
        %s338 = smul.addr %s337, 4
        %s339 = scalar_lea.vmem [#allocation6], %s338
        %p340 = pneg %p61
        %p341 = pneg %p58
        %p342 = pneg %p82
        %p343 = pneg %p79
        %p344 = pneg %p103
        %p345 = pneg %p100
        %p346 = pneg %p124
        %p347 = pneg %p121
        %p348 = pneg %p145
        %p349 = pneg %p142
        %p350 = pneg %p166
        %p351 = pneg %p163
        %p352 = pneg %p187
        %p353 = pneg %p184
        %p354 = pneg %p208
        %p355 = pneg %p205
        %p356 = pneg %p229
        %p357 = pneg %p226
        %p358 = pneg %p257
        %p359 = pneg %p254
        %s360 = sand.u32 %s244, 1
        %s361 = scalar_lea.sflag [#allocation8], %s360
        %s362 = sand.u32 %s244, 1
        %s363 = smul.addr %s362, 8
        %s364 = scalar_lea.vmem [#allocation9], %s363
        %p365 = scmp.eq.s32.totalorder %s31, 0
        // Predicated region
        $region61: #{tpu_custom_call.1} parent=55 // pred_check
          %p366 = pneg %p365
        $region62: #{tpu_custom_call.1} parent=55 // pred_check_branch
          %368 = sbr.rel (%p366) target = $region64
        $region63: #{tpu_custom_call.1} parent=55 // pred_region
          %vm369 = vcmask 7168
          %370 = vst.msk [vmem:[#allocation2] sm:$0xff] %vm369, 0.0
          %371 = vst.msk [vmem:[#allocation2 + $0x8] sm:$0xff] %vm369, 0.0
          %372 = vst.msk [vmem:[#allocation3] sm:$0xff] %vm369, 0.0
          %373 = vst.msk [vmem:[#allocation3 + $0x8] sm:$0xff] %vm369, 0.0
          %vm374 = vcmask 15360
          %375 = vst.msk [vmem:[#allocation4] sm:$0xff] %vm374, 0.0
          %376 = vst.msk [vmem:[#allocation4 + $0x8] sm:$0xff] %vm374, 0.0
          %377 = vst.msk [vmem:[#allocation5] sm:$0xff] %vm374, 0.0
          %378 = vst.msk [vmem:[#allocation5 + $0x8] sm:$0xff] %vm374, 0.0
        $region64: #{tpu_custom_call.1} parent=55 // pred_fallthru
          _
        %v379 = vld [vmem:[%s330] sm:$0xf]
        %vm380 = vcmask 1043456
        %v381 = vsel %vm380, %v379, 0.0
        %v382 = vld [vmem:[%s1] sm:$0xff]
        %v383 = vld [vmem:[%s1 + $0x8] sm:$0xff]
        %v384 = vld [vmem:[%s1 + $0x10] sm:$0xff]
        %v385 = vld [vmem:[%s1 + $0x18] sm:$0xff]
        %v386 = vld [vmem:[%s2] sm:$0xff]
        %v387 = vld [vmem:[%s2 + $0x8] sm:$0xff]
        %v388 = vld [vmem:[%s2 + $0x10] sm:$0xff]
        %v389 = vld [vmem:[%s2 + $0x18] sm:$0xff]
        %v390 = vld [vmem:[%s3] sm:$0xff]
        %v391 = vld [vmem:[%s3 + $0x8] sm:$0xff]
        %v392 = vld [vmem:[%s4] sm:$0xff]
        %v393 = vld [vmem:[%s4 + $0x8] sm:$0xff]
        %v394 = vld [vmem:[#allocation2] sm:$0xff]
        %v395 = vld [vmem:[#allocation2 + $0x8] sm:$0xff]
        %v396 = vld [vmem:[#allocation3] sm:$0xff]
        %v397 = vld [vmem:[#allocation3 + $0x8] sm:$0xff]
        %400 = vrot.lane.b32.xlu0 %v381, 1
        %v401 = vpop.permute.xlu0 %400
        %402 = vrot.lane.b32.xlu0 0.0, 1
        %v403 = vpop.permute.xlu0 %402
        %vm406 = vcmask 7168
        %v407 = vsel %vm406, %v394, %v401
        %v408 = vsel %vm406, %v395, %v403
        %410 = vset.pattern.permute.xlu0 0
        %411 = vperm.xlu0 %410, %v386
        %v412 = vpop.permute.xlu0 %411
        %415 = vset.pattern.permute.xlu0 0
        %416 = vperm.xlu0 %415, %v387
        %v417 = vpop.permute.xlu0 %416
        %420 = vset.pattern.permute.xlu0 0
        %421 = vperm.xlu0 %420, %v388
        %v422 = vpop.permute.xlu0 %421
        %425 = vset.pattern.permute.xlu0 0
        %426 = vperm.xlu0 %425, %v389
        %v427 = vpop.permute.xlu0 %426
        %vm429 = vcmask 261120
        %v431 = vsel %vm429, %v382, 0
        %v434 = vsel %vm429, %v383, 0
        %v437 = vsel %vm429, %v384, 0
        %v440 = vsel %vm429, %v385, 0
        %442 = vmatprep.subr.mxu0 0.0
        %v443 = vand.u32 %v407, 4294901760
        %444 = vmatpush1.msra.mxu0 %v443
        %445 = vmatprep.subr.mxu0 0.0
        %v446 = vand.u32 %v408, 4294901760
        %447 = vmatpush1.msra.mxu0 %v446
        %448 = vmatprep.subr.mxu0 0.0
        %v449 = vand.u32 %v381, 4294901760
        %450 = vmatpush1.msra.mxu0 %v449
        %451 = vmatprep.subr.mxu0 0.0
        %452 = vmatpush1.msra.mxu0 0.0
        %453 = vmatprep.subr.mxu0 0.0
        %454 = vmatpush1.msra.mxu0 0.0
        %455 = vmatprep.subr.mxu0 0.0
        %456 = vmatpush1.msra.mxu0 0.0
        %457 = vmatprep.subr.mxu0 0.0
        %458 = vmatpush1.msra.mxu0 0.0
        %459 = vmatprep.subr.mxu0 0.0
        %460 = vmatpush1.msra.mxu0 0.0
        %461 = vmatprep.subr.mxu0 0.0
        %462 = vmatpush1.msra.mxu0 0.0
        %463 = vmatprep.subr.mxu0 0.0
        %464 = vmatpush1.msra.mxu0 0.0
        %465 = vmatprep.subr.mxu0 0.0
        %466 = vmatpush1.msra.mxu0 0.0
        %467 = vmatprep.subr.mxu0 0.0
        %468 = vmatpush1.msra.mxu0 0.0
        %469 = vmatprep.subr.mxu0 0.0
        %470 = vmatpush1.msra.mxu0 0.0
        %471 = vmatprep.subr.mxu0 0.0
        %472 = vmatpush1.msra.mxu0 0.0
        %473 = vmatprep.subr.mxu0 0.0
        %474 = vmatpush1.msra.mxu0 0.0
        %475 = vmatprep.subr.mxu0 0.0
        %476 = vmatpush1.msra.mxu0 0.0
        %477 = vmatprep.subr.mxu0 0.0
        %478 = vmatpush1.msra.mxu0 0.0
        %479 = vmatprep.subr.mxu0 0.0
        %480 = vmatpush1.msra.mxu0 0.0
        %481 = vmatprep.subr.mxu0 0.0
        %482 = vmatpush1.msra.mxu0 0.0
        %483 = vmatprep.subr.mxu0 0.0
        %484 = vmatpush1.msra.mxu0 0.0
        %485 = vmatprep.subr.mxu0 0.0
        %486 = vmatpush1.msra.mxu0 0.0
        %487 = vmatprep.subr.mxu0 0.0
        %488 = vmatpush1.msra.mxu0 0.0
        %489 = vmatprep.subr.mxu0 0.0
        %490 = vmatpush1.msra.mxu0 0.0
        %491 = vmatprep.subr.mxu0 0.0
        %492 = vmatpush1.msra.mxu0 0.0
        %493 = vmatprep.subr.mxu0 0.0
        %494 = vmatpush1.msra.mxu0 0.0
        %495 = vmatprep.subr.mxu0 0.0
        %496 = vmatpush1.msra.mxu0 0.0
        %497 = vmatprep.subr.mxu0 0.0
        %498 = vmatpush1.msra.mxu0 0.0
        %499 = vmatprep.subr.mxu0 0.0
        %500 = vmatpush1.msra.mxu0 0.0
        %501 = vmatprep.subr.mxu0 0.0
        %502 = vmatpush1.msra.mxu0 0.0
        %503 = vmatprep.subr.mxu0 0.0
        %504 = vmatpush1.msra.mxu0 0.0
        %505 = vmatprep.subr.mxu0 0.0
        %506 = vmatpush1.msra.mxu0 0.0
        %507 = vmatprep.subr.mxu0 0.0
        %508 = vmatpush1.msra.mxu0 0.0
        %509 = vmatprep.mubr.f32.mxu0 0.0
        %v510 = vand.u32 %v431, 4294901760
        %v511 = vsub.f32 %v431, %v510
        %v512 = vand.u32 %v511, 4294901760
        %v513 = vsub.f32 %v511, %v512
        %v514 = vand.u32 %v513, 4294901760
        %515 = vmatmul.mubr.f32.gmra.mrb[0].mxu0 %v514
        %v516 = vpop.f32.mrb[0].mxu0
        %v517 = vadd.f32 %v412, %v516
        %v518 = vpop.f32.mrb[0].mxu0
        %519 = vmatprep.mubr.f32.mxu0 0.0
        %v520 = vand.u32 %v434, 4294901760
        %v521 = vsub.f32 %v434, %v520
        %v522 = vand.u32 %v521, 4294901760
        %v523 = vsub.f32 %v521, %v522
        %v524 = vand.u32 %v523, 4294901760
        %525 = vmatmul.mubr.f32.gmra.mrb[0].mxu0 %v524
        %v526 = vpop.f32.mrb[0].mxu0
        %v527 = vadd.f32 %v417, %v526
        %v528 = vpop.f32.mrb[0].mxu0
        %529 = vmatprep.mubr.f32.mxu0 0.0
        %v530 = vand.u32 %v437, 4294901760
        %v531 = vsub.f32 %v437, %v530
        %v532 = vand.u32 %v531, 4294901760
        %v533 = vsub.f32 %v531, %v532
        %v534 = vand.u32 %v533, 4294901760
        %535 = vmatmul.mubr.f32.gmra.mrb[0].mxu0 %v534
        %v536 = vpop.f32.mrb[0].mxu0
        %v537 = vadd.f32 %v422, %v536
        %v538 = vpop.f32.mrb[0].mxu0
        %539 = vmatprep.mubr.f32.mxu0 0.0
        %v540 = vand.u32 %v440, 4294901760
        %v541 = vsub.f32 %v440, %v540
        %v542 = vand.u32 %v541, 4294901760
        %v543 = vsub.f32 %v541, %v542
        %v544 = vand.u32 %v543, 4294901760
        %545 = vmatmul.mubr.f32.gmra.mrb[0].mxu0 %v544
        %v546 = vpop.f32.mrb[0].mxu0
        %v547 = vadd.f32 %v427, %v546
        %v548 = vpop.f32.mrb[0].mxu0
        %549 = vdwg.mxu0
        %550 = vmatprep.subr.mxu0 0.0
        %v551 = vand.u32 %v407, 4294901760
        %v552 = vsub.f32 %v407, %v551
        %v553 = vand.u32 %v552, 4294901760
        %v554 = vsub.f32 %v552, %v553
        %v555 = vand.u32 %v554, 4294901760
        %556 = vmatpush1.msra.mxu0 %v555
        %557 = vmatprep.subr.mxu0 0.0
        %v558 = vand.u32 %v408, 4294901760
        %v559 = vsub.f32 %v408, %v558
        %v560 = vand.u32 %v559, 4294901760
        %v561 = vsub.f32 %v559, %v560
        %v562 = vand.u32 %v561, 4294901760
        %563 = vmatpush1.msra.mxu0 %v562
        %564 = vmatprep.subr.mxu0 0.0
        %v565 = vand.u32 %v381, 4294901760
        %v566 = vsub.f32 %v381, %v565
        %v567 = vand.u32 %v566, 4294901760
        %v568 = vsub.f32 %v566, %v567
        %v569 = vand.u32 %v568, 4294901760
        %570 = vmatpush1.msra.mxu0 %v569
        %571 = vmatprep.subr.mxu0 0.0
        %572 = vmatpush1.msra.mxu0 0.0
        %573 = vmatprep.subr.mxu0 0.0
        %574 = vmatpush1.msra.mxu0 0.0
        %575 = vmatprep.subr.mxu0 0.0
        %576 = vmatpush1.msra.mxu0 0.0
        %577 = vmatprep.subr.mxu0 0.0
        %578 = vmatpush1.msra.mxu0 0.0
        %579 = vmatprep.subr.mxu0 0.0
        %580 = vmatpush1.msra.mxu0 0.0
        %581 = vmatprep.subr.mxu0 0.0
        %582 = vmatpush1.msra.mxu0 0.0
        %583 = vmatprep.subr.mxu0 0.0
        %584 = vmatpush1.msra.mxu0 0.0
        %585 = vmatprep.subr.mxu0 0.0
        %586 = vmatpush1.msra.mxu0 0.0
        %587 = vmatprep.subr.mxu0 0.0
        %588 = vmatpush1.msra.mxu0 0.0
        %589 = vmatprep.subr.mxu0 0.0
        %590 = vmatpush1.msra.mxu0 0.0
        %591 = vmatprep.subr.mxu0 0.0
        %592 = vmatpush1.msra.mxu0 0.0
        %593 = vmatprep.subr.mxu0 0.0
        %594 = vmatpush1.msra.mxu0 0.0
        %595 = vmatprep.subr.mxu0 0.0
        %596 = vmatpush1.msra.mxu0 0.0
        %597 = vmatprep.subr.mxu0 0.0
        %598 = vmatpush1.msra.mxu0 0.0
        %599 = vmatprep.subr.mxu0 0.0
        %600 = vmatpush1.msra.mxu0 0.0
        %601 = vmatprep.subr.mxu0 0.0
        %602 = vmatpush1.msra.mxu0 0.0
        %603 = vmatprep.subr.mxu0 0.0
        %604 = vmatpush1.msra.mxu0 0.0
        %605 = vmatprep.subr.mxu0 0.0
        %606 = vmatpush1.msra.mxu0 0.0
        %607 = vmatprep.subr.mxu0 0.0
        %608 = vmatpush1.msra.mxu0 0.0
        %609 = vmatprep.subr.mxu0 0.0
        %610 = vmatpush1.msra.mxu0 0.0
        %611 = vmatprep.subr.mxu0 0.0
        %612 = vmatpush1.msra.mxu0 0.0
        %613 = vmatprep.subr.mxu0 0.0
        %614 = vmatpush1.msra.mxu0 0.0
        %615 = vmatprep.subr.mxu0 0.0
        %616 = vmatpush1.msra.mxu0 0.0
        %617 = vmatprep.subr.mxu0 0.0
        %618 = vmatpush1.msra.mxu0 0.0
        %619 = vmatprep.subr.mxu0 0.0
        %620 = vmatpush1.msra.mxu0 0.0
        %621 = vmatprep.subr.mxu0 0.0
        %622 = vmatpush1.msra.mxu0 0.0
        %623 = vmatprep.subr.mxu0 0.0
        %624 = vmatpush1.msra.mxu0 0.0
        %625 = vmatprep.subr.mxu0 0.0
        %626 = vmatpush1.msra.mxu0 0.0
        %627 = vmatprep.subr.mxu0 0.0
        %628 = vmatpush1.msra.mxu0 0.0
        %629 = vmatprep.mubr.f32.mxu0 0.0
        %v630 = vand.u32 %v431, 4294901760
        %631 = vmatmul.mubr.f32.gmra.mrb[0].mxu0 %v630
        %v632 = vpop.f32.mrb[0].mxu0
        %v633 = vadd.f32 %v517, %v632
        %v634 = vpop.f32.mrb[0].mxu0
        %635 = vmatprep.mubr.f32.mxu0 0.0
        %v636 = vand.u32 %v434, 4294901760
        %637 = vmatmul.mubr.f32.gmra.mrb[0].mxu0 %v636
        %v638 = vpop.f32.mrb[0].mxu0
        %v639 = vadd.f32 %v527, %v638
        %v640 = vpop.f32.mrb[0].mxu0
        %641 = vmatprep.mubr.f32.mxu0 0.0
        %v642 = vand.u32 %v437, 4294901760
        %643 = vmatmul.mubr.f32.gmra.mrb[0].mxu0 %v642
        %v644 = vpop.f32.mrb[0].mxu0
        %v645 = vadd.f32 %v537, %v644
        %v646 = vpop.f32.mrb[0].mxu0
        %647 = vmatprep.mubr.f32.mxu0 0.0
        %v648 = vand.u32 %v440, 4294901760
        %649 = vmatmul.mubr.f32.gmra.mrb[0].mxu0 %v648
        %v650 = vpop.f32.mrb[0].mxu0
        %v651 = vadd.f32 %v547, %v650
        %v652 = vpop.f32.mrb[0].mxu0
        %653 = vdwg.mxu0
        %654 = vmatprep.subr.mxu0 0.0
        %v655 = vand.u32 %v407, 4294901760
        %v656 = vsub.f32 %v407, %v655
        %657 = vmatpush1.msra.mxu0 %v656
        %658 = vmatprep.subr.mxu0 0.0
        %v659 = vand.u32 %v408, 4294901760
        %v660 = vsub.f32 %v408, %v659
        %661 = vmatpush1.msra.mxu0 %v660
        %662 = vmatprep.subr.mxu0 0.0
        %v663 = vand.u32 %v381, 4294901760
        %v664 = vsub.f32 %v381, %v663
        %665 = vmatpush1.msra.mxu0 %v664
        %666 = vmatprep.subr.mxu0 0.0
        %667 = vmatpush1.msra.mxu0 0.0
        %668 = vmatprep.subr.mxu0 0.0
        %669 = vmatpush1.msra.mxu0 0.0
        %670 = vmatprep.subr.mxu0 0.0
        %671 = vmatpush1.msra.mxu0 0.0
        %672 = vmatprep.subr.mxu0 0.0
        %673 = vmatpush1.msra.mxu0 0.0
        %674 = vmatprep.subr.mxu0 0.0
        %675 = vmatpush1.msra.mxu0 0.0
        %676 = vmatprep.subr.mxu0 0.0
        %677 = vmatpush1.msra.mxu0 0.0
        %678 = vmatprep.subr.mxu0 0.0
        %679 = vmatpush1.msra.mxu0 0.0
        %680 = vmatprep.subr.mxu0 0.0
        %681 = vmatpush1.msra.mxu0 0.0
        %682 = vmatprep.subr.mxu0 0.0
        %683 = vmatpush1.msra.mxu0 0.0
        %684 = vmatprep.subr.mxu0 0.0
        %685 = vmatpush1.msra.mxu0 0.0
        %686 = vmatprep.subr.mxu0 0.0
        %687 = vmatpush1.msra.mxu0 0.0
        %688 = vmatprep.subr.mxu0 0.0
        %689 = vmatpush1.msra.mxu0 0.0
        %690 = vmatprep.subr.mxu0 0.0
        %691 = vmatpush1.msra.mxu0 0.0
        %692 = vmatprep.subr.mxu0 0.0
        %693 = vmatpush1.msra.mxu0 0.0
        %694 = vmatprep.subr.mxu0 0.0
        %695 = vmatpush1.msra.mxu0 0.0
        %696 = vmatprep.subr.mxu0 0.0
        %697 = vmatpush1.msra.mxu0 0.0
        %698 = vmatprep.subr.mxu0 0.0
        %699 = vmatpush1.msra.mxu0 0.0
        %700 = vmatprep.subr.mxu0 0.0
        %701 = vmatpush1.msra.mxu0 0.0
        %702 = vmatprep.subr.mxu0 0.0
        %703 = vmatpush1.msra.mxu0 0.0
        %704 = vmatprep.subr.mxu0 0.0
        %705 = vmatpush1.msra.mxu0 0.0
        %706 = vmatprep.subr.mxu0 0.0
        %707 = vmatpush1.msra.mxu0 0.0
        %708 = vmatprep.subr.mxu0 0.0
        %709 = vmatpush1.msra.mxu0 0.0
        %710 = vmatprep.subr.mxu0 0.0
        %711 = vmatpush1.msra.mxu0 0.0
        %712 = vmatprep.subr.mxu0 0.0
        %713 = vmatpush1.msra.mxu0 0.0
        %714 = vmatprep.subr.mxu0 0.0
        %715 = vmatpush1.msra.mxu0 0.0
        %716 = vmatprep.subr.mxu0 0.0
        %717 = vmatpush1.msra.mxu0 0.0
        %718 = vmatprep.subr.mxu0 0.0
        %719 = vmatpush1.msra.mxu0 0.0
        %720 = vmatprep.subr.mxu0 0.0
        %721 = vmatpush1.msra.mxu0 0.0
        %722 = vmatprep.subr.mxu0 0.0
        %723 = vmatpush1.msra.mxu0 0.0
        %724 = vmatprep.mubr.f32.mxu0 0.0
        %v725 = vand.u32 %v431, 4294901760
        %v726 = vsub.f32 %v431, %v725
        %727 = vmatmul.mubr.f32.gmra.mrb[0].mxu0 %v726
        %v728 = vpop.f32.mrb[0].mxu0
        %v729 = vadd.f32 %v633, %v728
        %v730 = vpop.f32.mrb[0].mxu0
        %731 = vmatprep.mubr.f32.mxu0 0.0
        %v732 = vand.u32 %v434, 4294901760
        %v733 = vsub.f32 %v434, %v732
        %734 = vmatmul.mubr.f32.gmra.mrb[0].mxu0 %v733
        %v735 = vpop.f32.mrb[0].mxu0
        %v736 = vadd.f32 %v639, %v735
        %v737 = vpop.f32.mrb[0].mxu0
        %738 = vmatprep.mubr.f32.mxu0 0.0
        %v739 = vand.u32 %v437, 4294901760
        %v740 = vsub.f32 %v437, %v739
        %741 = vmatmul.mubr.f32.gmra.mrb[0].mxu0 %v740
        %v742 = vpop.f32.mrb[0].mxu0
        %v743 = vadd.f32 %v645, %v742
        %v744 = vpop.f32.mrb[0].mxu0
        %745 = vmatprep.mubr.f32.mxu0 0.0
        %v746 = vand.u32 %v440, 4294901760
        %v747 = vsub.f32 %v440, %v746
        %748 = vmatmul.mubr.f32.gmra.mrb[0].mxu0 %v747
        %v749 = vpop.f32.mrb[0].mxu0
        %v750 = vadd.f32 %v651, %v749
        %v751 = vpop.f32.mrb[0].mxu0
        %752 = vdwg.mxu0
        %753 = vmatprep.subr.mxu0 0.0
        %v754 = vand.u32 %v407, 4294901760
        %755 = vmatpush1.msra.mxu0 %v754
        %756 = vmatprep.subr.mxu0 0.0
        %v757 = vand.u32 %v408, 4294901760
        %758 = vmatpush1.msra.mxu0 %v757
        %759 = vmatprep.subr.mxu0 0.0
        %v760 = vand.u32 %v381, 4294901760
        %761 = vmatpush1.msra.mxu0 %v760
        %762 = vmatprep.subr.mxu0 0.0
        %763 = vmatpush1.msra.mxu0 0.0
        %764 = vmatprep.subr.mxu0 0.0
        %765 = vmatpush1.msra.mxu0 0.0
        %766 = vmatprep.subr.mxu0 0.0
        %767 = vmatpush1.msra.mxu0 0.0
        %768 = vmatprep.subr.mxu0 0.0
        %769 = vmatpush1.msra.mxu0 0.0
        %770 = vmatprep.subr.mxu0 0.0
        %771 = vmatpush1.msra.mxu0 0.0
        %772 = vmatprep.subr.mxu0 0.0
        %773 = vmatpush1.msra.mxu0 0.0
        %774 = vmatprep.subr.mxu0 0.0
        %775 = vmatpush1.msra.mxu0 0.0
        %776 = vmatprep.subr.mxu0 0.0
        %777 = vmatpush1.msra.mxu0 0.0
        %778 = vmatprep.subr.mxu0 0.0
        %779 = vmatpush1.msra.mxu0 0.0
        %780 = vmatprep.subr.mxu0 0.0
        %781 = vmatpush1.msra.mxu0 0.0
        %782 = vmatprep.subr.mxu0 0.0
        %783 = vmatpush1.msra.mxu0 0.0
        %784 = vmatprep.subr.mxu0 0.0
        %785 = vmatpush1.msra.mxu0 0.0
        %786 = vmatprep.subr.mxu0 0.0
        %787 = vmatpush1.msra.mxu0 0.0
        %788 = vmatprep.subr.mxu0 0.0
        %789 = vmatpush1.msra.mxu0 0.0
        %790 = vmatprep.subr.mxu0 0.0
        %791 = vmatpush1.msra.mxu0 0.0
        %792 = vmatprep.subr.mxu0 0.0
        %793 = vmatpush1.msra.mxu0 0.0
        %794 = vmatprep.subr.mxu0 0.0
        %795 = vmatpush1.msra.mxu0 0.0
        %796 = vmatprep.subr.mxu0 0.0
        %797 = vmatpush1.msra.mxu0 0.0
        %798 = vmatprep.subr.mxu0 0.0
        %799 = vmatpush1.msra.mxu0 0.0
        %800 = vmatprep.subr.mxu0 0.0
        %801 = vmatpush1.msra.mxu0 0.0
        %802 = vmatprep.subr.mxu0 0.0
        %803 = vmatpush1.msra.mxu0 0.0
        %804 = vmatprep.subr.mxu0 0.0
        %805 = vmatpush1.msra.mxu0 0.0
        %806 = vmatprep.subr.mxu0 0.0
        %807 = vmatpush1.msra.mxu0 0.0
        %808 = vmatprep.subr.mxu0 0.0
        %809 = vmatpush1.msra.mxu0 0.0
        %810 = vmatprep.subr.mxu0 0.0
        %811 = vmatpush1.msra.mxu0 0.0
        %812 = vmatprep.subr.mxu0 0.0
        %813 = vmatpush1.msra.mxu0 0.0
        %814 = vmatprep.subr.mxu0 0.0
        %815 = vmatpush1.msra.mxu0 0.0
        %816 = vmatprep.subr.mxu0 0.0
        %817 = vmatpush1.msra.mxu0 0.0
        %818 = vmatprep.subr.mxu0 0.0
        %819 = vmatpush1.msra.mxu0 0.0
        %820 = vmatprep.mubr.f32.mxu0 0.0
        %v821 = vand.u32 %v431, 4294901760
        %v822 = vsub.f32 %v431, %v821
        %v823 = vand.u32 %v822, 4294901760
        %824 = vmatmul.mubr.f32.gmra.mrb[0].mxu0 %v823
        %v825 = vpop.f32.mrb[0].mxu0
        %v826 = vadd.f32 %v729, %v825
        %v827 = vpop.f32.mrb[0].mxu0
        %828 = vmatprep.mubr.f32.mxu0 0.0
        %v829 = vand.u32 %v434, 4294901760
        %v830 = vsub.f32 %v434, %v829
        %v831 = vand.u32 %v830, 4294901760
        %832 = vmatmul.mubr.f32.gmra.mrb[0].mxu0 %v831
        %v833 = vpop.f32.mrb[0].mxu0
        %v834 = vadd.f32 %v736, %v833
        %v835 = vpop.f32.mrb[0].mxu0
        %836 = vmatprep.mubr.f32.mxu0 0.0
        %v837 = vand.u32 %v437, 4294901760
        %v838 = vsub.f32 %v437, %v837
        %v839 = vand.u32 %v838, 4294901760
        %840 = vmatmul.mubr.f32.gmra.mrb[0].mxu0 %v839
        %v841 = vpop.f32.mrb[0].mxu0
        %v842 = vadd.f32 %v743, %v841
        %v843 = vpop.f32.mrb[0].mxu0
        %844 = vmatprep.mubr.f32.mxu0 0.0
        %v845 = vand.u32 %v440, 4294901760
        %v846 = vsub.f32 %v440, %v845
        %v847 = vand.u32 %v846, 4294901760
        %848 = vmatmul.mubr.f32.gmra.mrb[0].mxu0 %v847
        %v849 = vpop.f32.mrb[0].mxu0
        %v850 = vadd.f32 %v750, %v849
        %v851 = vpop.f32.mrb[0].mxu0
        %852 = vdwg.mxu0
        %853 = vmatprep.subr.mxu0 0.0
        %v854 = vand.u32 %v407, 4294901760
        %v855 = vsub.f32 %v407, %v854
        %v856 = vand.u32 %v855, 4294901760
        %857 = vmatpush1.msra.mxu0 %v856
        %858 = vmatprep.subr.mxu0 0.0
        %v859 = vand.u32 %v408, 4294901760
        %v860 = vsub.f32 %v408, %v859
        %v861 = vand.u32 %v860, 4294901760
        %862 = vmatpush1.msra.mxu0 %v861
        %863 = vmatprep.subr.mxu0 0.0
        %v864 = vand.u32 %v381, 4294901760
        %v865 = vsub.f32 %v381, %v864
        %v866 = vand.u32 %v865, 4294901760
        %867 = vmatpush1.msra.mxu0 %v866
        %868 = vmatprep.subr.mxu0 0.0
        %869 = vmatpush1.msra.mxu0 0.0
        %870 = vmatprep.subr.mxu0 0.0
        %871 = vmatpush1.msra.mxu0 0.0
        %872 = vmatprep.subr.mxu0 0.0
        %873 = vmatpush1.msra.mxu0 0.0
        %874 = vmatprep.subr.mxu0 0.0
        %875 = vmatpush1.msra.mxu0 0.0
        %876 = vmatprep.subr.mxu0 0.0
        %877 = vmatpush1.msra.mxu0 0.0
        %878 = vmatprep.subr.mxu0 0.0
        %879 = vmatpush1.msra.mxu0 0.0
        %880 = vmatprep.subr.mxu0 0.0
        %881 = vmatpush1.msra.mxu0 0.0
        %882 = vmatprep.subr.mxu0 0.0
        %883 = vmatpush1.msra.mxu0 0.0
        %884 = vmatprep.subr.mxu0 0.0
        %885 = vmatpush1.msra.mxu0 0.0
        %886 = vmatprep.subr.mxu0 0.0
        %887 = vmatpush1.msra.mxu0 0.0
        %888 = vmatprep.subr.mxu0 0.0
        %889 = vmatpush1.msra.mxu0 0.0
        %890 = vmatprep.subr.mxu0 0.0
        %891 = vmatpush1.msra.mxu0 0.0
        %892 = vmatprep.subr.mxu0 0.0
        %893 = vmatpush1.msra.mxu0 0.0
        %894 = vmatprep.subr.mxu0 0.0
        %895 = vmatpush1.msra.mxu0 0.0
        %896 = vmatprep.subr.mxu0 0.0
        %897 = vmatpush1.msra.mxu0 0.0
        %898 = vmatprep.subr.mxu0 0.0
        %899 = vmatpush1.msra.mxu0 0.0
        %900 = vmatprep.subr.mxu0 0.0
        %901 = vmatpush1.msra.mxu0 0.0
        %902 = vmatprep.subr.mxu0 0.0
        %903 = vmatpush1.msra.mxu0 0.0
        %904 = vmatprep.subr.mxu0 0.0
        %905 = vmatpush1.msra.mxu0 0.0
        %906 = vmatprep.subr.mxu0 0.0
        %907 = vmatpush1.msra.mxu0 0.0
        %908 = vmatprep.subr.mxu0 0.0
        %909 = vmatpush1.msra.mxu0 0.0
        %910 = vmatprep.subr.mxu0 0.0
        %911 = vmatpush1.msra.mxu0 0.0
        %912 = vmatprep.subr.mxu0 0.0
        %913 = vmatpush1.msra.mxu0 0.0
        %914 = vmatprep.subr.mxu0 0.0
        %915 = vmatpush1.msra.mxu0 0.0
        %916 = vmatprep.subr.mxu0 0.0
        %917 = vmatpush1.msra.mxu0 0.0
        %918 = vmatprep.subr.mxu0 0.0
        %919 = vmatpush1.msra.mxu0 0.0
        %920 = vmatprep.subr.mxu0 0.0
        %921 = vmatpush1.msra.mxu0 0.0
        %922 = vmatprep.subr.mxu0 0.0
        %923 = vmatpush1.msra.mxu0 0.0
        %924 = vmatprep.subr.mxu0 0.0
        %925 = vmatpush1.msra.mxu0 0.0
        %926 = vmatprep.mubr.f32.mxu0 0.0
        %v927 = vand.u32 %v431, 4294901760
        %928 = vmatmul.mubr.f32.gmra.mrb[0].mxu0 %v927
        %v929 = vpop.f32.mrb[0].mxu0
        %v930 = vadd.f32 %v826, %v929
        %v931 = vpop.f32.mrb[0].mxu0
        %932 = vmatprep.mubr.f32.mxu0 0.0
        %v933 = vand.u32 %v434, 4294901760
        %934 = vmatmul.mubr.f32.gmra.mrb[0].mxu0 %v933
        %v935 = vpop.f32.mrb[0].mxu0
        %v936 = vadd.f32 %v834, %v935
        %v937 = vpop.f32.mrb[0].mxu0
        %938 = vmatprep.mubr.f32.mxu0 0.0
        %v939 = vand.u32 %v437, 4294901760
        %940 = vmatmul.mubr.f32.gmra.mrb[0].mxu0 %v939
        %v941 = vpop.f32.mrb[0].mxu0
        %v942 = vadd.f32 %v842, %v941
        %v943 = vpop.f32.mrb[0].mxu0
        %944 = vmatprep.mubr.f32.mxu0 0.0
        %v945 = vand.u32 %v440, 4294901760
        %946 = vmatmul.mubr.f32.gmra.mrb[0].mxu0 %v945
        %v947 = vpop.f32.mrb[0].mxu0
        %v948 = vadd.f32 %v850, %v947
        %v949 = vpop.f32.mrb[0].mxu0
        %950 = vdwg.mxu0
        %951 = vmatprep.subr.mxu0 0.0
        %v952 = vand.u32 %v407, 4294901760
        %953 = vmatpush1.msra.mxu0 %v952
        %954 = vmatprep.subr.mxu0 0.0
        %v955 = vand.u32 %v408, 4294901760
        %956 = vmatpush1.msra.mxu0 %v955
        %957 = vmatprep.subr.mxu0 0.0
        %v958 = vand.u32 %v381, 4294901760
        %959 = vmatpush1.msra.mxu0 %v958
        %960 = vmatprep.subr.mxu0 0.0
        %961 = vmatpush1.msra.mxu0 0.0
        %962 = vmatprep.subr.mxu0 0.0
        %963 = vmatpush1.msra.mxu0 0.0
        %964 = vmatprep.subr.mxu0 0.0
        %965 = vmatpush1.msra.mxu0 0.0
        %966 = vmatprep.subr.mxu0 0.0
        %967 = vmatpush1.msra.mxu0 0.0
        %968 = vmatprep.subr.mxu0 0.0
        %969 = vmatpush1.msra.mxu0 0.0
        %970 = vmatprep.subr.mxu0 0.0
        %971 = vmatpush1.msra.mxu0 0.0
        %972 = vmatprep.subr.mxu0 0.0
        %973 = vmatpush1.msra.mxu0 0.0
        %974 = vmatprep.subr.mxu0 0.0
        %975 = vmatpush1.msra.mxu0 0.0
        %976 = vmatprep.subr.mxu0 0.0
        %977 = vmatpush1.msra.mxu0 0.0
        %978 = vmatprep.subr.mxu0 0.0
        %979 = vmatpush1.msra.mxu0 0.0
        %980 = vmatprep.subr.mxu0 0.0
        %981 = vmatpush1.msra.mxu0 0.0
        %982 = vmatprep.subr.mxu0 0.0
        %983 = vmatpush1.msra.mxu0 0.0
        %984 = vmatprep.subr.mxu0 0.0
        %985 = vmatpush1.msra.mxu0 0.0
        %986 = vmatprep.subr.mxu0 0.0
        %987 = vmatpush1.msra.mxu0 0.0
        %988 = vmatprep.subr.mxu0 0.0
        %989 = vmatpush1.msra.mxu0 0.0
        %990 = vmatprep.subr.mxu0 0.0
        %991 = vmatpush1.msra.mxu0 0.0
        %992 = vmatprep.subr.mxu0 0.0
        %993 = vmatpush1.msra.mxu0 0.0
        %994 = vmatprep.subr.mxu0 0.0
        %995 = vmatpush1.msra.mxu0 0.0
        %996 = vmatprep.subr.mxu0 0.0
        %997 = vmatpush1.msra.mxu0 0.0
        %998 = vmatprep.subr.mxu0 0.0
        %999 = vmatpush1.msra.mxu0 0.0
        %1000 = vmatprep.subr.mxu0 0.0
        %1001 = vmatpush1.msra.mxu0 0.0
        %1002 = vmatprep.subr.mxu0 0.0
        %1003 = vmatpush1.msra.mxu0 0.0
        %1004 = vmatprep.subr.mxu0 0.0
        %1005 = vmatpush1.msra.mxu0 0.0
        %1006 = vmatprep.subr.mxu0 0.0
        %1007 = vmatpush1.msra.mxu0 0.0
        %1008 = vmatprep.subr.mxu0 0.0
        %1009 = vmatpush1.msra.mxu0 0.0
        %1010 = vmatprep.subr.mxu0 0.0
        %1011 = vmatpush1.msra.mxu0 0.0
        %1012 = vmatprep.subr.mxu0 0.0
        %1013 = vmatpush1.msra.mxu0 0.0
        %1014 = vmatprep.subr.mxu0 0.0
        %1015 = vmatpush1.msra.mxu0 0.0
        %1016 = vmatprep.subr.mxu0 0.0
        %1017 = vmatpush1.msra.mxu0 0.0
        %1018 = vmatprep.mubr.f32.mxu0 0.0
        %v1019 = vand.u32 %v431, 4294901760
        %1020 = vmatmul.mubr.f32.gmra.mrb[0].mxu0 %v1019
        %v1021 = vpop.f32.mrb[0].mxu0
        %v1022 = vadd.f32 %v930, %v1021
        %v1023 = vpop.f32.mrb[0].mxu0
        %1024 = vmatprep.mubr.f32.mxu0 0.0
        %v1025 = vand.u32 %v434, 4294901760
        %1026 = vmatmul.mubr.f32.gmra.mrb[0].mxu0 %v1025
        %v1027 = vpop.f32.mrb[0].mxu0
        %v1028 = vadd.f32 %v936, %v1027
        %v1029 = vpop.f32.mrb[0].mxu0
        %1030 = vmatprep.mubr.f32.mxu0 0.0
        %v1031 = vand.u32 %v437, 4294901760
        %1032 = vmatmul.mubr.f32.gmra.mrb[0].mxu0 %v1031
        %v1033 = vpop.f32.mrb[0].mxu0
        %v1034 = vadd.f32 %v942, %v1033
        %v1035 = vpop.f32.mrb[0].mxu0
        %1036 = vmatprep.mubr.f32.mxu0 0.0
        %v1037 = vand.u32 %v440, 4294901760
        %1038 = vmatmul.mubr.f32.gmra.mrb[0].mxu0 %v1037
        %v1039 = vpop.f32.mrb[0].mxu0
        %v1040 = vadd.f32 %v948, %v1039
        %v1041 = vpop.f32.mrb[0].mxu0
        %1042 = vdwg.mxu0
        %v1043 = vmax.f32 %v1022, 0.0
        %v1044 = vmax.f32 %v1028, 0.0
        %1047 = vrot.lane.b32.xlu0 %v1043, 1
        %v1048 = vpop.permute.xlu0 %1047
        %1049 = vrot.lane.b32.xlu0 %v1044, 1
        %v1050 = vpop.permute.xlu0 %1049
        %v1053 = vsel %vm406, %v396, %v1048
        %v1054 = vsel %vm406, %v397, %v1050
        %1056 = vset.pattern.permute.xlu0 0
        %1057 = vperm.xlu0 %1056, %v392
        %v1058 = vpop.permute.xlu0 %1057
        %1061 = vset.pattern.permute.xlu0 0
        %1062 = vperm.xlu0 %1061, %v393
        %v1063 = vpop.permute.xlu0 %1062
        %v1066 = vsel %vm429, %v390, 0
        %v1069 = vsel %vm429, %v391, 0
        %1071 = vmatprep.subr.mxu0 0.0
        %v1072 = vand.u32 %v1053, 4294901760
        %1073 = vmatpush1.msra.mxu0 %v1072
        %1074 = vmatprep.subr.mxu0 0.0
        %v1075 = vand.u32 %v1054, 4294901760
        %1076 = vmatpush1.msra.mxu0 %v1075
        %1077 = vmatprep.subr.mxu0 0.0
        %v1078 = vand.u32 %v1043, 4294901760
        %1079 = vmatpush1.msra.mxu0 %v1078
        %1080 = vmatprep.subr.mxu0 0.0
        %v1081 = vand.u32 %v1044, 4294901760
        %1082 = vmatpush1.msra.mxu0 %v1081
        %1083 = vmatprep.subr.mxu0 0.0
        %1084 = vmatpush1.msra.mxu0 0.0
        %1085 = vmatprep.subr.mxu0 0.0
        %1086 = vmatpush1.msra.mxu0 0.0
        %1087 = vmatprep.subr.mxu0 0.0
        %1088 = vmatpush1.msra.mxu0 0.0
        %1089 = vmatprep.subr.mxu0 0.0
        %1090 = vmatpush1.msra.mxu0 0.0
        %1091 = vmatprep.subr.mxu0 0.0
        %1092 = vmatpush1.msra.mxu0 0.0
        %1093 = vmatprep.subr.mxu0 0.0
        %1094 = vmatpush1.msra.mxu0 0.0
        %1095 = vmatprep.subr.mxu0 0.0
        %1096 = vmatpush1.msra.mxu0 0.0
        %1097 = vmatprep.subr.mxu0 0.0
        %1098 = vmatpush1.msra.mxu0 0.0
        %1099 = vmatprep.subr.mxu0 0.0
        %1100 = vmatpush1.msra.mxu0 0.0
        %1101 = vmatprep.subr.mxu0 0.0
        %1102 = vmatpush1.msra.mxu0 0.0
        %1103 = vmatprep.subr.mxu0 0.0
        %1104 = vmatpush1.msra.mxu0 0.0
        %1105 = vmatprep.subr.mxu0 0.0
        %1106 = vmatpush1.msra.mxu0 0.0
        %1107 = vmatprep.subr.mxu0 0.0
        %1108 = vmatpush1.msra.mxu0 0.0
        %1109 = vmatprep.subr.mxu0 0.0
        %1110 = vmatpush1.msra.mxu0 0.0
        %1111 = vmatprep.subr.mxu0 0.0
        %1112 = vmatpush1.msra.mxu0 0.0
        %1113 = vmatprep.subr.mxu0 0.0
        %1114 = vmatpush1.msra.mxu0 0.0
        %1115 = vmatprep.subr.mxu0 0.0
        %1116 = vmatpush1.msra.mxu0 0.0
        %1117 = vmatprep.subr.mxu0 0.0
        %1118 = vmatpush1.msra.mxu0 0.0
        %1119 = vmatprep.subr.mxu0 0.0
        %1120 = vmatpush1.msra.mxu0 0.0
        %1121 = vmatprep.subr.mxu0 0.0
        %1122 = vmatpush1.msra.mxu0 0.0
        %1123 = vmatprep.subr.mxu0 0.0
        %1124 = vmatpush1.msra.mxu0 0.0
        %1125 = vmatprep.subr.mxu0 0.0
        %1126 = vmatpush1.msra.mxu0 0.0
        %1127 = vmatprep.subr.mxu0 0.0
        %1128 = vmatpush1.msra.mxu0 0.0
        %1129 = vmatprep.subr.mxu0 0.0
        %1130 = vmatpush1.msra.mxu0 0.0
        %1131 = vmatprep.subr.mxu0 0.0
        %1132 = vmatpush1.msra.mxu0 0.0
        %1133 = vmatprep.subr.mxu0 0.0
        %1134 = vmatpush1.msra.mxu0 0.0
        %1135 = vmatprep.subr.mxu0 0.0
        %1136 = vmatpush1.msra.mxu0 0.0
        %1137 = vmatprep.subr.mxu0 0.0
        %1138 = vmatpush1.msra.mxu0 0.0
        %1139 = vmatprep.mubr.f32.mxu0 0.0
        %v1140 = vand.u32 %v1066, 4294901760
        %v1141 = vsub.f32 %v1066, %v1140
        %v1142 = vand.u32 %v1141, 4294901760
        %v1143 = vsub.f32 %v1141, %v1142
        %v1144 = vand.u32 %v1143, 4294901760
        %1145 = vmatmul.mubr.f32.gmra.mrb[0].mxu0 %v1144
        %v1146 = vpop.f32.mrb[0].mxu0
        %v1147 = vadd.f32 %v1058, %v1146
        %v1148 = vpop.f32.mrb[0].mxu0
        %1149 = vmatprep.mubr.f32.mxu0 0.0
        %v1150 = vand.u32 %v1069, 4294901760
        %v1151 = vsub.f32 %v1069, %v1150
        %v1152 = vand.u32 %v1151, 4294901760
        %v1153 = vsub.f32 %v1151, %v1152
        %v1154 = vand.u32 %v1153, 4294901760
        %1155 = vmatmul.mubr.f32.gmra.mrb[0].mxu0 %v1154
        %v1156 = vpop.f32.mrb[0].mxu0
        %v1157 = vadd.f32 %v1063, %v1156
        %v1158 = vpop.f32.mrb[0].mxu0
        %1159 = vdwg.mxu0
        %1160 = vmatprep.subr.mxu0 0.0
        %v1161 = vand.u32 %v1053, 4294901760
        %v1162 = vsub.f32 %v1053, %v1161
        %v1163 = vand.u32 %v1162, 4294901760
        %v1164 = vsub.f32 %v1162, %v1163
        %v1165 = vand.u32 %v1164, 4294901760
        %1166 = vmatpush1.msra.mxu0 %v1165
        %1167 = vmatprep.subr.mxu0 0.0
        %v1168 = vand.u32 %v1054, 4294901760
        %v1169 = vsub.f32 %v1054, %v1168
        %v1170 = vand.u32 %v1169, 4294901760
        %v1171 = vsub.f32 %v1169, %v1170
        %v1172 = vand.u32 %v1171, 4294901760
        %1173 = vmatpush1.msra.mxu0 %v1172
        %1174 = vmatprep.subr.mxu0 0.0
        %v1175 = vand.u32 %v1043, 4294901760
        %v1176 = vsub.f32 %v1043, %v1175
        %v1177 = vand.u32 %v1176, 4294901760
        %v1178 = vsub.f32 %v1176, %v1177
        %v1179 = vand.u32 %v1178, 4294901760
        %1180 = vmatpush1.msra.mxu0 %v1179
        %1181 = vmatprep.subr.mxu0 0.0
        %v1182 = vand.u32 %v1044, 4294901760
        %v1183 = vsub.f32 %v1044, %v1182
        %v1184 = vand.u32 %v1183, 4294901760
        %v1185 = vsub.f32 %v1183, %v1184
        %v1186 = vand.u32 %v1185, 4294901760
        %1187 = vmatpush1.msra.mxu0 %v1186
        %1188 = vmatprep.subr.mxu0 0.0
        %1189 = vmatpush1.msra.mxu0 0.0
        %1190 = vmatprep.subr.mxu0 0.0
        %1191 = vmatpush1.msra.mxu0 0.0
        %1192 = vmatprep.subr.mxu0 0.0
        %1193 = vmatpush1.msra.mxu0 0.0
        %1194 = vmatprep.subr.mxu0 0.0
        %1195 = vmatpush1.msra.mxu0 0.0
        %1196 = vmatprep.subr.mxu0 0.0
        %1197 = vmatpush1.msra.mxu0 0.0
        %1198 = vmatprep.subr.mxu0 0.0
        %1199 = vmatpush1.msra.mxu0 0.0
        %1200 = vmatprep.subr.mxu0 0.0
        %1201 = vmatpush1.msra.mxu0 0.0
        %1202 = vmatprep.subr.mxu0 0.0
        %1203 = vmatpush1.msra.mxu0 0.0
        %1204 = vmatprep.subr.mxu0 0.0
        %1205 = vmatpush1.msra.mxu0 0.0
        %1206 = vmatprep.subr.mxu0 0.0
        %1207 = vmatpush1.msra.mxu0 0.0
        %1208 = vmatprep.subr.mxu0 0.0
        %1209 = vmatpush1.msra.mxu0 0.0
        %1210 = vmatprep.subr.mxu0 0.0
        %1211 = vmatpush1.msra.mxu0 0.0
        %1212 = vmatprep.subr.mxu0 0.0
        %1213 = vmatpush1.msra.mxu0 0.0
        %1214 = vmatprep.subr.mxu0 0.0
        %1215 = vmatpush1.msra.mxu0 0.0
        %1216 = vmatprep.subr.mxu0 0.0
        %1217 = vmatpush1.msra.mxu0 0.0
        %1218 = vmatprep.subr.mxu0 0.0
        %1219 = vmatpush1.msra.mxu0 0.0
        %1220 = vmatprep.subr.mxu0 0.0
        %1221 = vmatpush1.msra.mxu0 0.0
        %1222 = vmatprep.subr.mxu0 0.0
        %1223 = vmatpush1.msra.mxu0 0.0
        %1224 = vmatprep.subr.mxu0 0.0
        %1225 = vmatpush1.msra.mxu0 0.0
        %1226 = vmatprep.subr.mxu0 0.0
        %1227 = vmatpush1.msra.mxu0 0.0
        %1228 = vmatprep.subr.mxu0 0.0
        %1229 = vmatpush1.msra.mxu0 0.0
        %1230 = vmatprep.subr.mxu0 0.0
        %1231 = vmatpush1.msra.mxu0 0.0
        %1232 = vmatprep.subr.mxu0 0.0
        %1233 = vmatpush1.msra.mxu0 0.0
        %1234 = vmatprep.subr.mxu0 0.0
        %1235 = vmatpush1.msra.mxu0 0.0
        %1236 = vmatprep.subr.mxu0 0.0
        %1237 = vmatpush1.msra.mxu0 0.0
        %1238 = vmatprep.subr.mxu0 0.0
        %1239 = vmatpush1.msra.mxu0 0.0
        %1240 = vmatprep.subr.mxu0 0.0
        %1241 = vmatpush1.msra.mxu0 0.0
        %1242 = vmatprep.subr.mxu0 0.0
        %1243 = vmatpush1.msra.mxu0 0.0
        %1244 = vmatprep.mubr.f32.mxu0 0.0
        %v1245 = vand.u32 %v1066, 4294901760
        %1246 = vmatmul.mubr.f32.gmra.mrb[0].mxu0 %v1245
        %v1247 = vpop.f32.mrb[0].mxu0
        %v1248 = vadd.f32 %v1147, %v1247
        %v1249 = vpop.f32.mrb[0].mxu0
        %1250 = vmatprep.mubr.f32.mxu0 0.0
        %v1251 = vand.u32 %v1069, 4294901760
        %1252 = vmatmul.mubr.f32.gmra.mrb[0].mxu0 %v1251
        %v1253 = vpop.f32.mrb[0].mxu0
        %v1254 = vadd.f32 %v1157, %v1253
        %v1255 = vpop.f32.mrb[0].mxu0
        %1256 = vdwg.mxu0
        %1257 = vmatprep.subr.mxu0 0.0
        %v1258 = vand.u32 %v1053, 4294901760
        %v1259 = vsub.f32 %v1053, %v1258
        %1260 = vmatpush1.msra.mxu0 %v1259
        %1261 = vmatprep.subr.mxu0 0.0
        %v1262 = vand.u32 %v1054, 4294901760
        %v1263 = vsub.f32 %v1054, %v1262
        %1264 = vmatpush1.msra.mxu0 %v1263
        %1265 = vmatprep.subr.mxu0 0.0
        %v1266 = vand.u32 %v1043, 4294901760
        %v1267 = vsub.f32 %v1043, %v1266
        %1268 = vmatpush1.msra.mxu0 %v1267
        %1269 = vmatprep.subr.mxu0 0.0
        %v1270 = vand.u32 %v1044, 4294901760
        %v1271 = vsub.f32 %v1044, %v1270
        %1272 = vmatpush1.msra.mxu0 %v1271
        %1273 = vmatprep.subr.mxu0 0.0
        %1274 = vmatpush1.msra.mxu0 0.0
        %1275 = vmatprep.subr.mxu0 0.0
        %1276 = vmatpush1.msra.mxu0 0.0
        %1277 = vmatprep.subr.mxu0 0.0
        %1278 = vmatpush1.msra.mxu0 0.0
        %1279 = vmatprep.subr.mxu0 0.0
        %1280 = vmatpush1.msra.mxu0 0.0
        %1281 = vmatprep.subr.mxu0 0.0
        %1282 = vmatpush1.msra.mxu0 0.0
        %1283 = vmatprep.subr.mxu0 0.0
        %1284 = vmatpush1.msra.mxu0 0.0
        %1285 = vmatprep.subr.mxu0 0.0
        %1286 = vmatpush1.msra.mxu0 0.0
        %1287 = vmatprep.subr.mxu0 0.0
        %1288 = vmatpush1.msra.mxu0 0.0
        %1289 = vmatprep.subr.mxu0 0.0
        %1290 = vmatpush1.msra.mxu0 0.0
        %1291 = vmatprep.subr.mxu0 0.0
        %1292 = vmatpush1.msra.mxu0 0.0
        %1293 = vmatprep.subr.mxu0 0.0
        %1294 = vmatpush1.msra.mxu0 0.0
        %1295 = vmatprep.subr.mxu0 0.0
        %1296 = vmatpush1.msra.mxu0 0.0
        %1297 = vmatprep.subr.mxu0 0.0
        %1298 = vmatpush1.msra.mxu0 0.0
        %1299 = vmatprep.subr.mxu0 0.0
        %1300 = vmatpush1.msra.mxu0 0.0
        %1301 = vmatprep.subr.mxu0 0.0
        %1302 = vmatpush1.msra.mxu0 0.0
        %1303 = vmatprep.subr.mxu0 0.0
        %1304 = vmatpush1.msra.mxu0 0.0
        %1305 = vmatprep.subr.mxu0 0.0
        %1306 = vmatpush1.msra.mxu0 0.0
        %1307 = vmatprep.subr.mxu0 0.0
        %1308 = vmatpush1.msra.mxu0 0.0
        %1309 = vmatprep.subr.mxu0 0.0
        %1310 = vmatpush1.msra.mxu0 0.0
        %1311 = vmatprep.subr.mxu0 0.0
        %1312 = vmatpush1.msra.mxu0 0.0
        %1313 = vmatprep.subr.mxu0 0.0
        %1314 = vmatpush1.msra.mxu0 0.0
        %1315 = vmatprep.subr.mxu0 0.0
        %1316 = vmatpush1.msra.mxu0 0.0
        %1317 = vmatprep.subr.mxu0 0.0
        %1318 = vmatpush1.msra.mxu0 0.0
        %1319 = vmatprep.subr.mxu0 0.0
        %1320 = vmatpush1.msra.mxu0 0.0
        %1321 = vmatprep.subr.mxu0 0.0
        %1322 = vmatpush1.msra.mxu0 0.0
        %1323 = vmatprep.subr.mxu0 0.0
        %1324 = vmatpush1.msra.mxu0 0.0
        %1325 = vmatprep.subr.mxu0 0.0
        %1326 = vmatpush1.msra.mxu0 0.0
        %1327 = vmatprep.subr.mxu0 0.0
        %1328 = vmatpush1.msra.mxu0 0.0
        %1329 = vmatprep.mubr.f32.mxu0 0.0
        %v1330 = vand.u32 %v1066, 4294901760
        %v1331 = vsub.f32 %v1066, %v1330
        %1332 = vmatmul.mubr.f32.gmra.mrb[0].mxu0 %v1331
        %v1333 = vpop.f32.mrb[0].mxu0
        %v1334 = vadd.f32 %v1248, %v1333
        %v1335 = vpop.f32.mrb[0].mxu0
        %1336 = vmatprep.mubr.f32.mxu0 0.0
        %v1337 = vand.u32 %v1069, 4294901760
        %v1338 = vsub.f32 %v1069, %v1337
        %1339 = vmatmul.mubr.f32.gmra.mrb[0].mxu0 %v1338
        %v1340 = vpop.f32.mrb[0].mxu0
        %v1341 = vadd.f32 %v1254, %v1340
        %v1342 = vpop.f32.mrb[0].mxu0
        %1343 = vdwg.mxu0
        %1344 = vmatprep.subr.mxu0 0.0
        %v1345 = vand.u32 %v1053, 4294901760
        %1346 = vmatpush1.msra.mxu0 %v1345
        %1347 = vmatprep.subr.mxu0 0.0
        %v1348 = vand.u32 %v1054, 4294901760
        %1349 = vmatpush1.msra.mxu0 %v1348
        %1350 = vmatprep.subr.mxu0 0.0
        %v1351 = vand.u32 %v1043, 4294901760
        %1352 = vmatpush1.msra.mxu0 %v1351
        %1353 = vmatprep.subr.mxu0 0.0
        %v1354 = vand.u32 %v1044, 4294901760
        %1355 = vmatpush1.msra.mxu0 %v1354
        %1356 = vmatprep.subr.mxu0 0.0
        %1357 = vmatpush1.msra.mxu0 0.0
        %1358 = vmatprep.subr.mxu0 0.0
        %1359 = vmatpush1.msra.mxu0 0.0
        %1360 = vmatprep.subr.mxu0 0.0
        %1361 = vmatpush1.msra.mxu0 0.0
        %1362 = vmatprep.subr.mxu0 0.0
        %1363 = vmatpush1.msra.mxu0 0.0
        %1364 = vmatprep.subr.mxu0 0.0
        %1365 = vmatpush1.msra.mxu0 0.0
        %1366 = vmatprep.subr.mxu0 0.0
        %1367 = vmatpush1.msra.mxu0 0.0
        %1368 = vmatprep.subr.mxu0 0.0
        %1369 = vmatpush1.msra.mxu0 0.0
        %1370 = vmatprep.subr.mxu0 0.0
        %1371 = vmatpush1.msra.mxu0 0.0
        %1372 = vmatprep.subr.mxu0 0.0
        %1373 = vmatpush1.msra.mxu0 0.0
        %1374 = vmatprep.subr.mxu0 0.0
        %1375 = vmatpush1.msra.mxu0 0.0
        %1376 = vmatprep.subr.mxu0 0.0
        %1377 = vmatpush1.msra.mxu0 0.0
        %1378 = vmatprep.subr.mxu0 0.0
        %1379 = vmatpush1.msra.mxu0 0.0
        %1380 = vmatprep.subr.mxu0 0.0
        %1381 = vmatpush1.msra.mxu0 0.0
        %1382 = vmatprep.subr.mxu0 0.0
        %1383 = vmatpush1.msra.mxu0 0.0
        %1384 = vmatprep.subr.mxu0 0.0
        %1385 = vmatpush1.msra.mxu0 0.0
        %1386 = vmatprep.subr.mxu0 0.0
        %1387 = vmatpush1.msra.mxu0 0.0
        %1388 = vmatprep.subr.mxu0 0.0
        %1389 = vmatpush1.msra.mxu0 0.0
        %1390 = vmatprep.subr.mxu0 0.0
        %1391 = vmatpush1.msra.mxu0 0.0
        %1392 = vmatprep.subr.mxu0 0.0
        %1393 = vmatpush1.msra.mxu0 0.0
        %1394 = vmatprep.subr.mxu0 0.0
        %1395 = vmatpush1.msra.mxu0 0.0
        %1396 = vmatprep.subr.mxu0 0.0
        %1397 = vmatpush1.msra.mxu0 0.0
        %1398 = vmatprep.subr.mxu0 0.0
        %1399 = vmatpush1.msra.mxu0 0.0
        %1400 = vmatprep.subr.mxu0 0.0
        %1401 = vmatpush1.msra.mxu0 0.0
        %1402 = vmatprep.subr.mxu0 0.0
        %1403 = vmatpush1.msra.mxu0 0.0
        %1404 = vmatprep.subr.mxu0 0.0
        %1405 = vmatpush1.msra.mxu0 0.0
        %1406 = vmatprep.subr.mxu0 0.0
        %1407 = vmatpush1.msra.mxu0 0.0
        %1408 = vmatprep.subr.mxu0 0.0
        %1409 = vmatpush1.msra.mxu0 0.0
        %1410 = vmatprep.subr.mxu0 0.0
        %1411 = vmatpush1.msra.mxu0 0.0
        %1412 = vmatprep.mubr.f32.mxu0 0.0
        %v1413 = vand.u32 %v1066, 4294901760
        %v1414 = vsub.f32 %v1066, %v1413
        %v1415 = vand.u32 %v1414, 4294901760
        %1416 = vmatmul.mubr.f32.gmra.mrb[0].mxu0 %v1415
        %v1417 = vpop.f32.mrb[0].mxu0
        %v1418 = vadd.f32 %v1334, %v1417
        %v1419 = vpop.f32.mrb[0].mxu0
        %1420 = vmatprep.mubr.f32.mxu0 0.0
        %v1421 = vand.u32 %v1069, 4294901760
        %v1422 = vsub.f32 %v1069, %v1421
        %v1423 = vand.u32 %v1422, 4294901760
        %1424 = vmatmul.mubr.f32.gmra.mrb[0].mxu0 %v1423
        %v1425 = vpop.f32.mrb[0].mxu0
        %v1426 = vadd.f32 %v1341, %v1425
        %v1427 = vpop.f32.mrb[0].mxu0
        %1428 = vdwg.mxu0
        %1429 = vmatprep.subr.mxu0 0.0
        %v1430 = vand.u32 %v1053, 4294901760
        %v1431 = vsub.f32 %v1053, %v1430
        %v1432 = vand.u32 %v1431, 4294901760
        %1433 = vmatpush1.msra.mxu0 %v1432
        %1434 = vmatprep.subr.mxu0 0.0
        %v1435 = vand.u32 %v1054, 4294901760
        %v1436 = vsub.f32 %v1054, %v1435
        %v1437 = vand.u32 %v1436, 4294901760
        %1438 = vmatpush1.msra.mxu0 %v1437
        %1439 = vmatprep.subr.mxu0 0.0
        %v1440 = vand.u32 %v1043, 4294901760
        %v1441 = vsub.f32 %v1043, %v1440
        %v1442 = vand.u32 %v1441, 4294901760
        %1443 = vmatpush1.msra.mxu0 %v1442
        %1444 = vmatprep.subr.mxu0 0.0
        %v1445 = vand.u32 %v1044, 4294901760
        %v1446 = vsub.f32 %v1044, %v1445
        %v1447 = vand.u32 %v1446, 4294901760
        %1448 = vmatpush1.msra.mxu0 %v1447
        %1449 = vmatprep.subr.mxu0 0.0
        %1450 = vmatpush1.msra.mxu0 0.0
        %1451 = vmatprep.subr.mxu0 0.0
        %1452 = vmatpush1.msra.mxu0 0.0
        %1453 = vmatprep.subr.mxu0 0.0
        %1454 = vmatpush1.msra.mxu0 0.0
        %1455 = vmatprep.subr.mxu0 0.0
        %1456 = vmatpush1.msra.mxu0 0.0
        %1457 = vmatprep.subr.mxu0 0.0
        %1458 = vmatpush1.msra.mxu0 0.0
        %1459 = vmatprep.subr.mxu0 0.0
        %1460 = vmatpush1.msra.mxu0 0.0
        %1461 = vmatprep.subr.mxu0 0.0
        %1462 = vmatpush1.msra.mxu0 0.0
        %1463 = vmatprep.subr.mxu0 0.0
        %1464 = vmatpush1.msra.mxu0 0.0
        %1465 = vmatprep.subr.mxu0 0.0
        %1466 = vmatpush1.msra.mxu0 0.0
        %1467 = vmatprep.subr.mxu0 0.0
        %1468 = vmatpush1.msra.mxu0 0.0
        %1469 = vmatprep.subr.mxu0 0.0
        %1470 = vmatpush1.msra.mxu0 0.0
        %1471 = vmatprep.subr.mxu0 0.0
        %1472 = vmatpush1.msra.mxu0 0.0
        %1473 = vmatprep.subr.mxu0 0.0
        %1474 = vmatpush1.msra.mxu0 0.0
        %1475 = vmatprep.subr.mxu0 0.0
        %1476 = vmatpush1.msra.mxu0 0.0
        %1477 = vmatprep.subr.mxu0 0.0
        %1478 = vmatpush1.msra.mxu0 0.0
        %1479 = vmatprep.subr.mxu0 0.0
        %1480 = vmatpush1.msra.mxu0 0.0
        %1481 = vmatprep.subr.mxu0 0.0
        %1482 = vmatpush1.msra.mxu0 0.0
        %1483 = vmatprep.subr.mxu0 0.0
        %1484 = vmatpush1.msra.mxu0 0.0
        %1485 = vmatprep.subr.mxu0 0.0
        %1486 = vmatpush1.msra.mxu0 0.0
        %1487 = vmatprep.subr.mxu0 0.0
        %1488 = vmatpush1.msra.mxu0 0.0
        %1489 = vmatprep.subr.mxu0 0.0
        %1490 = vmatpush1.msra.mxu0 0.0
        %1491 = vmatprep.subr.mxu0 0.0
        %1492 = vmatpush1.msra.mxu0 0.0
        %1493 = vmatprep.subr.mxu0 0.0
        %1494 = vmatpush1.msra.mxu0 0.0
        %1495 = vmatprep.subr.mxu0 0.0
        %1496 = vmatpush1.msra.mxu0 0.0
        %1497 = vmatprep.subr.mxu0 0.0
        %1498 = vmatpush1.msra.mxu0 0.0
        %1499 = vmatprep.subr.mxu0 0.0
        %1500 = vmatpush1.msra.mxu0 0.0
        %1501 = vmatprep.subr.mxu0 0.0
        %1502 = vmatpush1.msra.mxu0 0.0
        %1503 = vmatprep.subr.mxu0 0.0
        %1504 = vmatpush1.msra.mxu0 0.0
        %1505 = vmatprep.mubr.f32.mxu0 0.0
        %v1506 = vand.u32 %v1066, 4294901760
        %1507 = vmatmul.mubr.f32.gmra.mrb[0].mxu0 %v1506
        %v1508 = vpop.f32.mrb[0].mxu0
        %v1509 = vadd.f32 %v1418, %v1508
        %v1510 = vpop.f32.mrb[0].mxu0
        %1511 = vmatprep.mubr.f32.mxu0 0.0
        %v1512 = vand.u32 %v1069, 4294901760
        %1513 = vmatmul.mubr.f32.gmra.mrb[0].mxu0 %v1512
        %v1514 = vpop.f32.mrb[0].mxu0
        %v1515 = vadd.f32 %v1426, %v1514
        %v1516 = vpop.f32.mrb[0].mxu0
        %1517 = vdwg.mxu0
        %1518 = vmatprep.subr.mxu0 0.0
        %v1519 = vand.u32 %v1053, 4294901760
        %1520 = vmatpush1.msra.mxu0 %v1519
        %1521 = vmatprep.subr.mxu0 0.0
        %v1522 = vand.u32 %v1054, 4294901760
        %1523 = vmatpush1.msra.mxu0 %v1522
        %1524 = vmatprep.subr.mxu0 0.0
        %v1525 = vand.u32 %v1043, 4294901760
        %1526 = vmatpush1.msra.mxu0 %v1525
        %1527 = vmatprep.subr.mxu0 0.0
        %v1528 = vand.u32 %v1044, 4294901760
        %1529 = vmatpush1.msra.mxu0 %v1528
        %1530 = vmatprep.subr.mxu0 0.0
        %1531 = vmatpush1.msra.mxu0 0.0
        %1532 = vmatprep.subr.mxu0 0.0
        %1533 = vmatpush1.msra.mxu0 0.0
        %1534 = vmatprep.subr.mxu0 0.0
        %1535 = vmatpush1.msra.mxu0 0.0
        %1536 = vmatprep.subr.mxu0 0.0
        %1537 = vmatpush1.msra.mxu0 0.0
        %1538 = vmatprep.subr.mxu0 0.0
        %1539 = vmatpush1.msra.mxu0 0.0
        %1540 = vmatprep.subr.mxu0 0.0
        %1541 = vmatpush1.msra.mxu0 0.0
        %1542 = vmatprep.subr.mxu0 0.0
        %1543 = vmatpush1.msra.mxu0 0.0
        %1544 = vmatprep.subr.mxu0 0.0
        %1545 = vmatpush1.msra.mxu0 0.0
        %1546 = vmatprep.subr.mxu0 0.0
        %1547 = vmatpush1.msra.mxu0 0.0
        %1548 = vmatprep.subr.mxu0 0.0
        %1549 = vmatpush1.msra.mxu0 0.0
        %1550 = vmatprep.subr.mxu0 0.0
        %1551 = vmatpush1.msra.mxu0 0.0
        %1552 = vmatprep.subr.mxu0 0.0
        %1553 = vmatpush1.msra.mxu0 0.0
        %1554 = vmatprep.subr.mxu0 0.0
        %1555 = vmatpush1.msra.mxu0 0.0
        %1556 = vmatprep.subr.mxu0 0.0
        %1557 = vmatpush1.msra.mxu0 0.0
        %1558 = vmatprep.subr.mxu0 0.0
        %1559 = vmatpush1.msra.mxu0 0.0
        %1560 = vmatprep.subr.mxu0 0.0
        %1561 = vmatpush1.msra.mxu0 0.0
        %1562 = vmatprep.subr.mxu0 0.0
        %1563 = vmatpush1.msra.mxu0 0.0
        %1564 = vmatprep.subr.mxu0 0.0
        %1565 = vmatpush1.msra.mxu0 0.0
        %1566 = vmatprep.subr.mxu0 0.0
        %1567 = vmatpush1.msra.mxu0 0.0
        %1568 = vmatprep.subr.mxu0 0.0
        %1569 = vmatpush1.msra.mxu0 0.0
        %1570 = vmatprep.subr.mxu0 0.0
        %1571 = vmatpush1.msra.mxu0 0.0
        %1572 = vmatprep.subr.mxu0 0.0
        %1573 = vmatpush1.msra.mxu0 0.0
        %1574 = vmatprep.subr.mxu0 0.0
        %1575 = vmatpush1.msra.mxu0 0.0
        %1576 = vmatprep.subr.mxu0 0.0
        %1577 = vmatpush1.msra.mxu0 0.0
        %1578 = vmatprep.subr.mxu0 0.0
        %1579 = vmatpush1.msra.mxu0 0.0
        %1580 = vmatprep.subr.mxu0 0.0
        %1581 = vmatpush1.msra.mxu0 0.0
        %1582 = vmatprep.subr.mxu0 0.0
        %1583 = vmatpush1.msra.mxu0 0.0
        %1584 = vmatprep.subr.mxu0 0.0
        %1585 = vmatpush1.msra.mxu0 0.0
        %1586 = vmatprep.mubr.f32.mxu0 0.0
        %v1587 = vand.u32 %v1066, 4294901760
        %1588 = vmatmul.mubr.f32.gmra.mrb[0].mxu0 %v1587
        %v1589 = vpop.f32.mrb[0].mxu0
        %v1590 = vadd.f32 %v1509, %v1589
        %v1591 = vpop.f32.mrb[0].mxu0
        %1592 = vmatprep.mubr.f32.mxu0 0.0
        %v1593 = vand.u32 %v1069, 4294901760
        %1594 = vmatmul.mubr.f32.gmra.mrb[0].mxu0 %v1593
        %v1595 = vpop.f32.mrb[0].mxu0
        %v1596 = vadd.f32 %v1515, %v1595
        %v1597 = vpop.f32.mrb[0].mxu0
        %1598 = vdwg.mxu0
        %v1599 = vmax.f32 %v1590, 0.0
        %v1600 = vmax.f32 %v1596, 0.0
        %v1601 = vadd.f32 %v1599, %v1034
        %v1602 = vadd.f32 %v1600, %v1040
        %v1603 = vmax.f32 %v1601, 0.0
        %v1604 = vmax.f32 %v1602, 0.0
        %1605 = vrot.lane.b32.xlu0 %v381, 113
        %v1606 = vpop.permute.xlu0 %1605
        %1607 = vrot.lane.b32.xlu0 0.0, 113
        %v1608 = vpop.permute.xlu0 %1607
        %1611 = vst.msk [vmem:[#allocation2] sm:$0xff] %vm406, %v1606
        %1612 = vst.msk [vmem:[#allocation2 + $0x8] sm:$0xff] %vm406, %v1608
        %1613 = vrot.lane.b32.xlu0 %v1043, 113
        %v1614 = vpop.permute.xlu0 %1613
        %1615 = vrot.lane.b32.xlu0 %v1044, 113
        %v1616 = vpop.permute.xlu0 %1615
        %1619 = vst.msk [vmem:[#allocation3] sm:$0xff] %vm406, %v1614
        %1620 = vst.msk [vmem:[#allocation3 + $0x8] sm:$0xff] %vm406, %v1616
        %v1621 = vld [vmem:[%s5] sm:$0xff]
        %v1622 = vld [vmem:[%s5 + $0x8] sm:$0xff]
        %v1623 = vld [vmem:[%s6] sm:$0xff]
        %v1624 = vld [vmem:[%s6 + $0x8] sm:$0xff]
        %v1625 = vld [vmem:[%s7] sm:$0xff]
        %v1626 = vld [vmem:[%s7 + $0x8] sm:$0xff]
        %v1627 = vld [vmem:[%s8] sm:$0xff]
        %v1628 = vld [vmem:[%s8 + $0x8] sm:$0xff]
        %v1629 = vld [vmem:[#allocation4] sm:$0xff]
        %v1630 = vld [vmem:[#allocation4 + $0x8] sm:$0xff]
        %v1631 = vld [vmem:[#allocation5] sm:$0xff]
        %v1632 = vld [vmem:[#allocation5 + $0x8] sm:$0xff]
        %1635 = vrot.lane.b32.xlu0 %v1603, 2
        %v1636 = vpop.permute.xlu0 %1635
        %1637 = vrot.lane.b32.xlu0 %v1604, 2
        %v1638 = vpop.permute.xlu0 %1637
        %vm1641 = vcmask 15360
        %v1642 = vsel %vm1641, %v1629, %v1636
        %v1643 = vsel %vm1641, %v1630, %v1638
        %1645 = vset.pattern.permute.xlu0 0
        %1646 = vperm.xlu0 %1645, %v1623
        %v1647 = vpop.permute.xlu0 %1646
        %1650 = vset.pattern.permute.xlu0 0
        %1651 = vperm.xlu0 %1650, %v1624
        %v1652 = vpop.permute.xlu0 %1651
        %v1655 = vsel %vm429, %v1621, 0
        %v1658 = vsel %vm429, %v1622, 0
        %1660 = vmatprep.subr.mxu0 0.0
        %v1661 = vand.u32 %v1642, 4294901760
        %1662 = vmatpush1.msra.mxu0 %v1661
        %1663 = vmatprep.subr.mxu0 0.0
        %v1664 = vand.u32 %v1643, 4294901760
        %1665 = vmatpush1.msra.mxu0 %v1664
        %1666 = vmatprep.subr.mxu0 0.0
        %v1667 = vand.u32 %v1603, 4294901760
        %1668 = vmatpush1.msra.mxu0 %v1667
        %1669 = vmatprep.subr.mxu0 0.0
        %v1670 = vand.u32 %v1604, 4294901760
        %1671 = vmatpush1.msra.mxu0 %v1670
        %1672 = vmatprep.subr.mxu0 0.0
        %1673 = vmatpush1.msra.mxu0 0.0
        %1674 = vmatprep.subr.mxu0 0.0
        %1675 = vmatpush1.msra.mxu0 0.0
        %1676 = vmatprep.subr.mxu0 0.0
        %1677 = vmatpush1.msra.mxu0 0.0
        %1678 = vmatprep.subr.mxu0 0.0
        %1679 = vmatpush1.msra.mxu0 0.0
        %1680 = vmatprep.subr.mxu0 0.0
        %1681 = vmatpush1.msra.mxu0 0.0
        %1682 = vmatprep.subr.mxu0 0.0
        %1683 = vmatpush1.msra.mxu0 0.0
        %1684 = vmatprep.subr.mxu0 0.0
        %1685 = vmatpush1.msra.mxu0 0.0
        %1686 = vmatprep.subr.mxu0 0.0
        %1687 = vmatpush1.msra.mxu0 0.0
        %1688 = vmatprep.subr.mxu0 0.0
        %1689 = vmatpush1.msra.mxu0 0.0
        %1690 = vmatprep.subr.mxu0 0.0
        %1691 = vmatpush1.msra.mxu0 0.0
        %1692 = vmatprep.subr.mxu0 0.0
        %1693 = vmatpush1.msra.mxu0 0.0
        %1694 = vmatprep.subr.mxu0 0.0
        %1695 = vmatpush1.msra.mxu0 0.0
        %1696 = vmatprep.subr.mxu0 0.0
        %1697 = vmatpush1.msra.mxu0 0.0
        %1698 = vmatprep.subr.mxu0 0.0
        %1699 = vmatpush1.msra.mxu0 0.0
        %1700 = vmatprep.subr.mxu0 0.0
        %1701 = vmatpush1.msra.mxu0 0.0
        %1702 = vmatprep.subr.mxu0 0.0
        %1703 = vmatpush1.msra.mxu0 0.0
        %1704 = vmatprep.subr.mxu0 0.0
        %1705 = vmatpush1.msra.mxu0 0.0
        %1706 = vmatprep.subr.mxu0 0.0
        %1707 = vmatpush1.msra.mxu0 0.0
        %1708 = vmatprep.subr.mxu0 0.0
        %1709 = vmatpush1.msra.mxu0 0.0
        %1710 = vmatprep.subr.mxu0 0.0
        %1711 = vmatpush1.msra.mxu0 0.0
        %1712 = vmatprep.subr.mxu0 0.0
        %1713 = vmatpush1.msra.mxu0 0.0
        %1714 = vmatprep.subr.mxu0 0.0
        %1715 = vmatpush1.msra.mxu0 0.0
        %1716 = vmatprep.subr.mxu0 0.0
        %1717 = vmatpush1.msra.mxu0 0.0
        %1718 = vmatprep.subr.mxu0 0.0
        %1719 = vmatpush1.msra.mxu0 0.0
        %1720 = vmatprep.subr.mxu0 0.0
        %1721 = vmatpush1.msra.mxu0 0.0
        %1722 = vmatprep.subr.mxu0 0.0
        %1723 = vmatpush1.msra.mxu0 0.0
        %1724 = vmatprep.subr.mxu0 0.0
        %1725 = vmatpush1.msra.mxu0 0.0
        %1726 = vmatprep.subr.mxu0 0.0
        %1727 = vmatpush1.msra.mxu0 0.0
        %1728 = vmatprep.mubr.f32.mxu0 0.0
        %v1729 = vand.u32 %v1655, 4294901760
        %v1730 = vsub.f32 %v1655, %v1729
        %v1731 = vand.u32 %v1730, 4294901760
        %v1732 = vsub.f32 %v1730, %v1731
        %v1733 = vand.u32 %v1732, 4294901760
        %1734 = vmatmul.mubr.f32.gmra.mrb[0].mxu0 %v1733
        %v1735 = vpop.f32.mrb[0].mxu0
        %v1736 = vadd.f32 %v1647, %v1735
        %v1737 = vpop.f32.mrb[0].mxu0
        %1738 = vmatprep.mubr.f32.mxu0 0.0
        %v1739 = vand.u32 %v1658, 4294901760
        %v1740 = vsub.f32 %v1658, %v1739
        %v1741 = vand.u32 %v1740, 4294901760
        %v1742 = vsub.f32 %v1740, %v1741
        %v1743 = vand.u32 %v1742, 4294901760
        %1744 = vmatmul.mubr.f32.gmra.mrb[0].mxu0 %v1743
        %v1745 = vpop.f32.mrb[0].mxu0
        %v1746 = vadd.f32 %v1652, %v1745
        %v1747 = vpop.f32.mrb[0].mxu0
        %1748 = vdwg.mxu0
        %1749 = vmatprep.subr.mxu0 0.0
        %v1750 = vand.u32 %v1642, 4294901760
        %v1751 = vsub.f32 %v1642, %v1750
        %v1752 = vand.u32 %v1751, 4294901760
        %v1753 = vsub.f32 %v1751, %v1752
        %v1754 = vand.u32 %v1753, 4294901760
        %1755 = vmatpush1.msra.mxu0 %v1754
        %1756 = vmatprep.subr.mxu0 0.0
        %v1757 = vand.u32 %v1643, 4294901760
        %v1758 = vsub.f32 %v1643, %v1757
        %v1759 = vand.u32 %v1758, 4294901760
        %v1760 = vsub.f32 %v1758, %v1759
        %v1761 = vand.u32 %v1760, 4294901760
        %1762 = vmatpush1.msra.mxu0 %v1761
        %1763 = vmatprep.subr.mxu0 0.0
        %v1764 = vand.u32 %v1603, 4294901760
        %v1765 = vsub.f32 %v1603, %v1764
        %v1766 = vand.u32 %v1765, 4294901760
        %v1767 = vsub.f32 %v1765, %v1766
        %v1768 = vand.u32 %v1767, 4294901760
        %1769 = vmatpush1.msra.mxu0 %v1768
        %1770 = vmatprep.subr.mxu0 0.0
        %v1771 = vand.u32 %v1604, 4294901760
        %v1772 = vsub.f32 %v1604, %v1771
        %v1773 = vand.u32 %v1772, 4294901760
        %v1774 = vsub.f32 %v1772, %v1773
        %v1775 = vand.u32 %v1774, 4294901760
        %1776 = vmatpush1.msra.mxu0 %v1775
        %1777 = vmatprep.subr.mxu0 0.0
        %1778 = vmatpush1.msra.mxu0 0.0
        %1779 = vmatprep.subr.mxu0 0.0
        %1780 = vmatpush1.msra.mxu0 0.0
        %1781 = vmatprep.subr.mxu0 0.0
        %1782 = vmatpush1.msra.mxu0 0.0
        %1783 = vmatprep.subr.mxu0 0.0
        %1784 = vmatpush1.msra.mxu0 0.0
        %1785 = vmatprep.subr.mxu0 0.0
        %1786 = vmatpush1.msra.mxu0 0.0
        %1787 = vmatprep.subr.mxu0 0.0
        %1788 = vmatpush1.msra.mxu0 0.0
        %1789 = vmatprep.subr.mxu0 0.0
        %1790 = vmatpush1.msra.mxu0 0.0
        %1791 = vmatprep.subr.mxu0 0.0
        %1792 = vmatpush1.msra.mxu0 0.0
        %1793 = vmatprep.subr.mxu0 0.0
        %1794 = vmatpush1.msra.mxu0 0.0
        %1795 = vmatprep.subr.mxu0 0.0
        %1796 = vmatpush1.msra.mxu0 0.0
        %1797 = vmatprep.subr.mxu0 0.0
        %1798 = vmatpush1.msra.mxu0 0.0
        %1799 = vmatprep.subr.mxu0 0.0
        %1800 = vmatpush1.msra.mxu0 0.0
        %1801 = vmatprep.subr.mxu0 0.0
        %1802 = vmatpush1.msra.mxu0 0.0
        %1803 = vmatprep.subr.mxu0 0.0
        %1804 = vmatpush1.msra.mxu0 0.0
        %1805 = vmatprep.subr.mxu0 0.0
        %1806 = vmatpush1.msra.mxu0 0.0
        %1807 = vmatprep.subr.mxu0 0.0
        %1808 = vmatpush1.msra.mxu0 0.0
        %1809 = vmatprep.subr.mxu0 0.0
        %1810 = vmatpush1.msra.mxu0 0.0
        %1811 = vmatprep.subr.mxu0 0.0
        %1812 = vmatpush1.msra.mxu0 0.0
        %1813 = vmatprep.subr.mxu0 0.0
        %1814 = vmatpush1.msra.mxu0 0.0
        %1815 = vmatprep.subr.mxu0 0.0
        %1816 = vmatpush1.msra.mxu0 0.0
        %1817 = vmatprep.subr.mxu0 0.0
        %1818 = vmatpush1.msra.mxu0 0.0
        %1819 = vmatprep.subr.mxu0 0.0
        %1820 = vmatpush1.msra.mxu0 0.0
        %1821 = vmatprep.subr.mxu0 0.0
        %1822 = vmatpush1.msra.mxu0 0.0
        %1823 = vmatprep.subr.mxu0 0.0
        %1824 = vmatpush1.msra.mxu0 0.0
        %1825 = vmatprep.subr.mxu0 0.0
        %1826 = vmatpush1.msra.mxu0 0.0
        %1827 = vmatprep.subr.mxu0 0.0
        %1828 = vmatpush1.msra.mxu0 0.0
        %1829 = vmatprep.subr.mxu0 0.0
        %1830 = vmatpush1.msra.mxu0 0.0
        %1831 = vmatprep.subr.mxu0 0.0
        %1832 = vmatpush1.msra.mxu0 0.0
        %1833 = vmatprep.mubr.f32.mxu0 0.0
        %v1834 = vand.u32 %v1655, 4294901760
        %1835 = vmatmul.mubr.f32.gmra.mrb[0].mxu0 %v1834
        %v1836 = vpop.f32.mrb[0].mxu0
        %v1837 = vadd.f32 %v1736, %v1836
        %v1838 = vpop.f32.mrb[0].mxu0
        %1839 = vmatprep.mubr.f32.mxu0 0.0
        %v1840 = vand.u32 %v1658, 4294901760
        %1841 = vmatmul.mubr.f32.gmra.mrb[0].mxu0 %v1840
        %v1842 = vpop.f32.mrb[0].mxu0
        %v1843 = vadd.f32 %v1746, %v1842
        %v1844 = vpop.f32.mrb[0].mxu0
        %1845 = vdwg.mxu0
        %1846 = vmatprep.subr.mxu0 0.0
        %v1847 = vand.u32 %v1642, 4294901760
        %v1848 = vsub.f32 %v1642, %v1847
        %1849 = vmatpush1.msra.mxu0 %v1848
        %1850 = vmatprep.subr.mxu0 0.0
        %v1851 = vand.u32 %v1643, 4294901760
        %v1852 = vsub.f32 %v1643, %v1851
        %1853 = vmatpush1.msra.mxu0 %v1852
        %1854 = vmatprep.subr.mxu0 0.0
        %v1855 = vand.u32 %v1603, 4294901760
        %v1856 = vsub.f32 %v1603, %v1855
        %1857 = vmatpush1.msra.mxu0 %v1856
        %1858 = vmatprep.subr.mxu0 0.0
        %v1859 = vand.u32 %v1604, 4294901760
        %v1860 = vsub.f32 %v1604, %v1859
        %1861 = vmatpush1.msra.mxu0 %v1860
        %1862 = vmatprep.subr.mxu0 0.0
        %1863 = vmatpush1.msra.mxu0 0.0
        %1864 = vmatprep.subr.mxu0 0.0
        %1865 = vmatpush1.msra.mxu0 0.0
        %1866 = vmatprep.subr.mxu0 0.0
        %1867 = vmatpush1.msra.mxu0 0.0
        %1868 = vmatprep.subr.mxu0 0.0
        %1869 = vmatpush1.msra.mxu0 0.0
        %1870 = vmatprep.subr.mxu0 0.0
        %1871 = vmatpush1.msra.mxu0 0.0
        %1872 = vmatprep.subr.mxu0 0.0
        %1873 = vmatpush1.msra.mxu0 0.0
        %1874 = vmatprep.subr.mxu0 0.0
        %1875 = vmatpush1.msra.mxu0 0.0
        %1876 = vmatprep.subr.mxu0 0.0
        %1877 = vmatpush1.msra.mxu0 0.0
        %1878 = vmatprep.subr.mxu0 0.0
        %1879 = vmatpush1.msra.mxu0 0.0
        %1880 = vmatprep.subr.mxu0 0.0
        %1881 = vmatpush1.msra.mxu0 0.0
        %1882 = vmatprep.subr.mxu0 0.0
        %1883 = vmatpush1.msra.mxu0 0.0
        %1884 = vmatprep.subr.mxu0 0.0
        %1885 = vmatpush1.msra.mxu0 0.0
        %1886 = vmatprep.subr.mxu0 0.0
        %1887 = vmatpush1.msra.mxu0 0.0
        %1888 = vmatprep.subr.mxu0 0.0
        %1889 = vmatpush1.msra.mxu0 0.0
        %1890 = vmatprep.subr.mxu0 0.0
        %1891 = vmatpush1.msra.mxu0 0.0
        %1892 = vmatprep.subr.mxu0 0.0
        %1893 = vmatpush1.msra.mxu0 0.0
        %1894 = vmatprep.subr.mxu0 0.0
        %1895 = vmatpush1.msra.mxu0 0.0
        %1896 = vmatprep.subr.mxu0 0.0
        %1897 = vmatpush1.msra.mxu0 0.0
        %1898 = vmatprep.subr.mxu0 0.0
        %1899 = vmatpush1.msra.mxu0 0.0
        %1900 = vmatprep.subr.mxu0 0.0
        %1901 = vmatpush1.msra.mxu0 0.0
        %1902 = vmatprep.subr.mxu0 0.0
        %1903 = vmatpush1.msra.mxu0 0.0
        %1904 = vmatprep.subr.mxu0 0.0
        %1905 = vmatpush1.msra.mxu0 0.0
        %1906 = vmatprep.subr.mxu0 0.0
        %1907 = vmatpush1.msra.mxu0 0.0
        %1908 = vmatprep.subr.mxu0 0.0
        %1909 = vmatpush1.msra.mxu0 0.0
        %1910 = vmatprep.subr.mxu0 0.0
        %1911 = vmatpush1.msra.mxu0 0.0
        %1912 = vmatprep.subr.mxu0 0.0
        %1913 = vmatpush1.msra.mxu0 0.0
        %1914 = vmatprep.subr.mxu0 0.0
        %1915 = vmatpush1.msra.mxu0 0.0
        %1916 = vmatprep.subr.mxu0 0.0
        %1917 = vmatpush1.msra.mxu0 0.0
        %1918 = vmatprep.mubr.f32.mxu0 0.0
        %v1919 = vand.u32 %v1655, 4294901760
        %v1920 = vsub.f32 %v1655, %v1919
        %1921 = vmatmul.mubr.f32.gmra.mrb[0].mxu0 %v1920
        %v1922 = vpop.f32.mrb[0].mxu0
        %v1923 = vadd.f32 %v1837, %v1922
        %v1924 = vpop.f32.mrb[0].mxu0
        %1925 = vmatprep.mubr.f32.mxu0 0.0
        %v1926 = vand.u32 %v1658, 4294901760
        %v1927 = vsub.f32 %v1658, %v1926
        %1928 = vmatmul.mubr.f32.gmra.mrb[0].mxu0 %v1927
        %v1929 = vpop.f32.mrb[0].mxu0
        %v1930 = vadd.f32 %v1843, %v1929
        %v1931 = vpop.f32.mrb[0].mxu0
        %1932 = vdwg.mxu0
        %1933 = vmatprep.subr.mxu0 0.0
        %v1934 = vand.u32 %v1642, 4294901760
        %1935 = vmatpush1.msra.mxu0 %v1934
        %1936 = vmatprep.subr.mxu0 0.0
        %v1937 = vand.u32 %v1643, 4294901760
        %1938 = vmatpush1.msra.mxu0 %v1937
        %1939 = vmatprep.subr.mxu0 0.0
        %v1940 = vand.u32 %v1603, 4294901760
        %1941 = vmatpush1.msra.mxu0 %v1940
        %1942 = vmatprep.subr.mxu0 0.0
        %v1943 = vand.u32 %v1604, 4294901760
        %1944 = vmatpush1.msra.mxu0 %v1943
        %1945 = vmatprep.subr.mxu0 0.0
        %1946 = vmatpush1.msra.mxu0 0.0
        %1947 = vmatprep.subr.mxu0 0.0
        %1948 = vmatpush1.msra.mxu0 0.0
        %1949 = vmatprep.subr.mxu0 0.0
        %1950 = vmatpush1.msra.mxu0 0.0
        %1951 = vmatprep.subr.mxu0 0.0
        %1952 = vmatpush1.msra.mxu0 0.0
        %1953 = vmatprep.subr.mxu0 0.0
        %1954 = vmatpush1.msra.mxu0 0.0
        %1955 = vmatprep.subr.mxu0 0.0
        %1956 = vmatpush1.msra.mxu0 0.0
        %1957 = vmatprep.subr.mxu0 0.0
        %1958 = vmatpush1.msra.mxu0 0.0
        %1959 = vmatprep.subr.mxu0 0.0
        %1960 = vmatpush1.msra.mxu0 0.0
        %1961 = vmatprep.subr.mxu0 0.0
        %1962 = vmatpush1.msra.mxu0 0.0
        %1963 = vmatprep.subr.mxu0 0.0
        %1964 = vmatpush1.msra.mxu0 0.0
        %1965 = vmatprep.subr.mxu0 0.0
        %1966 = vmatpush1.msra.mxu0 0.0
        %1967 = vmatprep.subr.mxu0 0.0
        %1968 = vmatpush1.msra.mxu0 0.0
        %1969 = vmatprep.subr.mxu0 0.0
        %1970 = vmatpush1.msra.mxu0 0.0
        %1971 = vmatprep.subr.mxu0 0.0
        %1972 = vmatpush1.msra.mxu0 0.0
        %1973 = vmatprep.subr.mxu0 0.0
        %1974 = vmatpush1.msra.mxu0 0.0
        %1975 = vmatprep.subr.mxu0 0.0
        %1976 = vmatpush1.msra.mxu0 0.0
        %1977 = vmatprep.subr.mxu0 0.0
        %1978 = vmatpush1.msra.mxu0 0.0
        %1979 = vmatprep.subr.mxu0 0.0
        %1980 = vmatpush1.msra.mxu0 0.0
        %1981 = vmatprep.subr.mxu0 0.0
        %1982 = vmatpush1.msra.mxu0 0.0
        %1983 = vmatprep.subr.mxu0 0.0
        %1984 = vmatpush1.msra.mxu0 0.0
        %1985 = vmatprep.subr.mxu0 0.0
        %1986 = vmatpush1.msra.mxu0 0.0
        %1987 = vmatprep.subr.mxu0 0.0
        %1988 = vmatpush1.msra.mxu0 0.0
        %1989 = vmatprep.subr.mxu0 0.0
        %1990 = vmatpush1.msra.mxu0 0.0
        %1991 = vmatprep.subr.mxu0 0.0
        %1992 = vmatpush1.msra.mxu0 0.0
        %1993 = vmatprep.subr.mxu0 0.0
        %1994 = vmatpush1.msra.mxu0 0.0
        %1995 = vmatprep.subr.mxu0 0.0
        %1996 = vmatpush1.msra.mxu0 0.0
        %1997 = vmatprep.subr.mxu0 0.0
        %1998 = vmatpush1.msra.mxu0 0.0
        %1999 = vmatprep.subr.mxu0 0.0
        %2000 = vmatpush1.msra.mxu0 0.0
        %2001 = vmatprep.mubr.f32.mxu0 0.0
        %v2002 = vand.u32 %v1655, 4294901760
        %v2003 = vsub.f32 %v1655, %v2002
        %v2004 = vand.u32 %v2003, 4294901760
        %2005 = vmatmul.mubr.f32.gmra.mrb[0].mxu0 %v2004
        %v2006 = vpop.f32.mrb[0].mxu0
        %v2007 = vadd.f32 %v1923, %v2006
        %v2008 = vpop.f32.mrb[0].mxu0
        %2009 = vmatprep.mubr.f32.mxu0 0.0
        %v2010 = vand.u32 %v1658, 4294901760
        %v2011 = vsub.f32 %v1658, %v2010
        %v2012 = vand.u32 %v2011, 4294901760
        %2013 = vmatmul.mubr.f32.gmra.mrb[0].mxu0 %v2012
        %v2014 = vpop.f32.mrb[0].mxu0
        %v2015 = vadd.f32 %v1930, %v2014
        %v2016 = vpop.f32.mrb[0].mxu0
        %2017 = vdwg.mxu0
        %2018 = vmatprep.subr.mxu0 0.0
        %v2019 = vand.u32 %v1642, 4294901760
        %v2020 = vsub.f32 %v1642, %v2019
        %v2021 = vand.u32 %v2020, 4294901760
        %2022 = vmatpush1.msra.mxu0 %v2021
        %2023 = vmatprep.subr.mxu0 0.0
        %v2024 = vand.u32 %v1643, 4294901760
        %v2025 = vsub.f32 %v1643, %v2024
        %v2026 = vand.u32 %v2025, 4294901760
        %2027 = vmatpush1.msra.mxu0 %v2026
        %2028 = vmatprep.subr.mxu0 0.0
        %v2029 = vand.u32 %v1603, 4294901760
        %v2030 = vsub.f32 %v1603, %v2029
        %v2031 = vand.u32 %v2030, 4294901760
        %2032 = vmatpush1.msra.mxu0 %v2031
        %2033 = vmatprep.subr.mxu0 0.0
        %v2034 = vand.u32 %v1604, 4294901760
        %v2035 = vsub.f32 %v1604, %v2034
        %v2036 = vand.u32 %v2035, 4294901760
        %2037 = vmatpush1.msra.mxu0 %v2036
        %2038 = vmatprep.subr.mxu0 0.0
        %2039 = vmatpush1.msra.mxu0 0.0
        %2040 = vmatprep.subr.mxu0 0.0
        %2041 = vmatpush1.msra.mxu0 0.0
        %2042 = vmatprep.subr.mxu0 0.0
        %2043 = vmatpush1.msra.mxu0 0.0
        %2044 = vmatprep.subr.mxu0 0.0
        %2045 = vmatpush1.msra.mxu0 0.0
        %2046 = vmatprep.subr.mxu0 0.0
        %2047 = vmatpush1.msra.mxu0 0.0
        %2048 = vmatprep.subr.mxu0 0.0
        %2049 = vmatpush1.msra.mxu0 0.0
        %2050 = vmatprep.subr.mxu0 0.0
        %2051 = vmatpush1.msra.mxu0 0.0
        %2052 = vmatprep.subr.mxu0 0.0
        %2053 = vmatpush1.msra.mxu0 0.0
        %2054 = vmatprep.subr.mxu0 0.0
        %2055 = vmatpush1.msra.mxu0 0.0
        %2056 = vmatprep.subr.mxu0 0.0
        %2057 = vmatpush1.msra.mxu0 0.0
        %2058 = vmatprep.subr.mxu0 0.0
        %2059 = vmatpush1.msra.mxu0 0.0
        %2060 = vmatprep.subr.mxu0 0.0
        %2061 = vmatpush1.msra.mxu0 0.0
        %2062 = vmatprep.subr.mxu0 0.0
        %2063 = vmatpush1.msra.mxu0 0.0
        %2064 = vmatprep.subr.mxu0 0.0
        %2065 = vmatpush1.msra.mxu0 0.0
        %2066 = vmatprep.subr.mxu0 0.0
        %2067 = vmatpush1.msra.mxu0 0.0
        %2068 = vmatprep.subr.mxu0 0.0
        %2069 = vmatpush1.msra.mxu0 0.0
        %2070 = vmatprep.subr.mxu0 0.0
        %2071 = vmatpush1.msra.mxu0 0.0
        %2072 = vmatprep.subr.mxu0 0.0
        %2073 = vmatpush1.msra.mxu0 0.0
        %2074 = vmatprep.subr.mxu0 0.0
        %2075 = vmatpush1.msra.mxu0 0.0
        %2076 = vmatprep.subr.mxu0 0.0
        %2077 = vmatpush1.msra.mxu0 0.0
        %2078 = vmatprep.subr.mxu0 0.0
        %2079 = vmatpush1.msra.mxu0 0.0
        %2080 = vmatprep.subr.mxu0 0.0
        %2081 = vmatpush1.msra.mxu0 0.0
        %2082 = vmatprep.subr.mxu0 0.0
        %2083 = vmatpush1.msra.mxu0 0.0
        %2084 = vmatprep.subr.mxu0 0.0
        %2085 = vmatpush1.msra.mxu0 0.0
        %2086 = vmatprep.subr.mxu0 0.0
        %2087 = vmatpush1.msra.mxu0 0.0
        %2088 = vmatprep.subr.mxu0 0.0
        %2089 = vmatpush1.msra.mxu0 0.0
        %2090 = vmatprep.subr.mxu0 0.0
        %2091 = vmatpush1.msra.mxu0 0.0
        %2092 = vmatprep.subr.mxu0 0.0
        %2093 = vmatpush1.msra.mxu0 0.0
        %2094 = vmatprep.mubr.f32.mxu0 0.0
        %v2095 = vand.u32 %v1655, 4294901760
        %2096 = vmatmul.mubr.f32.gmra.mrb[0].mxu0 %v2095
        %v2097 = vpop.f32.mrb[0].mxu0
        %v2098 = vadd.f32 %v2007, %v2097
        %v2099 = vpop.f32.mrb[0].mxu0
        %2100 = vmatprep.mubr.f32.mxu0 0.0
        %v2101 = vand.u32 %v1658, 4294901760
        %2102 = vmatmul.mubr.f32.gmra.mrb[0].mxu0 %v2101
        %v2103 = vpop.f32.mrb[0].mxu0
        %v2104 = vadd.f32 %v2015, %v2103
        %v2105 = vpop.f32.mrb[0].mxu0
        %2106 = vdwg.mxu0
        %2107 = vmatprep.subr.mxu0 0.0
        %v2108 = vand.u32 %v1642, 4294901760
        %2109 = vmatpush1.msra.mxu0 %v2108
        %2110 = vmatprep.subr.mxu0 0.0
        %v2111 = vand.u32 %v1643, 4294901760
        %2112 = vmatpush1.msra.mxu0 %v2111
        %2113 = vmatprep.subr.mxu0 0.0
        %v2114 = vand.u32 %v1603, 4294901760
        %2115 = vmatpush1.msra.mxu0 %v2114
        %2116 = vmatprep.subr.mxu0 0.0
        %v2117 = vand.u32 %v1604, 4294901760
        %2118 = vmatpush1.msra.mxu0 %v2117
        %2119 = vmatprep.subr.mxu0 0.0
        %2120 = vmatpush1.msra.mxu0 0.0
        %2121 = vmatprep.subr.mxu0 0.0
        %2122 = vmatpush1.msra.mxu0 0.0
        %2123 = vmatprep.subr.mxu0 0.0
        %2124 = vmatpush1.msra.mxu0 0.0
        %2125 = vmatprep.subr.mxu0 0.0
        %2126 = vmatpush1.msra.mxu0 0.0
        %2127 = vmatprep.subr.mxu0 0.0
        %2128 = vmatpush1.msra.mxu0 0.0
        %2129 = vmatprep.subr.mxu0 0.0
        %2130 = vmatpush1.msra.mxu0 0.0
        %2131 = vmatprep.subr.mxu0 0.0
        %2132 = vmatpush1.msra.mxu0 0.0
        %2133 = vmatprep.subr.mxu0 0.0
        %2134 = vmatpush1.msra.mxu0 0.0
        %2135 = vmatprep.subr.mxu0 0.0
        %2136 = vmatpush1.msra.mxu0 0.0
        %2137 = vmatprep.subr.mxu0 0.0
        %2138 = vmatpush1.msra.mxu0 0.0
        %2139 = vmatprep.subr.mxu0 0.0
        %2140 = vmatpush1.msra.mxu0 0.0
        %2141 = vmatprep.subr.mxu0 0.0
        %2142 = vmatpush1.msra.mxu0 0.0
        %2143 = vmatprep.subr.mxu0 0.0
        %2144 = vmatpush1.msra.mxu0 0.0
        %2145 = vmatprep.subr.mxu0 0.0
        %2146 = vmatpush1.msra.mxu0 0.0
        %2147 = vmatprep.subr.mxu0 0.0
        %2148 = vmatpush1.msra.mxu0 0.0
        %2149 = vmatprep.subr.mxu0 0.0
        %2150 = vmatpush1.msra.mxu0 0.0
        %2151 = vmatprep.subr.mxu0 0.0
        %2152 = vmatpush1.msra.mxu0 0.0
        %2153 = vmatprep.subr.mxu0 0.0
        %2154 = vmatpush1.msra.mxu0 0.0
        %2155 = vmatprep.subr.mxu0 0.0
        %2156 = vmatpush1.msra.mxu0 0.0
        %2157 = vmatprep.subr.mxu0 0.0
        %2158 = vmatpush1.msra.mxu0 0.0
        %2159 = vmatprep.subr.mxu0 0.0
        %2160 = vmatpush1.msra.mxu0 0.0
        %2161 = vmatprep.subr.mxu0 0.0
        %2162 = vmatpush1.msra.mxu0 0.0
        %2163 = vmatprep.subr.mxu0 0.0
        %2164 = vmatpush1.msra.mxu0 0.0
        %2165 = vmatprep.subr.mxu0 0.0
        %2166 = vmatpush1.msra.mxu0 0.0
        %2167 = vmatprep.subr.mxu0 0.0
        %2168 = vmatpush1.msra.mxu0 0.0
        %2169 = vmatprep.subr.mxu0 0.0
        %2170 = vmatpush1.msra.mxu0 0.0
        %2171 = vmatprep.subr.mxu0 0.0
        %2172 = vmatpush1.msra.mxu0 0.0
        %2173 = vmatprep.subr.mxu0 0.0
        %2174 = vmatpush1.msra.mxu0 0.0
        %2175 = vmatprep.mubr.f32.mxu0 0.0
        %v2176 = vand.u32 %v1655, 4294901760
        %2177 = vmatmul.mubr.f32.gmra.mrb[0].mxu0 %v2176
        %v2178 = vpop.f32.mrb[0].mxu0
        %v2179 = vadd.f32 %v2098, %v2178
        %v2180 = vpop.f32.mrb[0].mxu0
        %2181 = vmatprep.mubr.f32.mxu0 0.0
        %v2182 = vand.u32 %v1658, 4294901760
        %2183 = vmatmul.mubr.f32.gmra.mrb[0].mxu0 %v2182
        %v2184 = vpop.f32.mrb[0].mxu0
        %v2185 = vadd.f32 %v2104, %v2184
        %v2186 = vpop.f32.mrb[0].mxu0
        %2187 = vdwg.mxu0
        %v2188 = vmax.f32 %v2179, 0.0
        %v2189 = vmax.f32 %v2185, 0.0
        %2192 = vrot.lane.b32.xlu0 %v2188, 2
        %v2193 = vpop.permute.xlu0 %2192
        %2194 = vrot.lane.b32.xlu0 %v2189, 2
        %v2195 = vpop.permute.xlu0 %2194
        %v2198 = vsel %vm1641, %v1631, %v2193
        %v2199 = vsel %vm1641, %v1632, %v2195
        %2201 = vset.pattern.permute.xlu0 0
        %2202 = vperm.xlu0 %2201, %v1627
        %v2203 = vpop.permute.xlu0 %2202
        %2206 = vset.pattern.permute.xlu0 0
        %2207 = vperm.xlu0 %2206, %v1628
        %v2208 = vpop.permute.xlu0 %2207
        %v2210 = vsel %vm429, %v1625, 0
        %v2213 = vsel %vm429, %v1626, 0
        %2215 = vmatprep.subr.mxu0 0.0
        %v2216 = vand.u32 %v2198, 4294901760
        %2217 = vmatpush1.msra.mxu0 %v2216
        %2218 = vmatprep.subr.mxu0 0.0
        %v2219 = vand.u32 %v2199, 4294901760
        %2220 = vmatpush1.msra.mxu0 %v2219
        %2221 = vmatprep.subr.mxu0 0.0
        %v2222 = vand.u32 %v2188, 4294901760
        %2223 = vmatpush1.msra.mxu0 %v2222
        %2224 = vmatprep.subr.mxu0 0.0
        %v2225 = vand.u32 %v2189, 4294901760
        %2226 = vmatpush1.msra.mxu0 %v2225
        %2227 = vmatprep.subr.mxu0 0.0
        %2228 = vmatpush1.msra.mxu0 0.0
        %2229 = vmatprep.subr.mxu0 0.0
        %2230 = vmatpush1.msra.mxu0 0.0
        %2231 = vmatprep.subr.mxu0 0.0
        %2232 = vmatpush1.msra.mxu0 0.0
        %2233 = vmatprep.subr.mxu0 0.0
        %2234 = vmatpush1.msra.mxu0 0.0
        %2235 = vmatprep.subr.mxu0 0.0
        %2236 = vmatpush1.msra.mxu0 0.0
        %2237 = vmatprep.subr.mxu0 0.0
        %2238 = vmatpush1.msra.mxu0 0.0
        %2239 = vmatprep.subr.mxu0 0.0
        %2240 = vmatpush1.msra.mxu0 0.0
        %2241 = vmatprep.subr.mxu0 0.0
        %2242 = vmatpush1.msra.mxu0 0.0
        %2243 = vmatprep.subr.mxu0 0.0
        %2244 = vmatpush1.msra.mxu0 0.0
        %2245 = vmatprep.subr.mxu0 0.0
        %2246 = vmatpush1.msra.mxu0 0.0
        %2247 = vmatprep.subr.mxu0 0.0
        %2248 = vmatpush1.msra.mxu0 0.0
        %2249 = vmatprep.subr.mxu0 0.0
        %2250 = vmatpush1.msra.mxu0 0.0
        %2251 = vmatprep.subr.mxu0 0.0
        %2252 = vmatpush1.msra.mxu0 0.0
        %2253 = vmatprep.subr.mxu0 0.0
        %2254 = vmatpush1.msra.mxu0 0.0
        %2255 = vmatprep.subr.mxu0 0.0
        %2256 = vmatpush1.msra.mxu0 0.0
        %2257 = vmatprep.subr.mxu0 0.0
        %2258 = vmatpush1.msra.mxu0 0.0
        %2259 = vmatprep.subr.mxu0 0.0
        %2260 = vmatpush1.msra.mxu0 0.0
        %2261 = vmatprep.subr.mxu0 0.0
        %2262 = vmatpush1.msra.mxu0 0.0
        %2263 = vmatprep.subr.mxu0 0.0
        %2264 = vmatpush1.msra.mxu0 0.0
        %2265 = vmatprep.subr.mxu0 0.0
        %2266 = vmatpush1.msra.mxu0 0.0
        %2267 = vmatprep.subr.mxu0 0.0
        %2268 = vmatpush1.msra.mxu0 0.0
        %2269 = vmatprep.subr.mxu0 0.0
        %2270 = vmatpush1.msra.mxu0 0.0
        %2271 = vmatprep.subr.mxu0 0.0
        %2272 = vmatpush1.msra.mxu0 0.0
        %2273 = vmatprep.subr.mxu0 0.0
        %2274 = vmatpush1.msra.mxu0 0.0
        %2275 = vmatprep.subr.mxu0 0.0
        %2276 = vmatpush1.msra.mxu0 0.0
        %2277 = vmatprep.subr.mxu0 0.0
        %2278 = vmatpush1.msra.mxu0 0.0
        %2279 = vmatprep.subr.mxu0 0.0
        %2280 = vmatpush1.msra.mxu0 0.0
        %2281 = vmatprep.subr.mxu0 0.0
        %2282 = vmatpush1.msra.mxu0 0.0
        %2283 = vmatprep.mubr.f32.mxu0 0.0
        %v2284 = vand.u32 %v2210, 4294901760
        %v2285 = vsub.f32 %v2210, %v2284
        %v2286 = vand.u32 %v2285, 4294901760
        %v2287 = vsub.f32 %v2285, %v2286
        %v2288 = vand.u32 %v2287, 4294901760
        %2289 = vmatmul.mubr.f32.gmra.mrb[0].mxu0 %v2288
        %v2290 = vpop.f32.mrb[0].mxu0
        %v2291 = vadd.f32 %v2203, %v2290
        %v2292 = vpop.f32.mrb[0].mxu0
        %2293 = vmatprep.mubr.f32.mxu0 0.0
        %v2294 = vand.u32 %v2213, 4294901760
        %v2295 = vsub.f32 %v2213, %v2294
        %v2296 = vand.u32 %v2295, 4294901760
        %v2297 = vsub.f32 %v2295, %v2296
        %v2298 = vand.u32 %v2297, 4294901760
        %2299 = vmatmul.mubr.f32.gmra.mrb[0].mxu0 %v2298
        %v2300 = vpop.f32.mrb[0].mxu0
        %v2301 = vpop.f32.mrb[0].mxu0
        %2302 = vdwg.mxu0
        %2303 = vmatprep.subr.mxu0 0.0
        %v2304 = vand.u32 %v2198, 4294901760
        %v2305 = vsub.f32 %v2198, %v2304
        %v2306 = vand.u32 %v2305, 4294901760
        %v2307 = vsub.f32 %v2305, %v2306
        %v2308 = vand.u32 %v2307, 4294901760
        %2309 = vmatpush1.msra.mxu0 %v2308
        %2310 = vmatprep.subr.mxu0 0.0
        %v2311 = vand.u32 %v2199, 4294901760
        %v2312 = vsub.f32 %v2199, %v2311
        %v2313 = vand.u32 %v2312, 4294901760
        %v2314 = vsub.f32 %v2312, %v2313
        %v2315 = vand.u32 %v2314, 4294901760
        %2316 = vmatpush1.msra.mxu0 %v2315
        %2317 = vmatprep.subr.mxu0 0.0
        %v2318 = vand.u32 %v2188, 4294901760
        %v2319 = vsub.f32 %v2188, %v2318
        %v2320 = vand.u32 %v2319, 4294901760
        %v2321 = vsub.f32 %v2319, %v2320
        %v2322 = vand.u32 %v2321, 4294901760
        %2323 = vmatpush1.msra.mxu0 %v2322
        %2324 = vmatprep.subr.mxu0 0.0
        %v2325 = vand.u32 %v2189, 4294901760
        %v2326 = vsub.f32 %v2189, %v2325
        %v2327 = vand.u32 %v2326, 4294901760
        %v2328 = vsub.f32 %v2326, %v2327
        %v2329 = vand.u32 %v2328, 4294901760
        %2330 = vmatpush1.msra.mxu0 %v2329
        %2331 = vmatprep.subr.mxu0 0.0
        %2332 = vmatpush1.msra.mxu0 0.0
        %2333 = vmatprep.subr.mxu0 0.0
        %2334 = vmatpush1.msra.mxu0 0.0
        %2335 = vmatprep.subr.mxu0 0.0
        %2336 = vmatpush1.msra.mxu0 0.0
        %2337 = vmatprep.subr.mxu0 0.0
        %2338 = vmatpush1.msra.mxu0 0.0
        %2339 = vmatprep.subr.mxu0 0.0
        %2340 = vmatpush1.msra.mxu0 0.0
        %2341 = vmatprep.subr.mxu0 0.0
        %2342 = vmatpush1.msra.mxu0 0.0
        %2343 = vmatprep.subr.mxu0 0.0
        %2344 = vmatpush1.msra.mxu0 0.0
        %2345 = vmatprep.subr.mxu0 0.0
        %2346 = vmatpush1.msra.mxu0 0.0
        %2347 = vmatprep.subr.mxu0 0.0
        %2348 = vmatpush1.msra.mxu0 0.0
        %2349 = vmatprep.subr.mxu0 0.0
        %2350 = vmatpush1.msra.mxu0 0.0
        %2351 = vmatprep.subr.mxu0 0.0
        %2352 = vmatpush1.msra.mxu0 0.0
        %2353 = vmatprep.subr.mxu0 0.0
        %2354 = vmatpush1.msra.mxu0 0.0
        %2355 = vmatprep.subr.mxu0 0.0
        %2356 = vmatpush1.msra.mxu0 0.0
        %2357 = vmatprep.subr.mxu0 0.0
        %2358 = vmatpush1.msra.mxu0 0.0
        %2359 = vmatprep.subr.mxu0 0.0
        %2360 = vmatpush1.msra.mxu0 0.0
        %2361 = vmatprep.subr.mxu0 0.0
        %2362 = vmatpush1.msra.mxu0 0.0
        %2363 = vmatprep.subr.mxu0 0.0
        %2364 = vmatpush1.msra.mxu0 0.0
        %2365 = vmatprep.subr.mxu0 0.0
        %2366 = vmatpush1.msra.mxu0 0.0
        %2367 = vmatprep.subr.mxu0 0.0
        %2368 = vmatpush1.msra.mxu0 0.0
        %2369 = vmatprep.subr.mxu0 0.0
        %2370 = vmatpush1.msra.mxu0 0.0
        %2371 = vmatprep.subr.mxu0 0.0
        %2372 = vmatpush1.msra.mxu0 0.0
        %2373 = vmatprep.subr.mxu0 0.0
        %2374 = vmatpush1.msra.mxu0 0.0
        %2375 = vmatprep.subr.mxu0 0.0
        %2376 = vmatpush1.msra.mxu0 0.0
        %2377 = vmatprep.subr.mxu0 0.0
        %2378 = vmatpush1.msra.mxu0 0.0
        %2379 = vmatprep.subr.mxu0 0.0
        %2380 = vmatpush1.msra.mxu0 0.0
        %2381 = vmatprep.subr.mxu0 0.0
        %2382 = vmatpush1.msra.mxu0 0.0
        %2383 = vmatprep.subr.mxu0 0.0
        %2384 = vmatpush1.msra.mxu0 0.0
        %2385 = vmatprep.subr.mxu0 0.0
        %2386 = vmatpush1.msra.mxu0 0.0
        %2387 = vmatprep.mubr.f32.mxu0 0.0
        %v2388 = vand.u32 %v2210, 4294901760
        %2389 = vmatmul.mubr.f32.gmra.mrb[0].mxu0 %v2388
        %v2390 = vpop.f32.mrb[0].mxu0
        %v2391 = vadd.f32 %v2291, %v2390
        %v2392 = vpop.f32.mrb[0].mxu0
        %2393 = vmatprep.mubr.f32.mxu0 0.0
        %v2394 = vand.u32 %v2213, 4294901760
        %2395 = vmatmul.mubr.f32.gmra.mrb[0].mxu0 %v2394
        %v2396 = vpop.f32.mrb[0].mxu0
        %v2397 = vpop.f32.mrb[0].mxu0
        %2398 = vdwg.mxu0
        %2399 = vmatprep.subr.mxu0 0.0
        %v2400 = vand.u32 %v2198, 4294901760
        %v2401 = vsub.f32 %v2198, %v2400
        %2402 = vmatpush1.msra.mxu0 %v2401
        %2403 = vmatprep.subr.mxu0 0.0
        %v2404 = vand.u32 %v2199, 4294901760
        %v2405 = vsub.f32 %v2199, %v2404
        %2406 = vmatpush1.msra.mxu0 %v2405
        %2407 = vmatprep.subr.mxu0 0.0
        %v2408 = vand.u32 %v2188, 4294901760
        %v2409 = vsub.f32 %v2188, %v2408
        %2410 = vmatpush1.msra.mxu0 %v2409
        %2411 = vmatprep.subr.mxu0 0.0
        %v2412 = vand.u32 %v2189, 4294901760
        %v2413 = vsub.f32 %v2189, %v2412
        %2414 = vmatpush1.msra.mxu0 %v2413
        %2415 = vmatprep.subr.mxu0 0.0
        %2416 = vmatpush1.msra.mxu0 0.0
        %2417 = vmatprep.subr.mxu0 0.0
        %2418 = vmatpush1.msra.mxu0 0.0
        %2419 = vmatprep.subr.mxu0 0.0
        %2420 = vmatpush1.msra.mxu0 0.0
        %2421 = vmatprep.subr.mxu0 0.0
        %2422 = vmatpush1.msra.mxu0 0.0
        %2423 = vmatprep.subr.mxu0 0.0
        %2424 = vmatpush1.msra.mxu0 0.0
        %2425 = vmatprep.subr.mxu0 0.0
        %2426 = vmatpush1.msra.mxu0 0.0
        %2427 = vmatprep.subr.mxu0 0.0
        %2428 = vmatpush1.msra.mxu0 0.0
        %2429 = vmatprep.subr.mxu0 0.0
        %2430 = vmatpush1.msra.mxu0 0.0
        %2431 = vmatprep.subr.mxu0 0.0
        %2432 = vmatpush1.msra.mxu0 0.0
        %2433 = vmatprep.subr.mxu0 0.0
        %2434 = vmatpush1.msra.mxu0 0.0
        %2435 = vmatprep.subr.mxu0 0.0
        %2436 = vmatpush1.msra.mxu0 0.0
        %2437 = vmatprep.subr.mxu0 0.0
        %2438 = vmatpush1.msra.mxu0 0.0
        %2439 = vmatprep.subr.mxu0 0.0
        %2440 = vmatpush1.msra.mxu0 0.0
        %2441 = vmatprep.subr.mxu0 0.0
        %2442 = vmatpush1.msra.mxu0 0.0
        %2443 = vmatprep.subr.mxu0 0.0
        %2444 = vmatpush1.msra.mxu0 0.0
        %2445 = vmatprep.subr.mxu0 0.0
        %2446 = vmatpush1.msra.mxu0 0.0
        %2447 = vmatprep.subr.mxu0 0.0
        %2448 = vmatpush1.msra.mxu0 0.0
        %2449 = vmatprep.subr.mxu0 0.0
        %2450 = vmatpush1.msra.mxu0 0.0
        %2451 = vmatprep.subr.mxu0 0.0
        %2452 = vmatpush1.msra.mxu0 0.0
        %2453 = vmatprep.subr.mxu0 0.0
        %2454 = vmatpush1.msra.mxu0 0.0
        %2455 = vmatprep.subr.mxu0 0.0
        %2456 = vmatpush1.msra.mxu0 0.0
        %2457 = vmatprep.subr.mxu0 0.0
        %2458 = vmatpush1.msra.mxu0 0.0
        %2459 = vmatprep.subr.mxu0 0.0
        %2460 = vmatpush1.msra.mxu0 0.0
        %2461 = vmatprep.subr.mxu0 0.0
        %2462 = vmatpush1.msra.mxu0 0.0
        %2463 = vmatprep.subr.mxu0 0.0
        %2464 = vmatpush1.msra.mxu0 0.0
        %2465 = vmatprep.subr.mxu0 0.0
        %2466 = vmatpush1.msra.mxu0 0.0
        %2467 = vmatprep.subr.mxu0 0.0
        %2468 = vmatpush1.msra.mxu0 0.0
        %2469 = vmatprep.subr.mxu0 0.0
        %2470 = vmatpush1.msra.mxu0 0.0
        %2471 = vmatprep.mubr.f32.mxu0 0.0
        %v2472 = vand.u32 %v2210, 4294901760
        %v2473 = vsub.f32 %v2210, %v2472
        %2474 = vmatmul.mubr.f32.gmra.mrb[0].mxu0 %v2473
        %v2475 = vpop.f32.mrb[0].mxu0
        %v2476 = vadd.f32 %v2391, %v2475
        %v2477 = vpop.f32.mrb[0].mxu0
        %2478 = vmatprep.mubr.f32.mxu0 0.0
        %v2479 = vand.u32 %v2213, 4294901760
        %v2480 = vsub.f32 %v2213, %v2479
        %2481 = vmatmul.mubr.f32.gmra.mrb[0].mxu0 %v2480
        %v2482 = vpop.f32.mrb[0].mxu0
        %v2483 = vpop.f32.mrb[0].mxu0
        %2484 = vdwg.mxu0
        %2485 = vmatprep.subr.mxu0 0.0
        %v2486 = vand.u32 %v2198, 4294901760
        %2487 = vmatpush1.msra.mxu0 %v2486
        %2488 = vmatprep.subr.mxu0 0.0
        %v2489 = vand.u32 %v2199, 4294901760
        %2490 = vmatpush1.msra.mxu0 %v2489
        %2491 = vmatprep.subr.mxu0 0.0
        %v2492 = vand.u32 %v2188, 4294901760
        %2493 = vmatpush1.msra.mxu0 %v2492
        %2494 = vmatprep.subr.mxu0 0.0
        %v2495 = vand.u32 %v2189, 4294901760
        %2496 = vmatpush1.msra.mxu0 %v2495
        %2497 = vmatprep.subr.mxu0 0.0
        %2498 = vmatpush1.msra.mxu0 0.0
        %2499 = vmatprep.subr.mxu0 0.0
        %2500 = vmatpush1.msra.mxu0 0.0
        %2501 = vmatprep.subr.mxu0 0.0
        %2502 = vmatpush1.msra.mxu0 0.0
        %2503 = vmatprep.subr.mxu0 0.0
        %2504 = vmatpush1.msra.mxu0 0.0
        %2505 = vmatprep.subr.mxu0 0.0
        %2506 = vmatpush1.msra.mxu0 0.0
        %2507 = vmatprep.subr.mxu0 0.0
        %2508 = vmatpush1.msra.mxu0 0.0
        %2509 = vmatprep.subr.mxu0 0.0
        %2510 = vmatpush1.msra.mxu0 0.0
        %2511 = vmatprep.subr.mxu0 0.0
        %2512 = vmatpush1.msra.mxu0 0.0
        %2513 = vmatprep.subr.mxu0 0.0
        %2514 = vmatpush1.msra.mxu0 0.0
        %2515 = vmatprep.subr.mxu0 0.0
        %2516 = vmatpush1.msra.mxu0 0.0
        %2517 = vmatprep.subr.mxu0 0.0
        %2518 = vmatpush1.msra.mxu0 0.0
        %2519 = vmatprep.subr.mxu0 0.0
        %2520 = vmatpush1.msra.mxu0 0.0
        %2521 = vmatprep.subr.mxu0 0.0
        %2522 = vmatpush1.msra.mxu0 0.0
        %2523 = vmatprep.subr.mxu0 0.0
        %2524 = vmatpush1.msra.mxu0 0.0
        %2525 = vmatprep.subr.mxu0 0.0
        %2526 = vmatpush1.msra.mxu0 0.0
        %2527 = vmatprep.subr.mxu0 0.0
        %2528 = vmatpush1.msra.mxu0 0.0
        %2529 = vmatprep.subr.mxu0 0.0
        %2530 = vmatpush1.msra.mxu0 0.0
        %2531 = vmatprep.subr.mxu0 0.0
        %2532 = vmatpush1.msra.mxu0 0.0
        %2533 = vmatprep.subr.mxu0 0.0
        %2534 = vmatpush1.msra.mxu0 0.0
        %2535 = vmatprep.subr.mxu0 0.0
        %2536 = vmatpush1.msra.mxu0 0.0
        %2537 = vmatprep.subr.mxu0 0.0
        %2538 = vmatpush1.msra.mxu0 0.0
        %2539 = vmatprep.subr.mxu0 0.0
        %2540 = vmatpush1.msra.mxu0 0.0
        %2541 = vmatprep.subr.mxu0 0.0
        %2542 = vmatpush1.msra.mxu0 0.0
        %2543 = vmatprep.subr.mxu0 0.0
        %2544 = vmatpush1.msra.mxu0 0.0
        %2545 = vmatprep.subr.mxu0 0.0
        %2546 = vmatpush1.msra.mxu0 0.0
        %2547 = vmatprep.subr.mxu0 0.0
        %2548 = vmatpush1.msra.mxu0 0.0
        %2549 = vmatprep.subr.mxu0 0.0
        %2550 = vmatpush1.msra.mxu0 0.0
        %2551 = vmatprep.subr.mxu0 0.0
        %2552 = vmatpush1.msra.mxu0 0.0
        %2553 = vmatprep.mubr.f32.mxu0 0.0
        %v2554 = vand.u32 %v2210, 4294901760
        %v2555 = vsub.f32 %v2210, %v2554
        %v2556 = vand.u32 %v2555, 4294901760
        %2557 = vmatmul.mubr.f32.gmra.mrb[0].mxu0 %v2556
        %v2558 = vpop.f32.mrb[0].mxu0
        %v2559 = vadd.f32 %v2476, %v2558
        %v2560 = vpop.f32.mrb[0].mxu0
        %2561 = vmatprep.mubr.f32.mxu0 0.0
        %v2562 = vand.u32 %v2213, 4294901760
        %v2563 = vsub.f32 %v2213, %v2562
        %v2564 = vand.u32 %v2563, 4294901760
        %2565 = vmatmul.mubr.f32.gmra.mrb[0].mxu0 %v2564
        %v2566 = vpop.f32.mrb[0].mxu0
        %v2567 = vpop.f32.mrb[0].mxu0
        %2568 = vdwg.mxu0
        %2569 = vmatprep.subr.mxu0 0.0
        %v2570 = vand.u32 %v2198, 4294901760
        %v2571 = vsub.f32 %v2198, %v2570
        %v2572 = vand.u32 %v2571, 4294901760
        %2573 = vmatpush1.msra.mxu0 %v2572
        %2574 = vmatprep.subr.mxu0 0.0
        %v2575 = vand.u32 %v2199, 4294901760
        %v2576 = vsub.f32 %v2199, %v2575
        %v2577 = vand.u32 %v2576, 4294901760
        %2578 = vmatpush1.msra.mxu0 %v2577
        %2579 = vmatprep.subr.mxu0 0.0
        %v2580 = vand.u32 %v2188, 4294901760
        %v2581 = vsub.f32 %v2188, %v2580
        %v2582 = vand.u32 %v2581, 4294901760
        %2583 = vmatpush1.msra.mxu0 %v2582
        %2584 = vmatprep.subr.mxu0 0.0
        %v2585 = vand.u32 %v2189, 4294901760
        %v2586 = vsub.f32 %v2189, %v2585
        %v2587 = vand.u32 %v2586, 4294901760
        %2588 = vmatpush1.msra.mxu0 %v2587
        %2589 = vmatprep.subr.mxu0 0.0
        %2590 = vmatpush1.msra.mxu0 0.0
        %2591 = vmatprep.subr.mxu0 0.0
        %2592 = vmatpush1.msra.mxu0 0.0
        %2593 = vmatprep.subr.mxu0 0.0
        %2594 = vmatpush1.msra.mxu0 0.0
        %2595 = vmatprep.subr.mxu0 0.0
        %2596 = vmatpush1.msra.mxu0 0.0
        %2597 = vmatprep.subr.mxu0 0.0
        %2598 = vmatpush1.msra.mxu0 0.0
        %2599 = vmatprep.subr.mxu0 0.0
        %2600 = vmatpush1.msra.mxu0 0.0
        %2601 = vmatprep.subr.mxu0 0.0
        %2602 = vmatpush1.msra.mxu0 0.0
        %2603 = vmatprep.subr.mxu0 0.0
        %2604 = vmatpush1.msra.mxu0 0.0
        %2605 = vmatprep.subr.mxu0 0.0
        %2606 = vmatpush1.msra.mxu0 0.0
        %2607 = vmatprep.subr.mxu0 0.0
        %2608 = vmatpush1.msra.mxu0 0.0
        %2609 = vmatprep.subr.mxu0 0.0
        %2610 = vmatpush1.msra.mxu0 0.0
        %2611 = vmatprep.subr.mxu0 0.0
        %2612 = vmatpush1.msra.mxu0 0.0
        %2613 = vmatprep.subr.mxu0 0.0
        %2614 = vmatpush1.msra.mxu0 0.0
        %2615 = vmatprep.subr.mxu0 0.0
        %2616 = vmatpush1.msra.mxu0 0.0
        %2617 = vmatprep.subr.mxu0 0.0
        %2618 = vmatpush1.msra.mxu0 0.0
        %2619 = vmatprep.subr.mxu0 0.0
        %2620 = vmatpush1.msra.mxu0 0.0
        %2621 = vmatprep.subr.mxu0 0.0
        %2622 = vmatpush1.msra.mxu0 0.0
        %2623 = vmatprep.subr.mxu0 0.0
        %2624 = vmatpush1.msra.mxu0 0.0
        %2625 = vmatprep.subr.mxu0 0.0
        %2626 = vmatpush1.msra.mxu0 0.0
        %2627 = vmatprep.subr.mxu0 0.0
        %2628 = vmatpush1.msra.mxu0 0.0
        %2629 = vmatprep.subr.mxu0 0.0
        %2630 = vmatpush1.msra.mxu0 0.0
        %2631 = vmatprep.subr.mxu0 0.0
        %2632 = vmatpush1.msra.mxu0 0.0
        %2633 = vmatprep.subr.mxu0 0.0
        %2634 = vmatpush1.msra.mxu0 0.0
        %2635 = vmatprep.subr.mxu0 0.0
        %2636 = vmatpush1.msra.mxu0 0.0
        %2637 = vmatprep.subr.mxu0 0.0
        %2638 = vmatpush1.msra.mxu0 0.0
        %2639 = vmatprep.subr.mxu0 0.0
        %2640 = vmatpush1.msra.mxu0 0.0
        %2641 = vmatprep.subr.mxu0 0.0
        %2642 = vmatpush1.msra.mxu0 0.0
        %2643 = vmatprep.subr.mxu0 0.0
        %2644 = vmatpush1.msra.mxu0 0.0
        %2645 = vmatprep.mubr.f32.mxu0 0.0
        %v2646 = vand.u32 %v2210, 4294901760
        %2647 = vmatmul.mubr.f32.gmra.mrb[0].mxu0 %v2646
        %v2648 = vpop.f32.mrb[0].mxu0
        %v2649 = vadd.f32 %v2559, %v2648
        %v2650 = vpop.f32.mrb[0].mxu0
        %2651 = vmatprep.mubr.f32.mxu0 0.0
        %v2652 = vand.u32 %v2213, 4294901760
        %2653 = vmatmul.mubr.f32.gmra.mrb[0].mxu0 %v2652
        %v2654 = vpop.f32.mrb[0].mxu0
        %v2655 = vpop.f32.mrb[0].mxu0
        %2656 = vdwg.mxu0
        %2657 = vmatprep.subr.mxu0 0.0
        %v2658 = vand.u32 %v2198, 4294901760
        %2659 = vmatpush1.msra.mxu0 %v2658
        %2660 = vmatprep.subr.mxu0 0.0
        %v2661 = vand.u32 %v2199, 4294901760
        %2662 = vmatpush1.msra.mxu0 %v2661
        %2663 = vmatprep.subr.mxu0 0.0
        %v2664 = vand.u32 %v2188, 4294901760
        %2665 = vmatpush1.msra.mxu0 %v2664
        %2666 = vmatprep.subr.mxu0 0.0
        %v2667 = vand.u32 %v2189, 4294901760
        %2668 = vmatpush1.msra.mxu0 %v2667
        %2669 = vmatprep.subr.mxu0 0.0
        %2670 = vmatpush1.msra.mxu0 0.0
        %2671 = vmatprep.subr.mxu0 0.0
        %2672 = vmatpush1.msra.mxu0 0.0
        %2673 = vmatprep.subr.mxu0 0.0
        %2674 = vmatpush1.msra.mxu0 0.0
        %2675 = vmatprep.subr.mxu0 0.0
        %2676 = vmatpush1.msra.mxu0 0.0
        %2677 = vmatprep.subr.mxu0 0.0
        %2678 = vmatpush1.msra.mxu0 0.0
        %2679 = vmatprep.subr.mxu0 0.0
        %2680 = vmatpush1.msra.mxu0 0.0
        %2681 = vmatprep.subr.mxu0 0.0
        %2682 = vmatpush1.msra.mxu0 0.0
        %2683 = vmatprep.subr.mxu0 0.0
        %2684 = vmatpush1.msra.mxu0 0.0
        %2685 = vmatprep.subr.mxu0 0.0
        %2686 = vmatpush1.msra.mxu0 0.0
        %2687 = vmatprep.subr.mxu0 0.0
        %2688 = vmatpush1.msra.mxu0 0.0
        %2689 = vmatprep.subr.mxu0 0.0
        %2690 = vmatpush1.msra.mxu0 0.0
        %2691 = vmatprep.subr.mxu0 0.0
        %2692 = vmatpush1.msra.mxu0 0.0
        %2693 = vmatprep.subr.mxu0 0.0
        %2694 = vmatpush1.msra.mxu0 0.0
        %2695 = vmatprep.subr.mxu0 0.0
        %2696 = vmatpush1.msra.mxu0 0.0
        %2697 = vmatprep.subr.mxu0 0.0
        %2698 = vmatpush1.msra.mxu0 0.0
        %2699 = vmatprep.subr.mxu0 0.0
        %2700 = vmatpush1.msra.mxu0 0.0
        %2701 = vmatprep.subr.mxu0 0.0
        %2702 = vmatpush1.msra.mxu0 0.0
        %2703 = vmatprep.subr.mxu0 0.0
        %2704 = vmatpush1.msra.mxu0 0.0
        %2705 = vmatprep.subr.mxu0 0.0
        %2706 = vmatpush1.msra.mxu0 0.0
        %2707 = vmatprep.subr.mxu0 0.0
        %2708 = vmatpush1.msra.mxu0 0.0
        %2709 = vmatprep.subr.mxu0 0.0
        %2710 = vmatpush1.msra.mxu0 0.0
        %2711 = vmatprep.subr.mxu0 0.0
        %2712 = vmatpush1.msra.mxu0 0.0
        %2713 = vmatprep.subr.mxu0 0.0
        %2714 = vmatpush1.msra.mxu0 0.0
        %2715 = vmatprep.subr.mxu0 0.0
        %2716 = vmatpush1.msra.mxu0 0.0
        %2717 = vmatprep.subr.mxu0 0.0
        %2718 = vmatpush1.msra.mxu0 0.0
        %2719 = vmatprep.subr.mxu0 0.0
        %2720 = vmatpush1.msra.mxu0 0.0
        %2721 = vmatprep.subr.mxu0 0.0
        %2722 = vmatpush1.msra.mxu0 0.0
        %2723 = vmatprep.subr.mxu0 0.0
        %2724 = vmatpush1.msra.mxu0 0.0
        %2725 = vmatprep.mubr.f32.mxu0 0.0
        %v2726 = vand.u32 %v2210, 4294901760
        %2727 = vmatmul.mubr.f32.gmra.mrb[0].mxu0 %v2726
        %v2728 = vpop.f32.mrb[0].mxu0
        %v2729 = vadd.f32 %v2649, %v2728
        %v2730 = vpop.f32.mrb[0].mxu0
        %2731 = vmatprep.mubr.f32.mxu0 0.0
        %v2732 = vand.u32 %v2213, 4294901760
        %2733 = vmatmul.mubr.f32.gmra.mrb[0].mxu0 %v2732
        %v2734 = vpop.f32.mrb[0].mxu0
        %v2735 = vpop.f32.mrb[0].mxu0
        %2736 = vdwg.mxu0
        %v2737 = vmax.f32 %v2729, 0.0
        %v2738 = vadd.f32 %v2737, %v1603
        %v2739 = vmax.f32 %v2738, 0.0
        %2740 = vrot.lane.b32.xlu0 %v1603, 114
        %v2741 = vpop.permute.xlu0 %2740
        %2742 = vrot.lane.b32.xlu0 %v1604, 114
        %v2743 = vpop.permute.xlu0 %2742
        %2746 = vst.msk [vmem:[#allocation4] sm:$0xff] %vm1641, %v2741
        %2747 = vst.msk [vmem:[#allocation4 + $0x8] sm:$0xff] %vm1641, %v2743
        %2748 = vrot.lane.b32.xlu0 %v2188, 114
        %v2749 = vpop.permute.xlu0 %2748
        %2750 = vrot.lane.b32.xlu0 %v2189, 114
        %v2751 = vpop.permute.xlu0 %2750
        %2754 = vst.msk [vmem:[#allocation5] sm:$0xff] %vm1641, %v2749
        %2755 = vst.msk [vmem:[#allocation5 + $0x8] sm:$0xff] %vm1641, %v2751
        %vm2756 = vcmask 130048
        %2757 = vst.msk [vmem:[%s364] sm:$0xff] %vm2756, %v2739
        %s2758 = sand.u32 %s244, 1
        %s2759 = scalar_lea.sflag [#allocation8], %s2758
        %s2760 = sand.u32 %s244, 1
        %s2761 = smul.addr %s2760, 8
        %s2762 = scalar_lea.vmem [#allocation9], %s2761
        // Predicated region
        $region65: #{tpu_custom_call.1} parent=55 // pred_check
          %p2763 = pneg %p254
        $region66: #{tpu_custom_call.1} parent=55 // pred_check_branch
          %2765 = sbr.rel (%p2763) target = $region68
        $region67: #{tpu_custom_call.1} parent=55 // pred_region
          %s2767 = ssub.s32 128, 128
          %2768 = vsyncadd %s2759, %s2767
          %s2769 = sadd.s32 %s31, %s30
          %s2770 = smul.addr %s2769, 128
          %s2771 = scalar_lea.hbm %s9, %s2770
          %s2773 = sshll.u32 %s2762, 4
          %s2774 = int_to_ptr.vmem [resolvable:$true] %s2773
          %2776 = dma.vmem_to_hbm [thread:$0]  %s2774, 128, %s2771, %s2759
        $region68: #{tpu_custom_call.1} parent=55 // pred_fallthru
          _
      $region56: #{tpu_custom_call.1} parent=5 // pred_fallthru
        _
      %p2777 = scmp.le.s32.totalorder 2, %s21
      // Predicated region
      $region69: #{tpu_custom_call.1} parent=5 // pred_check
        %p2778 = pneg %p2777
      $region70: #{tpu_custom_call.1} parent=5 // pred_check_branch
        %2780 = sbr.rel (%p2778) target = $region72
      $region71: #{tpu_custom_call.1} parent=5 // pred_region
        %s2781 = ssub.s32 %s21, 2
        // Predicated region
        $region73: #{tpu_custom_call.1} parent=71 // pred_check
          %p2782 = pneg %p260
        $region74: #{tpu_custom_call.1} parent=71 // pred_check_branch
          %2784 = sbr.rel (%p2782) target = $region76
        $region75: #{tpu_custom_call.1} parent=71 // pred_region
          %s2785 = sand.u32 %s245, 1
          %s2786 = scalar_lea.sflag [#allocation8], %s2785
          %s2787 = sand.u32 %s245, 1
          %s2788 = smul.addr %s2787, 8
          %s2789 = scalar_lea.vmem [#allocation9], %s2788
          %2790 = dma.done %s2786, 128
        $region76: #{tpu_custom_call.1} parent=71 // pred_fallthru
          _
      $region72: #{tpu_custom_call.1} parent=5 // pred_fallthru
        _
    $region6: #{tpu_custom_call.1} parent=1 // loop_footer
      %s25 = sadd.s32 1, %s21
    $region7: #{tpu_custom_call.1} parent=1 // loop_footer_branch
      %20 = sbr.rel target = $region3
    $region8: #{tpu_custom_call.1} parent=1 // loop_exit
      _
    %2791 = vsyncpa [#allocation7], 1
    %s2792 = scalar_lea.sflag [#allocation7], 1
    %2793 = vsyncpa %s2792, 1
    %2794 = vsyncpa [#allocation8], 1
    %s2795 = scalar_lea.sflag [#allocation8], 1
    %2796 = vsyncpa %s2795, 1

</llo_original>
